<compile_context>
chip_gen: v7x
topology: tpu7x:2x2x1
jax: 0.10.0
libtpu: 0.0.40
codegen_flags: <defaults>
</compile_context>

<pallas_src>
import functools

import jax
import jax.numpy as jnp
from jax.experimental import pallas as pl
from jax.experimental.pallas import tpu as pltpu


# ----------------------------------------------------------------------------
# Fused Pallas kernel: conv3x3+ReLU -> conv1x1 -> softmax-CE -> running sum
# ----------------------------------------------------------------------------
def _fused_losser_kernel(x_ref, lbl_ref, w1_ref, b1_ref, w2_ref, b2_ref,
                         loss_ref, acc_ref, *, hpwp, wp, inv_m):
    """One grid step = one image.

    x_ref   : (1, hpwp + 2*(wp+1), C) f32  zero-padded, flattened image (+halo rows)
    lbl_ref : (1, hpwp, NC)           f32  one-hot labels, zero at pad rows
    w1_ref  : (9, C, hidden)          bf16 conv3x3 weights, tap-major (kh*3+kw)
    b1_ref  : (1, hidden)             f32
    w2_ref  : (hidden, NC)            bf16 conv1x1 weights
    b2_ref  : (1, NC)                 f32
    loss_ref: (1, 1)                  f32  mean loss, written at the last step only
    acc_ref : (1, 1)                  f32  VMEM scratch, running CE sum
    """
    b = pl.program_id(0)

    @pl.when(b == 0)
    def _init():
        acc_ref[...] = jnp.zeros_like(acc_ref)

    # conv3x3 (pad=1) without im2col: in padded-flat coordinates, tap (kh, kw)
    # is the input row-window shifted by kh*Wp + kw.  Nine accumulated matmuls.
    h = None
    for kh in range(3):
        for kw in range(3):
            k = kh * 3 + kw
            tap = x_ref[0, pl.ds(kh * wp + kw, hpwp), :].astype(jnp.bfloat16)
            part = jnp.dot(tap, w1_ref[k], preferred_element_type=jnp.float32)
            h = part if h is None else h + part
    h = jnp.maximum(h + b1_ref[...], 0.0)                        # (hpwp, hidden) f32

    # conv1x1 + bias
    logits = jnp.dot(h.astype(jnp.bfloat16), w2_ref[...],
                     preferred_element_type=jnp.float32) + b2_ref[...]  # (hpwp, NC)

    # softmax cross-entropy; pad rows have all-zero labels so they contribute 0.
    lbl = lbl_ref[0]                                             # (hpwp, NC) f32
    m = jnp.max(logits, axis=-1, keepdims=True)
    shifted = logits - m
    lse = jnp.log(jnp.sum(jnp.exp(shifted), axis=-1, keepdims=True))
    ce = -(lbl * (shifted - lse))                                # (hpwp, NC)
    tile_sum = jnp.sum(jnp.sum(ce, axis=1, keepdims=True), axis=0, keepdims=True)
    acc_ref[...] += tile_sum

    @pl.when(b == pl.num_programs(0) - 1)
    def _finalize():
        # divide by the GLOBAL number of real pixels, not the per-block count
        loss_ref[...] = acc_ref[...] * inv_m


# ----------------------------------------------------------------------------
# Losser forward (wrapper: layout plumbing only, all math in the kernel)
# ----------------------------------------------------------------------------
def losser_forward(params, x_nchw, label_nchw):
    """x: (B, C_in, H, W) f32, label: (B, num_classes, H, W) one-hot f32 -> scalar."""
    B, C_in, H, W = x_nchw.shape
    num_classes = label_nchw.shape[1]
    hidden = params["w1"].shape[0]
    Hp, Wp = H + 2, W + 2
    hpwp = Hp * Wp
    halo = Wp + 1                       # extra zero rows so every tap slice is in-bounds
    R = hpwp + 2 * halo

    # input: NCHW -> NHWC -> spatial zero-pad -> flatten -> halo-pad rows
    x_nhwc = jnp.transpose(x_nchw, (0, 2, 3, 1))
    xp = jnp.pad(x_nhwc, ((0, 0), (1, 1), (1, 1), (0, 0)))
    xe = jnp.pad(xp.reshape(B, hpwp, C_in), ((0, 0), (halo, halo), (0, 0)))

    # labels: NCHW -> NHWC, same spatial zero-pad (pad rows -> zero CE contribution)
    lbl_nhwc = jnp.transpose(label_nchw, (0, 2, 3, 1))
    lbl = jnp.pad(lbl_nhwc, ((0, 0), (1, 1), (1, 1), (0, 0))).reshape(B, hpwp, num_classes)

    # weights: PyTorch (Cout, Cin, kh, kw) -> tap-major (9, Cin, Cout), bf16 for the MXU
    w1 = jnp.transpose(params["w1"], (2, 3, 1, 0)).reshape(9, C_in, hidden).astype(jnp.bfloat16)
    b1 = params["b1"].reshape(1, hidden).astype(jnp.float32)
    w2 = params["w2"].reshape(num_classes, hidden).T.astype(jnp.bfloat16)
    b2 = params["b2"].reshape(1, num_classes).astype(jnp.float32)

    total_pixels = B * H * W
    kernel = functools.partial(_fused_losser_kernel, hpwp=hpwp, wp=Wp,
                               inv_m=float(1.0 / total_pixels))

    flops = B * (2 * hpwp * C_in * hidden * 9 + 2 * hpwp * hidden * num_classes)
    bytes_accessed = (xe.size * 4 + lbl.size * 4 + w1.size * 2 + w2.size * 2
                      + b1.size * 4 + b2.size * 4 + 4)

    out = pl.pallas_call(
        kernel,
        out_shape=jax.ShapeDtypeStruct((1, 1), jnp.float32),
        grid=(B,),
        in_specs=[
            pl.BlockSpec((1, R, C_in), lambda b: (b, 0, 0)),             # image band (pipelined)
            pl.BlockSpec((1, hpwp, num_classes), lambda b: (b, 0, 0)),   # labels (pipelined)
            pl.BlockSpec((9, C_in, hidden), lambda b: (0, 0, 0)),        # resident weights
            pl.BlockSpec((1, hidden), lambda b: (0, 0)),
            pl.BlockSpec((hidden, num_classes), lambda b: (0, 0)),
            pl.BlockSpec((1, num_classes), lambda b: (0, 0)),
        ],
        out_specs=pl.BlockSpec((1, 1), lambda b: (0, 0)),                # loss is the only output
        scratch_shapes=[pltpu.VMEM((1, 1), jnp.float32)],
        compiler_params=pltpu.CompilerParams(
            dimension_semantics=("arbitrary",),   # grid axis is a reduction into one block
            vmem_limit_bytes=32 * 1024 * 1024,
        ),
        cost_estimate=pl.CostEstimate(
            flops=int(flops),
            transcendentals=int(B * hpwp * (num_classes + 1)),
            bytes_accessed=int(bytes_accessed),
        ),
    )(xe, lbl, w1, b1, w2, b2)
    # TODO(synk): for large H*W, band-tile rows within each image (halo DMA / manual
    # double-buffering) instead of one whole image per grid step, and re-derive the
    # band size for v7x's 64 MiB VMEM.
    return out[0, 0]


# ----------------------------------------------------------------------------
# Pure-JAX f32 reference (for a loose sanity check only)
# ----------------------------------------------------------------------------
def reference_loss(params, x_nchw, label_nchw):
    out = jax.lax.conv_general_dilated(
        x_nchw, params["w1"], window_strides=(1, 1), padding="SAME",
        dimension_numbers=("NCHW", "OIHW", "NCHW"))
    out = jnp.maximum(out + params["b1"][None, :, None, None], 0.0)
    out = jax.lax.conv_general_dilated(
        out, params["w2"], window_strides=(1, 1), padding="SAME",
        dimension_numbers=("NCHW", "OIHW", "NCHW"))
    out = out + params["b2"][None, :, None, None]
    nc = label_nchw.shape[1]
    logits = jnp.transpose(out, (0, 2, 3, 1)).reshape(-1, nc)
    lbl = jnp.transpose(label_nchw, (0, 2, 3, 1)).reshape(-1, nc)
    logp = jax.nn.log_softmax(logits, axis=-1)
    return jnp.mean(-jnp.sum(lbl * logp, axis=-1))


# ----------------------------------------------------------------------------
# Main
# ----------------------------------------------------------------------------
if __name__ == "__main__":
    key = jax.random.PRNGKey(0)
    k_x, k_lbl, k_w1, k_b1, k_w2, k_b2 = jax.random.split(key, 6)

    B, C_in, H, W = 2, 4, 16, 16
    hidden, num_classes = 32, 4

    # deterministic synthetic params (PyTorch conv weight layout: (Cout, Cin, kh, kw))
    params = {
        "w1": 0.1 * jax.random.normal(k_w1, (hidden, C_in, 3, 3), jnp.float32),
        "b1": 0.01 * jax.random.normal(k_b1, (hidden,), jnp.float32),
        "w2": 0.1 * jax.random.normal(k_w2, (num_classes, hidden, 1, 1), jnp.float32),
        "b2": 0.01 * jax.random.normal(k_b2, (num_classes,), jnp.float32),
    }

    x = jax.random.normal(k_x, (B, C_in, H, W), jnp.float32)
    classes = jax.random.randint(k_lbl, (B, H, W), 0, num_classes)
    label = jnp.transpose(
        jax.nn.one_hot(classes, num_classes, dtype=jnp.float32), (0, 3, 1, 2)
    )  # (B, num_classes, H, W) one-hot, matching the PyTorch NCHW label

    loss = jax.jit(losser_forward)(params, x, label)
    jax.block_until_ready(loss)

    ref = reference_loss(params, x, label)
    assert loss.shape == () and bool(jnp.isfinite(loss))
    assert abs(float(loss) - float(ref)) < 5e-2, (float(loss), float(ref))
    print("KERNEL_OK")
</pallas_src>

<mosaic_0001>
module attributes {stable_mosaic.version = 11 : i64} {
  func.func @_fused_losser_kernel(%arg0: i32, %arg1: memref<1x362x4xf32, #tpu.memory_space<vmem>>, %arg2: memref<1x324x4xf32, #tpu.memory_space<vmem>>, %arg3: memref<9x4x32xbf16, #tpu.memory_space<vmem>>, %arg4: memref<1x32xf32, #tpu.memory_space<vmem>>, %arg5: memref<32x4xbf16, #tpu.memory_space<vmem>>, %arg6: memref<1x4xf32, #tpu.memory_space<vmem>>, %arg7: memref<1x1xf32, #tpu.memory_space<vmem>>, %arg8: memref<1x1xf32, #tpu.memory_space<vmem>>) attributes {dimension_semantics = [#tpu.dimension_semantics<arbitrary>], iteration_bounds = array<i64: 2>, scalar_prefetch = 0 : i64, scratch_operands = 1 : i64, tpu.core_type = #tpu.core_type<tc>, window_params = [{transform_indices = @transform_0, window_bounds = array<i64: 1, 362, 4>}, {transform_indices = @transform_1, window_bounds = array<i64: 1, 324, 4>}, {pipeline_mode = #tpu.pipeline_mode<synchronous>, transform_indices = @transform_2, window_bounds = array<i64: 9, 4, 32>}, {pipeline_mode = #tpu.pipeline_mode<synchronous>, transform_indices = @transform_3, window_bounds = array<i64: 1, 32>}, {pipeline_mode = #tpu.pipeline_mode<synchronous>, transform_indices = @transform_4, window_bounds = array<i64: 32, 4>}, {pipeline_mode = #tpu.pipeline_mode<synchronous>, transform_indices = @transform_5, window_bounds = array<i64: 1, 4>}, {pipeline_mode = #tpu.pipeline_mode<synchronous>, transform_indices = @transform_6, window_bounds = array<i64: 1, 1>}]} {
    %c0_i32 = arith.constant 0 : i32
    %0 = arith.cmpi eq, %arg0, %c0_i32 : i32
    %1 = arith.extui %0 : i1 to i32
    %c0_i32_0 = arith.constant 0 : i32
    %2 = arith.cmpi ne, %1, %c0_i32_0 : i32
    scf.if %2 {
      %cst_69 = arith.constant 0.000000e+00 : f32
      %101 = vector.broadcast %cst_69 : f32 to vector<1x1xf32>
      %c0_70 = arith.constant 0 : index
      %c0_71 = arith.constant 0 : index
      %102 = vector.load %arg8[%c0_70, %c0_71] : memref<1x1xf32, #tpu.memory_space<vmem>>, vector<1x1xf32>
      tpu.vector_store %arg8[%c0_70, %c0_71], %101 {strides = array<i32>} : memref<1x1xf32, #tpu.memory_space<vmem>>, vector<1x1xf32>,
    } else {
    }
    %c0 = arith.constant 0 : index
    %c0_1 = arith.constant 0 : index
    %c0_2 = arith.constant 0 : index
    %3 = vector.load %arg1[%c0, %c0_1, %c0_2] : memref<1x362x4xf32, #tpu.memory_space<vmem>>, vector<1x324x4xf32>
    %4 = vector.shape_cast %3 : vector<1x324x4xf32> to vector<324x4xf32>
    %5 = arith.truncf %4 : vector<324x4xf32> to vector<324x4xbf16>
    %c0_3 = arith.constant 0 : index
    %c0_4 = arith.constant 0 : index
    %c0_5 = arith.constant 0 : index
    %6 = vector.load %arg3[%c0_3, %c0_4, %c0_5] : memref<9x4x32xbf16, #tpu.memory_space<vmem>>, vector<1x4x32xbf16>
    %7 = vector.shape_cast %6 : vector<1x4x32xbf16> to vector<4x32xbf16>
    %cst = arith.constant dense<0.000000e+00> : vector<324x32xf32>
    %8 = tpu.matmul %5, %7, %cst {dimension_numbers = #tpu.dot_dimension_numbers<[1], [0], [0], [1], [0, 0, 1, 1], [], []>} : vector<324x4xbf16>, vector<4x32xbf16>, vector<324x32xf32> -> vector<324x32xf32>
    %c0_6 = arith.constant 0 : index
    %c1 = arith.constant 1 : index
    %c0_7 = arith.constant 0 : index
    %9 = vector.load %arg1[%c0_6, %c1, %c0_7] : memref<1x362x4xf32, #tpu.memory_space<vmem>>, vector<1x324x4xf32>
    %10 = vector.shape_cast %9 : vector<1x324x4xf32> to vector<324x4xf32>
    %11 = arith.truncf %10 : vector<324x4xf32> to vector<324x4xbf16>
    %c1_8 = arith.constant 1 : index
    %c0_9 = arith.constant 0 : index
    %c0_10 = arith.constant 0 : index
    %12 = vector.load %arg3[%c1_8, %c0_9, %c0_10] : memref<9x4x32xbf16, #tpu.memory_space<vmem>>, vector<1x4x32xbf16>
    %13 = vector.shape_cast %12 : vector<1x4x32xbf16> to vector<4x32xbf16>
    %cst_11 = arith.constant dense<0.000000e+00> : vector<324x32xf32>
    %14 = tpu.matmul %11, %13, %cst_11 {dimension_numbers = #tpu.dot_dimension_numbers<[1], [0], [0], [1], [0, 0, 1, 1], [], []>} : vector<324x4xbf16>, vector<4x32xbf16>, vector<324x32xf32> -> vector<324x32xf32>
    %15 = arith.addf %8, %14 : vector<324x32xf32>
    %c0_12 = arith.constant 0 : index
    %c2 = arith.constant 2 : index
    %c0_13 = arith.constant 0 : index
    %16 = vector.load %arg1[%c0_12, %c2, %c0_13] : memref<1x362x4xf32, #tpu.memory_space<vmem>>, vector<1x324x4xf32>
    %17 = vector.shape_cast %16 : vector<1x324x4xf32> to vector<324x4xf32>
    %18 = arith.truncf %17 : vector<324x4xf32> to vector<324x4xbf16>
    %c2_14 = arith.constant 2 : index
    %c0_15 = arith.constant 0 : index
    %c0_16 = arith.constant 0 : index
    %19 = vector.load %arg3[%c2_14, %c0_15, %c0_16] : memref<9x4x32xbf16, #tpu.memory_space<vmem>>, vector<1x4x32xbf16>
    %20 = vector.shape_cast %19 : vector<1x4x32xbf16> to vector<4x32xbf16>
    %cst_17 = arith.constant dense<0.000000e+00> : vector<324x32xf32>
    %21 = tpu.matmul %18, %20, %cst_17 {dimension_numbers = #tpu.dot_dimension_numbers<[1], [0], [0], [1], [0, 0, 1, 1], [], []>} : vector<324x4xbf16>, vector<4x32xbf16>, vector<324x32xf32> -> vector<324x32xf32>
    %22 = arith.addf %15, %21 : vector<324x32xf32>
    %c0_18 = arith.constant 0 : index
    %c18 = arith.constant 18 : index
    %c0_19 = arith.constant 0 : index
    %23 = vector.load %arg1[%c0_18, %c18, %c0_19] : memref<1x362x4xf32, #tpu.memory_space<vmem>>, vector<1x324x4xf32>
    %24 = vector.shape_cast %23 : vector<1x324x4xf32> to vector<324x4xf32>
    %25 = arith.truncf %24 : vector<324x4xf32> to vector<324x4xbf16>
    %c3 = arith.constant 3 : index
    %c0_20 = arith.constant 0 : index
    %c0_21 = arith.constant 0 : index
    %26 = vector.load %arg3[%c3, %c0_20, %c0_21] : memref<9x4x32xbf16, #tpu.memory_space<vmem>>, vector<1x4x32xbf16>
    %27 = vector.shape_cast %26 : vector<1x4x32xbf16> to vector<4x32xbf16>
    %cst_22 = arith.constant dense<0.000000e+00> : vector<324x32xf32>
    %28 = tpu.matmul %25, %27, %cst_22 {dimension_numbers = #tpu.dot_dimension_numbers<[1], [0], [0], [1], [0, 0, 1, 1], [], []>} : vector<324x4xbf16>, vector<4x32xbf16>, vector<324x32xf32> -> vector<324x32xf32>
    %29 = arith.addf %22, %28 : vector<324x32xf32>
    %c0_23 = arith.constant 0 : index
    %c19 = arith.constant 19 : index
    %c0_24 = arith.constant 0 : index
    %30 = vector.load %arg1[%c0_23, %c19, %c0_24] : memref<1x362x4xf32, #tpu.memory_space<vmem>>, vector<1x324x4xf32>
    %31 = vector.shape_cast %30 : vector<1x324x4xf32> to vector<324x4xf32>
    %32 = arith.truncf %31 : vector<324x4xf32> to vector<324x4xbf16>
    %c4 = arith.constant 4 : index
    %c0_25 = arith.constant 0 : index
    %c0_26 = arith.constant 0 : index
    %33 = vector.load %arg3[%c4, %c0_25, %c0_26] : memref<9x4x32xbf16, #tpu.memory_space<vmem>>, vector<1x4x32xbf16>
    %34 = vector.shape_cast %33 : vector<1x4x32xbf16> to vector<4x32xbf16>
    %cst_27 = arith.constant dense<0.000000e+00> : vector<324x32xf32>
    %35 = tpu.matmul %32, %34, %cst_27 {dimension_numbers = #tpu.dot_dimension_numbers<[1], [0], [0], [1], [0, 0, 1, 1], [], []>} : vector<324x4xbf16>, vector<4x32xbf16>, vector<324x32xf32> -> vector<324x32xf32>
    %36 = arith.addf %29, %35 : vector<324x32xf32>
    %c0_28 = arith.constant 0 : index
    %c20 = arith.constant 20 : index
    %c0_29 = arith.constant 0 : index
    %37 = vector.load %arg1[%c0_28, %c20, %c0_29] : memref<1x362x4xf32, #tpu.memory_space<vmem>>, vector<1x324x4xf32>
    %38 = vector.shape_cast %37 : vector<1x324x4xf32> to vector<324x4xf32>
    %39 = arith.truncf %38 : vector<324x4xf32> to vector<324x4xbf16>
    %c5 = arith.constant 5 : index
    %c0_30 = arith.constant 0 : index
    %c0_31 = arith.constant 0 : index
    %40 = vector.load %arg3[%c5, %c0_30, %c0_31] : memref<9x4x32xbf16, #tpu.memory_space<vmem>>, vector<1x4x32xbf16>
    %41 = vector.shape_cast %40 : vector<1x4x32xbf16> to vector<4x32xbf16>
    %cst_32 = arith.constant dense<0.000000e+00> : vector<324x32xf32>
    %42 = tpu.matmul %39, %41, %cst_32 {dimension_numbers = #tpu.dot_dimension_numbers<[1], [0], [0], [1], [0, 0, 1, 1], [], []>} : vector<324x4xbf16>, vector<4x32xbf16>, vector<324x32xf32> -> vector<324x32xf32>
    %43 = arith.addf %36, %42 : vector<324x32xf32>
    %c0_33 = arith.constant 0 : index
    %c36 = arith.constant 36 : index
    %c0_34 = arith.constant 0 : index
    %44 = vector.load %arg1[%c0_33, %c36, %c0_34] : memref<1x362x4xf32, #tpu.memory_space<vmem>>, vector<1x324x4xf32>
    %45 = vector.shape_cast %44 : vector<1x324x4xf32> to vector<324x4xf32>
    %46 = arith.truncf %45 : vector<324x4xf32> to vector<324x4xbf16>
    %c6 = arith.constant 6 : index
    %c0_35 = arith.constant 0 : index
    %c0_36 = arith.constant 0 : index
    %47 = vector.load %arg3[%c6, %c0_35, %c0_36] : memref<9x4x32xbf16, #tpu.memory_space<vmem>>, vector<1x4x32xbf16>
    %48 = vector.shape_cast %47 : vector<1x4x32xbf16> to vector<4x32xbf16>
    %cst_37 = arith.constant dense<0.000000e+00> : vector<324x32xf32>
    %49 = tpu.matmul %46, %48, %cst_37 {dimension_numbers = #tpu.dot_dimension_numbers<[1], [0], [0], [1], [0, 0, 1, 1], [], []>} : vector<324x4xbf16>, vector<4x32xbf16>, vector<324x32xf32> -> vector<324x32xf32>
    %50 = arith.addf %43, %49 : vector<324x32xf32>
    %c0_38 = arith.constant 0 : index
    %c37 = arith.constant 37 : index
    %c0_39 = arith.constant 0 : index
    %51 = vector.load %arg1[%c0_38, %c37, %c0_39] : memref<1x362x4xf32, #tpu.memory_space<vmem>>, vector<1x324x4xf32>
    %52 = vector.shape_cast %51 : vector<1x324x4xf32> to vector<324x4xf32>
    %53 = arith.truncf %52 : vector<324x4xf32> to vector<324x4xbf16>
    %c7 = arith.constant 7 : index
    %c0_40 = arith.constant 0 : index
    %c0_41 = arith.constant 0 : index
    %54 = vector.load %arg3[%c7, %c0_40, %c0_41] : memref<9x4x32xbf16, #tpu.memory_space<vmem>>, vector<1x4x32xbf16>
    %55 = vector.shape_cast %54 : vector<1x4x32xbf16> to vector<4x32xbf16>
    %cst_42 = arith.constant dense<0.000000e+00> : vector<324x32xf32>
    %56 = tpu.matmul %53, %55, %cst_42 {dimension_numbers = #tpu.dot_dimension_numbers<[1], [0], [0], [1], [0, 0, 1, 1], [], []>} : vector<324x4xbf16>, vector<4x32xbf16>, vector<324x32xf32> -> vector<324x32xf32>
    %57 = arith.addf %50, %56 : vector<324x32xf32>
    %c0_43 = arith.constant 0 : index
    %c38 = arith.constant 38 : index
    %c0_44 = arith.constant 0 : index
    %58 = vector.load %arg1[%c0_43, %c38, %c0_44] : memref<1x362x4xf32, #tpu.memory_space<vmem>>, vector<1x324x4xf32>
    %59 = vector.shape_cast %58 : vector<1x324x4xf32> to vector<324x4xf32>
    %60 = arith.truncf %59 : vector<324x4xf32> to vector<324x4xbf16>
    %c8 = arith.constant 8 : index
    %c0_45 = arith.constant 0 : index
    %c0_46 = arith.constant 0 : index
    %61 = vector.load %arg3[%c8, %c0_45, %c0_46] : memref<9x4x32xbf16, #tpu.memory_space<vmem>>, vector<1x4x32xbf16>
    %62 = vector.shape_cast %61 : vector<1x4x32xbf16> to vector<4x32xbf16>
    %cst_47 = arith.constant dense<0.000000e+00> : vector<324x32xf32>
    %63 = tpu.matmul %60, %62, %cst_47 {dimension_numbers = #tpu.dot_dimension_numbers<[1], [0], [0], [1], [0, 0, 1, 1], [], []>} : vector<324x4xbf16>, vector<4x32xbf16>, vector<324x32xf32> -> vector<324x32xf32>
    %64 = arith.addf %57, %63 : vector<324x32xf32>
    %c0_48 = arith.constant 0 : index
    %c0_49 = arith.constant 0 : index
    %65 = vector.load %arg4[%c0_48, %c0_49] : memref<1x32xf32, #tpu.memory_space<vmem>>, vector<1x32xf32>
    %66 = vector.broadcast %65 : vector<1x32xf32> to vector<324x32xf32>
    %67 = arith.addf %64, %66 : vector<324x32xf32>
    %cst_50 = arith.constant 0.000000e+00 : f32
    %68 = vector.broadcast %cst_50 : f32 to vector<324x32xf32>
    %69 = arith.maximumf %67, %68 : vector<324x32xf32>
    %70 = arith.truncf %69 : vector<324x32xf32> to vector<324x32xbf16>
    %c0_51 = arith.constant 0 : index
    %c0_52 = arith.constant 0 : index
    %71 = vector.load %arg5[%c0_51, %c0_52] : memref<32x4xbf16, #tpu.memory_space<vmem>>, vector<32x4xbf16>
    %cst_53 = arith.constant dense<0.000000e+00> : vector<324x4xf32>
    %72 = tpu.matmul %70, %71, %cst_53 {dimension_numbers = #tpu.dot_dimension_numbers<[1], [0], [0], [1], [0, 0, 1, 1], [], []>} : vector<324x32xbf16>, vector<32x4xbf16>, vector<324x4xf32> -> vector<324x4xf32>
    %c0_54 = arith.constant 0 : index
    %c0_55 = arith.constant 0 : index
    %73 = vector.load %arg6[%c0_54, %c0_55] : memref<1x4xf32, #tpu.memory_space<vmem>>, vector<1x4xf32>
    %74 = vector.broadcast %73 : vector<1x4xf32> to vector<324x4xf32>
    %75 = arith.addf %72, %74 : vector<324x4xf32>
    %c0_56 = arith.constant 0 : index
    %c0_57 = arith.constant 0 : index
    %c0_58 = arith.constant 0 : index
    %76 = vector.load %arg2[%c0_56, %c0_57, %c0_58] : memref<1x324x4xf32, #tpu.memory_space<vmem>>, vector<1x324x4xf32>
    %77 = vector.shape_cast %76 : vector<1x324x4xf32> to vector<324x4xf32>
    %cst_59 = arith.constant dense<0xFF800000> : vector<324xf32>
    %78 = vector.multi_reduction <maximumf>, %75, %cst_59 [1] : vector<324x4xf32> to vector<324xf32>
    %79 = vector.shape_cast %78 : vector<324xf32> to vector<324x1xf32>
    %80 = vector.broadcast %79 : vector<324x1xf32> to vector<324x4xf32>
    %81 = arith.subf %75, %80 : vector<324x4xf32>
    %82 = math.exp %81 : vector<324x4xf32>
    %cst_60 = arith.constant dense<0.000000e+00> : vector<324xf32>
    %83 = vector.multi_reduction <add>, %82, %cst_60 [1] : vector<324x4xf32> to vector<324xf32>
    %84 = vector.shape_cast %83 : vector<324xf32> to vector<324x1xf32>
    %85 = math.log %84 : vector<324x1xf32>
    %86 = vector.broadcast %85 : vector<324x1xf32> to vector<324x4xf32>
    %87 = arith.subf %81, %86 : vector<324x4xf32>
    %88 = arith.mulf %77, %87 : vector<324x4xf32>
    %cst_61 = arith.constant 0.000000e+00 : f32
    %89 = vector.broadcast %cst_61 : f32 to vector<324x4xf32>
    %90 = arith.subf %89, %88 : vector<324x4xf32>
    %cst_62 = arith.constant dense<0.000000e+00> : vector<324xf32>
    %91 = vector.multi_reduction <add>, %90, %cst_62 [1] : vector<324x4xf32> to vector<324xf32>
    %92 = vector.shape_cast %91 : vector<324xf32> to vector<324x1xf32>
    %cst_63 = arith.constant dense<0.000000e+00> : vector<1xf32>
    %93 = vector.multi_reduction <add>, %92, %cst_63 [0] : vector<324x1xf32> to vector<1xf32>
    %94 = vector.shape_cast %93 : vector<1xf32> to vector<1x1xf32>
    %c0_64 = arith.constant 0 : index
    %c0_65 = arith.constant 0 : index
    %95 = vector.load %arg8[%c0_64, %c0_65] : memref<1x1xf32, #tpu.memory_space<vmem>>, vector<1x1xf32>
    %96 = arith.addf %95, %94 : vector<1x1xf32>
    %c0_66 = arith.constant 0 : index
    %c0_67 = arith.constant 0 : index
    %97 = vector.load %arg8[%c0_66, %c0_67] : memref<1x1xf32, #tpu.memory_space<vmem>>, vector<1x1xf32>
    tpu.vector_store %arg8[%c0_66, %c0_67], %96 {strides = array<i32>} : memref<1x1xf32, #tpu.memory_space<vmem>>, vector<1x1xf32>,
    %c1_i32 = arith.constant 1 : i32
    %98 = arith.cmpi eq, %arg0, %c1_i32 : i32
    %99 = arith.extui %98 : i1 to i32
    %c0_i32_68 = arith.constant 0 : i32
    %100 = arith.cmpi ne, %99, %c0_i32_68 : i32
    scf.if %100 {
      %c0_69 = arith.constant 0 : index
      %c0_70 = arith.constant 0 : index
      %101 = vector.load %arg8[%c0_69, %c0_70] : memref<1x1xf32, #tpu.memory_space<vmem>>, vector<1x1xf32>
      %cst_71 = arith.constant 0.001953125 : f32
      %102 = vector.broadcast %cst_71 : f32 to vector<1x1xf32>
      %103 = arith.mulf %101, %102 : vector<1x1xf32>
      %c0_72 = arith.constant 0 : index
      %c0_73 = arith.constant 0 : index
      %104 = vector.load %arg7[%c0_72, %c0_73] : memref<1x1xf32, #tpu.memory_space<vmem>>, vector<1x1xf32>
      tpu.vector_store %arg7[%c0_72, %c0_73], %103 {strides = array<i32>} : memref<1x1xf32, #tpu.memory_space<vmem>>, vector<1x1xf32>,
    } else {
    }
    return
  }
  func.func @transform_0(%arg0: i32) -> (i32, i32, i32) {
    %c0_i32 = arith.constant 0 : i32
    %c0_i32_0 = arith.constant 0 : i32
    %c0_i32_1 = arith.constant 0 : i32
    return %arg0, %c0_i32, %c0_i32_0 : i32, i32, i32
  }
  func.func @transform_1(%arg0: i32) -> (i32, i32, i32) {
    %c0_i32 = arith.constant 0 : i32
    %c0_i32_0 = arith.constant 0 : i32
    %c0_i32_1 = arith.constant 0 : i32
    return %arg0, %c0_i32, %c0_i32_0 : i32, i32, i32
  }
  func.func @transform_2(%arg0: i32) -> (i32, i32, i32) {
    %c0_i32 = arith.constant 0 : i32
    %c0_i32_0 = arith.constant 0 : i32
    %c0_i32_1 = arith.constant 0 : i32
    %c0_i32_2 = arith.constant 0 : i32
    return %c0_i32, %c0_i32_0, %c0_i32_1 : i32, i32, i32
  }
  func.func @transform_3(%arg0: i32) -> (i32, i32) {
    %c0_i32 = arith.constant 0 : i32
    %c0_i32_0 = arith.constant 0 : i32
    %c0_i32_1 = arith.constant 0 : i32
    return %c0_i32, %c0_i32_0 : i32, i32
  }
  func.func @transform_4(%arg0: i32) -> (i32, i32) {
    %c0_i32 = arith.constant 0 : i32
    %c0_i32_0 = arith.constant 0 : i32
    %c0_i32_1 = arith.constant 0 : i32
    return %c0_i32, %c0_i32_0 : i32, i32
  }
  func.func @transform_5(%arg0: i32) -> (i32, i32) {
    %c0_i32 = arith.constant 0 : i32
    %c0_i32_0 = arith.constant 0 : i32
    %c0_i32_1 = arith.constant 0 : i32
    return %c0_i32, %c0_i32_0 : i32, i32
  }
  func.func @transform_6(%arg0: i32) -> (i32, i32) {
    %c0_i32 = arith.constant 0 : i32
    %c0_i32_0 = arith.constant 0 : i32
    %c0_i32_1 = arith.constant 0 : i32
    return %c0_i32, %c0_i32_0 : i32, i32
  }
}

</mosaic_0001>

<llo_original>
// kernel: losser_forward.1
$region0: #{losser_forward.1}
  #allocation0 [shape = 'u32[]', space=smem, size = 0x4, offset = 0x4, fixed_abs, tag = 'smem constant byte address 0x4 - core index']
  #allocation1 [shape = 'u32[144,128]{1,0:T(1,128)}', space=vmem, size = 0x12000, scoped, tag = 'internal scratch']
  #allocation2 [shape = 'f32[1,1]{1,0:T(1,128)}', space=vmem, size = 0x200, scoped, tag = 'scratch operand']
  %s0 = inlined_call_operand.vmem [shape: f32[2,362,4], index: 0, kind: input, shape index: {}]
  %s1 = inlined_call_operand.vmem [shape: f32[2,324,4], index: 1, kind: input, shape index: {}]
  %s2 = inlined_call_operand.vmem [shape: bf16[9,4,32], index: 2, kind: input, shape index: {}]
  %s3 = inlined_call_operand.vmem [shape: f32[1,32], index: 3, kind: input, shape index: {}]
  %s4 = inlined_call_operand.vmem [shape: bf16[32,4], index: 4, kind: input, shape index: {}]
  %s5 = inlined_call_operand.vmem [shape: f32[1,4], index: 5, kind: input, shape index: {}]
  %s6 = inlined_call_operand.hbm [shape: f32[1,1], index: 6, kind: output, shape index: {}]
  %s7 = sld [smem:[#allocation0]]
  $region65: #{losser_forward.1} parent=0
    _
  %s9 = ssub.s32 1, %s7
  %s10 = scalar_select 0, %s9, %s7
  $region1: #{losser_forward.1} parent=0
    #allocation3 [shape = 'u8[512]{0}', space=vmem, size = 0x400, scoped, tag = 'output window, operand 0, single buffered']
    #allocation4 [shape = 's32[2]{0}', space=sflag, size = 0x8, scoped, tag = 'scoped memory for losser_forward.1']
    %11 = vsyncpa [#allocation4], 0
    loop: start=0, step=1, limit=4
    $region2: #{losser_forward.1} parent=1 // loop_pre_header
      _
    $region3: #{losser_forward.1} parent=1 // loop_header
      %s13 = sphi 0, %s17
      %p14 = scmp.ge.s32.totalorder %s13, 4
      %s23 = sphi 0, %s25
      %s26 = sphi 0, %s23
      %s27 = sphi 0, %s26
      %s43 = sphi 0, %s27
      %s49 = sphi 0, %s51
      %s52 = sphi 0, %s49
      %s53 = sphi 0, %s52
      %s69 = sphi 0, %s53
      %s73 = sphi 0, %s73
      %s75 = sphi 0, %s73
      %s76 = sphi 0, %s75
      %s90 = sphi 0, %s76
      %s94 = sphi 0, %s94
      %s96 = sphi 0, %s94
      %s97 = sphi 0, %s96
      %s111 = sphi 0, %s97
      %s115 = sphi 0, %s115
      %s117 = sphi 0, %s115
      %s118 = sphi 0, %s117
      %s132 = sphi 0, %s118
      %s136 = sphi 0, %s136
      %s138 = sphi 0, %s136
      %s139 = sphi 0, %s138
      %s153 = sphi 0, %s139
      %s157 = sphi 0, %s157
      %s159 = sphi 0, %s157
      %s160 = sphi 0, %s159
      %s174 = sphi 0, %s160
    $region4: #{losser_forward.1} parent=1 // loop_header_branch
      %16 = sbr.rel (%p14) target = $region8
    $region5: #{losser_forward.1} parent=1 // loop_body
      %s18 = ssub.s32 %s13, 1
      %s19 = ssub.s32 %s13, 2
      %s20 = sadd.s32 %s13, 1
      %s21 = ssub.s32 %s13, %s20
      %p22 = scmp.eq.s32.totalorder %s21, 0
      %s24 = sadd.s32 %s23, 1
      %s25 = scalar_select %p22, %s23, %s24
      %p28 = pneg %p22
      %p29 = scmp.eq.s32.totalorder %s13, 1
      %p30 = por %p28, %p29
      %p31 = scmp.ne.s32.totalorder %s23, %s26
      %p32 = scmp.eq.s32.totalorder %s13, 0
      %p33 = por %p31, %p32
      %p34 = scmp.ne.s32.totalorder %s23, %s26
      %p35 = scmp.eq.s32.totalorder %s18, 1
      %p36 = por %p34, %p35
      %p37 = scmp.ne.s32.totalorder %s26, %s27
      %p38 = scmp.eq.s32.totalorder %s18, 0
      %p39 = por %p37, %p38
      %p40 = scmp.ne.s32.totalorder %s26, %s27
      %p41 = scmp.eq.s32.totalorder %s19, 1
      %p42 = por %p40, %p41
      %p44 = scmp.ne.s32.totalorder %s27, %s43
      %p45 = scmp.eq.s32.totalorder %s19, 0
      %p46 = por %p44, %p45
      %s47 = ssub.s32 %s13, %s20
      %p48 = scmp.eq.s32.totalorder %s47, 0
      %s50 = sadd.s32 %s49, 1
      %s51 = scalar_select %p48, %s49, %s50
      %p54 = pneg %p48
      %p55 = scmp.eq.s32.totalorder %s13, 1
      %p56 = por %p54, %p55
      %p57 = scmp.ne.s32.totalorder %s49, %s52
      %p58 = scmp.eq.s32.totalorder %s13, 0
      %p59 = por %p57, %p58
      %p60 = scmp.ne.s32.totalorder %s49, %s52
      %p61 = scmp.eq.s32.totalorder %s18, 1
      %p62 = por %p60, %p61
      %p63 = scmp.ne.s32.totalorder %s52, %s53
      %p64 = scmp.eq.s32.totalorder %s18, 0
      %p65 = por %p63, %p64
      %p66 = scmp.ne.s32.totalorder %s52, %s53
      %p67 = scmp.eq.s32.totalorder %s19, 1
      %p68 = por %p66, %p67
      %p70 = scmp.ne.s32.totalorder %s53, %s69
      %p71 = scmp.eq.s32.totalorder %s19, 0
      %p72 = por %p70, %p71
      %s74 = sadd.s32 %s73, 1
      %p77 = scmp.eq.s32.totalorder %s13, 1
      %p78 = scmp.ne.s32.totalorder %s73, %s75
      %p79 = scmp.eq.s32.totalorder %s13, 0
      %p80 = por %p78, %p79
      %p81 = scmp.ne.s32.totalorder %s73, %s75
      %p82 = scmp.eq.s32.totalorder %s18, 1
      %p83 = por %p81, %p82
      %p84 = scmp.ne.s32.totalorder %s75, %s76
      %p85 = scmp.eq.s32.totalorder %s18, 0
      %p86 = por %p84, %p85
      %p87 = scmp.ne.s32.totalorder %s75, %s76
      %p88 = scmp.eq.s32.totalorder %s19, 1
      %p89 = por %p87, %p88
      %p91 = scmp.ne.s32.totalorder %s76, %s90
      %p92 = scmp.eq.s32.totalorder %s19, 0
      %p93 = por %p91, %p92
      %s95 = sadd.s32 %s94, 1
      %p98 = scmp.eq.s32.totalorder %s13, 1
      %p99 = scmp.ne.s32.totalorder %s94, %s96
      %p100 = scmp.eq.s32.totalorder %s13, 0
      %p101 = por %p99, %p100
      %p102 = scmp.ne.s32.totalorder %s94, %s96
      %p103 = scmp.eq.s32.totalorder %s18, 1
      %p104 = por %p102, %p103
      %p105 = scmp.ne.s32.totalorder %s96, %s97
      %p106 = scmp.eq.s32.totalorder %s18, 0
      %p107 = por %p105, %p106
      %p108 = scmp.ne.s32.totalorder %s96, %s97
      %p109 = scmp.eq.s32.totalorder %s19, 1
      %p110 = por %p108, %p109
      %p112 = scmp.ne.s32.totalorder %s97, %s111
      %p113 = scmp.eq.s32.totalorder %s19, 0
      %p114 = por %p112, %p113
      %s116 = sadd.s32 %s115, 1
      %p119 = scmp.eq.s32.totalorder %s13, 1
      %p120 = scmp.ne.s32.totalorder %s115, %s117
      %p121 = scmp.eq.s32.totalorder %s13, 0
      %p122 = por %p120, %p121
      %p123 = scmp.ne.s32.totalorder %s115, %s117
      %p124 = scmp.eq.s32.totalorder %s18, 1
      %p125 = por %p123, %p124
      %p126 = scmp.ne.s32.totalorder %s117, %s118
      %p127 = scmp.eq.s32.totalorder %s18, 0
      %p128 = por %p126, %p127
      %p129 = scmp.ne.s32.totalorder %s117, %s118
      %p130 = scmp.eq.s32.totalorder %s19, 1
      %p131 = por %p129, %p130
      %p133 = scmp.ne.s32.totalorder %s118, %s132
      %p134 = scmp.eq.s32.totalorder %s19, 0
      %p135 = por %p133, %p134
      %s137 = sadd.s32 %s136, 1
      %p140 = scmp.eq.s32.totalorder %s13, 1
      %p141 = scmp.ne.s32.totalorder %s136, %s138
      %p142 = scmp.eq.s32.totalorder %s13, 0
      %p143 = por %p141, %p142
      %p144 = scmp.ne.s32.totalorder %s136, %s138
      %p145 = scmp.eq.s32.totalorder %s18, 1
      %p146 = por %p144, %p145
      %p147 = scmp.ne.s32.totalorder %s138, %s139
      %p148 = scmp.eq.s32.totalorder %s18, 0
      %p149 = por %p147, %p148
      %p150 = scmp.ne.s32.totalorder %s138, %s139
      %p151 = scmp.eq.s32.totalorder %s19, 1
      %p152 = por %p150, %p151
      %p154 = scmp.ne.s32.totalorder %s139, %s153
      %p155 = scmp.eq.s32.totalorder %s19, 0
      %p156 = por %p154, %p155
      %s158 = sadd.s32 %s157, 1
      %p161 = scmp.eq.s32.totalorder %s13, 1
      %p162 = scmp.ne.s32.totalorder %s157, %s159
      %p163 = scmp.eq.s32.totalorder %s13, 0
      %p164 = por %p162, %p163
      %p165 = scmp.ne.s32.totalorder %s157, %s159
      %p166 = scmp.eq.s32.totalorder %s18, 1
      %p167 = por %p165, %p166
      %p168 = scmp.ne.s32.totalorder %s159, %s160
      %p169 = scmp.eq.s32.totalorder %s18, 0
      %p170 = por %p168, %p169
      %p171 = scmp.ne.s32.totalorder %s159, %s160
      %p172 = scmp.eq.s32.totalorder %s19, 1
      %p173 = por %p171, %p172
      %p175 = scmp.ne.s32.totalorder %s160, %s174
      %p176 = scmp.eq.s32.totalorder %s19, 0
      %p177 = por %p175, %p176
      %p178 = scmp.le.s32.totalorder 1, %s13
      %p179 = scmp.lt.s32.totalorder %s13, 3
      %p180 = pnand %p178, %p179
      %p181 = pneg %p180
      // Predicated region
      $region9: #{losser_forward.1} parent=5 // pred_check
        _
      $region10: #{losser_forward.1} parent=5 // pred_check_branch
        %183 = sbr.rel (%p180) target = $region12
      $region11: #{losser_forward.1} parent=5 // pred_region
        %s184 = ssub.s32 %s13, 1
        // Predicated region
        $region13: #{losser_forward.1} parent=11 // pred_check
          %p185 = pneg %p86
        $region14: #{losser_forward.1} parent=11 // pred_check_branch
          %187 = sbr.rel (%p185) target = $region16
        $region15: #{losser_forward.1} parent=11 // pred_region
          _
        $region16: #{losser_forward.1} parent=11 // pred_fallthru
          _
        // Predicated region
        $region17: #{losser_forward.1} parent=11 // pred_check
          %p188 = pneg %p107
        $region18: #{losser_forward.1} parent=11 // pred_check_branch
          %190 = sbr.rel (%p188) target = $region20
        $region19: #{losser_forward.1} parent=11 // pred_region
          _
        $region20: #{losser_forward.1} parent=11 // pred_fallthru
          _
        // Predicated region
        $region21: #{losser_forward.1} parent=11 // pred_check
          %p191 = pneg %p128
        $region22: #{losser_forward.1} parent=11 // pred_check_branch
          %193 = sbr.rel (%p191) target = $region24
        $region23: #{losser_forward.1} parent=11 // pred_region
          _
        $region24: #{losser_forward.1} parent=11 // pred_fallthru
          _
        // Predicated region
        $region25: #{losser_forward.1} parent=11 // pred_check
          %p194 = pneg %p149
        $region26: #{losser_forward.1} parent=11 // pred_check_branch
          %196 = sbr.rel (%p194) target = $region28
        $region27: #{losser_forward.1} parent=11 // pred_region
          _
        $region28: #{losser_forward.1} parent=11 // pred_fallthru
          _
      $region12: #{losser_forward.1} parent=5 // pred_fallthru
        _
      %p197 = scmp.lt.s32.totalorder %s13, 2
      // Predicated region
      $region29: #{losser_forward.1} parent=5 // pred_check
        %p198 = pneg %p197
      $region30: #{losser_forward.1} parent=5 // pred_check_branch
        %200 = sbr.rel (%p198) target = $region32
      $region31: #{losser_forward.1} parent=5 // pred_region
        // Predicated region
        $region33: #{losser_forward.1} parent=31 // pred_check
          %p201 = pneg %p33
        $region34: #{losser_forward.1} parent=31 // pred_check_branch
          %203 = sbr.rel (%p201) target = $region36
        $region35: #{losser_forward.1} parent=31 // pred_region
          %p204 = scmp.lt.s32.totalorder %s13, 1
          %s205 = scalar_select %p204, %s13, 1
          %s206 = smul.addr %s205, 46
          %s207 = smul.addr %s206, 8
          %s208 = scalar_lea.vmem %s0, %s207
        $region36: #{losser_forward.1} parent=31 // pred_fallthru
          _
        // Predicated region
        $region37: #{losser_forward.1} parent=31 // pred_check
          %p209 = pneg %p59
        $region38: #{losser_forward.1} parent=31 // pred_check_branch
          %211 = sbr.rel (%p209) target = $region40
        $region39: #{losser_forward.1} parent=31 // pred_region
          %p212 = scmp.lt.s32.totalorder %s13, 1
          %s213 = scalar_select %p212, %s13, 1
          %s214 = smul.addr %s213, 41
          %s215 = smul.addr %s214, 8
          %s216 = scalar_lea.vmem %s1, %s215
        $region40: #{losser_forward.1} parent=31 // pred_fallthru
          _
      $region32: #{losser_forward.1} parent=5 // pred_fallthru
        _
      %p217 = scmp.le.s32.totalorder 1, %s13
      %p218 = scmp.lt.s32.totalorder %s13, 3
      %p219 = pnand %p217, %p218
      %p220 = pneg %p219
      // Predicated region
      $region41: #{losser_forward.1} parent=5 // pred_check
        _
      $region42: #{losser_forward.1} parent=5 // pred_check_branch
        %222 = sbr.rel (%p219) target = $region44
      $region43: #{losser_forward.1} parent=5 // pred_region
        %s223 = ssub.s32 %s13, 1
        %p224 = scmp.lt.s32.totalorder %s18, 1
        %s225 = scalar_select %p224, %s18, 1
        %s226 = smul.addr %s225, 46
        %s227 = smul.addr %s226, 8
        %s228 = scalar_lea.vmem %s0, %s227
        %p229 = pneg %p39
        %p230 = pneg %p36
        %p231 = scmp.lt.s32.totalorder %s18, 1
        %s232 = scalar_select %p231, %s18, 1
        %s233 = smul.addr %s232, 41
        %s234 = smul.addr %s233, 8
        %s235 = scalar_lea.vmem %s1, %s234
        %p236 = pneg %p65
        %p237 = pneg %p62
        %p238 = pneg %p86
        %p239 = pneg %p83
        %p240 = pneg %p107
        %p241 = pneg %p104
        %p242 = pneg %p128
        %p243 = pneg %p125
        %p244 = pneg %p149
        %p245 = pneg %p146
        %p246 = pneg %p170
        %p247 = pneg %p167
        %p248 = scmp.lt.s32.totalorder %s18, 1
        %s249 = scalar_select %p248, %s18, 1
        %s250 = smul.addr %s249, 46
        %s251 = smul.addr %s250, 8
        %s252 = scalar_lea.vmem %s0, %s251
        %p253 = scmp.lt.s32.totalorder %s18, 1
        %s254 = scalar_select %p253, %s18, 1
        %s255 = smul.addr %s254, 41
        %s256 = smul.addr %s255, 8
        %s257 = scalar_lea.vmem %s1, %s256
        %p259 = scmp.eq.s32.totalorder %s18, 0
        // Predicated region
        $region45: #{losser_forward.1} parent=43 // pred_check
          %p260 = pneg %p259
        $region46: #{losser_forward.1} parent=43 // pred_check_branch
          %262 = sbr.rel (%p260) target = $region48
        $region47: #{losser_forward.1} parent=43 // pred_region
          %vm263 = vcmask 0
          %264 = vst.msk [vmem:[#allocation2] sm:$0x1] %vm263, 0.0
        $region48: #{losser_forward.1} parent=43 // pred_fallthru
          _
        %v265 = vld [vmem:[%s252] sm:$0xff]
        %v266 = vld [vmem:[%s252 + $0x8] sm:$0xff]
        %v267 = vld [vmem:[%s252 + $0x10] sm:$0xff]
        %v268 = vld [vmem:[%s252 + $0x18] sm:$0xff]
        %v269 = vld [vmem:[%s252 + $0x20] sm:$0xff]
        %v270 = vld [vmem:[%s252 + $0x28] sm:$0xff]
        %v271 = vld [vmem:[%s252 + $0x30] sm:$0xff]
        %v272 = vld [vmem:[%s252 + $0x38] sm:$0xff]
        %v273 = vld [vmem:[%s252 + $0x40] sm:$0xff]
        %v274 = vld [vmem:[%s252 + $0x48] sm:$0xff]
        %v275 = vld [vmem:[%s252 + $0x50] sm:$0xff]
        %v276 = vld [vmem:[%s252 + $0x58] sm:$0xff]
        %v277 = vld [vmem:[%s252 + $0x60] sm:$0xff]
        %v278 = vld [vmem:[%s252 + $0x68] sm:$0xff]
        %v279 = vld [vmem:[%s252 + $0x70] sm:$0xff]
        %v280 = vld [vmem:[%s252 + $0x78] sm:$0xff]
        %v281 = vld [vmem:[%s252 + $0x80] sm:$0xff]
        %v282 = vld [vmem:[%s252 + $0x88] sm:$0xff]
        %v283 = vld [vmem:[%s252 + $0x90] sm:$0xff]
        %v284 = vld [vmem:[%s252 + $0x98] sm:$0xff]
        %v285 = vld [vmem:[%s252 + $0xa0] sm:$0xff]
        %v286 = vld [vmem:[%s252 + $0xa8] sm:$0xff]
        %v287 = vld [vmem:[%s252 + $0xb0] sm:$0xff]
        %v288 = vld [vmem:[%s252 + $0xb8] sm:$0xff]
        %v289 = vld [vmem:[%s252 + $0xc0] sm:$0xff]
        %v290 = vld [vmem:[%s252 + $0xc8] sm:$0xff]
        %v291 = vld [vmem:[%s252 + $0xd0] sm:$0xff]
        %v292 = vld [vmem:[%s252 + $0xd8] sm:$0xff]
        %v293 = vld [vmem:[%s252 + $0xe0] sm:$0xff]
        %v294 = vld [vmem:[%s252 + $0xe8] sm:$0xff]
        %v295 = vld [vmem:[%s252 + $0xf0] sm:$0xff]
        %v296 = vld [vmem:[%s252 + $0xf8] sm:$0xff]
        %v297 = vld [vmem:[%s252 + $0x100] sm:$0xff]
        %v298 = vld [vmem:[%s252 + $0x108] sm:$0xff]
        %v299 = vld [vmem:[%s252 + $0x110] sm:$0xff]
        %v300 = vld [vmem:[%s252 + $0x118] sm:$0xff]
        %v301 = vld [vmem:[%s252 + $0x120] sm:$0xff]
        %v302 = vld [vmem:[%s252 + $0x128] sm:$0xff]
        %v303 = vld [vmem:[%s252 + $0x130] sm:$0xff]
        %v304 = vld [vmem:[%s252 + $0x138] sm:$0xff]
        %v305 = vld [vmem:[%s252 + $0x140] sm:$0xf]
        %v306 = vpack.c.bf16 %v266, %v265
        %v307 = vpack.c.bf16 %v268, %v267
        %v308 = vpack.c.bf16 %v270, %v269
        %v309 = vpack.c.bf16 %v272, %v271
        %v310 = vpack.c.bf16 %v274, %v273
        %v311 = vpack.c.bf16 %v276, %v275
        %v312 = vpack.c.bf16 %v278, %v277
        %v313 = vpack.c.bf16 %v280, %v279
        %v314 = vpack.c.bf16 %v282, %v281
        %v315 = vpack.c.bf16 %v284, %v283
        %v316 = vpack.c.bf16 %v286, %v285
        %v317 = vpack.c.bf16 %v288, %v287
        %v318 = vpack.c.bf16 %v290, %v289
        %v319 = vpack.c.bf16 %v292, %v291
        %v320 = vpack.c.bf16 %v294, %v293
        %v321 = vpack.c.bf16 %v296, %v295
        %v322 = vpack.c.bf16 %v298, %v297
        %v323 = vpack.c.bf16 %v300, %v299
        %v324 = vpack.c.bf16 %v302, %v301
        %v325 = vpack.c.bf16 %v304, %v303
        %v326 = vpack.c.bf16 %v305, %v305
        %v327 = vld [vmem:[%s2] sm:$0x3]
        %v328 = vld [vmem:[%s252 + $0x1] sm:$0xff]
        %v329 = vld [vmem:[%s252 + $0x9] sm:$0xff]
        %v330 = vld [vmem:[%s252 + $0x11] sm:$0xff]
        %v331 = vld [vmem:[%s252 + $0x19] sm:$0xff]
        %v332 = vld [vmem:[%s252 + $0x21] sm:$0xff]
        %v333 = vld [vmem:[%s252 + $0x29] sm:$0xff]
        %v334 = vld [vmem:[%s252 + $0x31] sm:$0xff]
        %v335 = vld [vmem:[%s252 + $0x39] sm:$0xff]
        %v336 = vld [vmem:[%s252 + $0x41] sm:$0xff]
        %v337 = vld [vmem:[%s252 + $0x49] sm:$0xff]
        %v338 = vld [vmem:[%s252 + $0x51] sm:$0xff]
        %v339 = vld [vmem:[%s252 + $0x59] sm:$0xff]
        %v340 = vld [vmem:[%s252 + $0x61] sm:$0xff]
        %v341 = vld [vmem:[%s252 + $0x69] sm:$0xff]
        %v342 = vld [vmem:[%s252 + $0x71] sm:$0xff]
        %v343 = vld [vmem:[%s252 + $0x79] sm:$0xff]
        %v344 = vld [vmem:[%s252 + $0x81] sm:$0xff]
        %v345 = vld [vmem:[%s252 + $0x89] sm:$0xff]
        %v346 = vld [vmem:[%s252 + $0x91] sm:$0xff]
        %v347 = vld [vmem:[%s252 + $0x99] sm:$0xff]
        %v348 = vld [vmem:[%s252 + $0xa1] sm:$0xff]
        %v349 = vld [vmem:[%s252 + $0xa9] sm:$0xff]
        %v350 = vld [vmem:[%s252 + $0xb1] sm:$0xff]
        %v351 = vld [vmem:[%s252 + $0xb9] sm:$0xff]
        %v352 = vld [vmem:[%s252 + $0xc1] sm:$0xff]
        %v353 = vld [vmem:[%s252 + $0xc9] sm:$0xff]
        %v354 = vld [vmem:[%s252 + $0xd1] sm:$0xff]
        %v355 = vld [vmem:[%s252 + $0xd9] sm:$0xff]
        %v356 = vld [vmem:[%s252 + $0xe1] sm:$0xff]
        %v357 = vld [vmem:[%s252 + $0xe9] sm:$0xff]
        %v358 = vld [vmem:[%s252 + $0xf1] sm:$0xff]
        %v359 = vld [vmem:[%s252 + $0xf9] sm:$0xff]
        %v360 = vld [vmem:[%s252 + $0x101] sm:$0xff]
        %v361 = vld [vmem:[%s252 + $0x109] sm:$0xff]
        %v362 = vld [vmem:[%s252 + $0x111] sm:$0xff]
        %v363 = vld [vmem:[%s252 + $0x119] sm:$0xff]
        %v364 = vld [vmem:[%s252 + $0x121] sm:$0xff]
        %v365 = vld [vmem:[%s252 + $0x129] sm:$0xff]
        %v366 = vld [vmem:[%s252 + $0x131] sm:$0xff]
        %v367 = vld [vmem:[%s252 + $0x139] sm:$0xff]
        %v368 = vld [vmem:[%s252 + $0x141] sm:$0xf]
        %v369 = vpack.c.bf16 %v329, %v328
        %v370 = vpack.c.bf16 %v331, %v330
        %v371 = vpack.c.bf16 %v333, %v332
        %v372 = vpack.c.bf16 %v335, %v334
        %v373 = vpack.c.bf16 %v337, %v336
        %v374 = vpack.c.bf16 %v339, %v338
        %v375 = vpack.c.bf16 %v341, %v340
        %v376 = vpack.c.bf16 %v343, %v342
        %v377 = vpack.c.bf16 %v345, %v344
        %v378 = vpack.c.bf16 %v347, %v346
        %v379 = vpack.c.bf16 %v349, %v348
        %v380 = vpack.c.bf16 %v351, %v350
        %v381 = vpack.c.bf16 %v353, %v352
        %v382 = vpack.c.bf16 %v355, %v354
        %v383 = vpack.c.bf16 %v357, %v356
        %v384 = vpack.c.bf16 %v359, %v358
        %v385 = vpack.c.bf16 %v361, %v360
        %v386 = vpack.c.bf16 %v363, %v362
        %v387 = vpack.c.bf16 %v365, %v364
        %v388 = vpack.c.bf16 %v367, %v366
        %v389 = vpack.c.bf16 %v368, %v368
        %s390 = scalar_lea.vmem %s2, 2
        %v391 = vld [vmem:[%s390] sm:$0x3]
        %vm392 = vcmask 31744
        %v394 = vsel %vm392, %v369, 0
        %v397 = vsel %vm392, %v370, 0
        %v400 = vsel %vm392, %v371, 0
        %v403 = vsel %vm392, %v372, 0
        %v406 = vsel %vm392, %v373, 0
        %v409 = vsel %vm392, %v374, 0
        %v412 = vsel %vm392, %v375, 0
        %v415 = vsel %vm392, %v376, 0
        %v418 = vsel %vm392, %v377, 0
        %v421 = vsel %vm392, %v378, 0
        %v424 = vsel %vm392, %v379, 0
        %v427 = vsel %vm392, %v380, 0
        %v430 = vsel %vm392, %v381, 0
        %v433 = vsel %vm392, %v382, 0
        %v436 = vsel %vm392, %v383, 0
        %v439 = vsel %vm392, %v384, 0
        %v442 = vsel %vm392, %v385, 0
        %v445 = vsel %vm392, %v386, 0
        %v448 = vsel %vm392, %v387, 0
        %v451 = vsel %vm392, %v388, 0
        %v454 = vsel %vm392, %v389, 0
        %vm456 = vcmask 1041408
        %v458 = vsel %vm456, %v391, 0
        %460 = vmatprep.subr.bf16.mxu0 0
        %461 = vmatpush1.bf16.msra.mxu0 %v458
        %462 = vmatprep.subr.bf16.mxu0 0
        %463 = vmatpush1.bf16.msra.mxu0 0
        %464 = vmatprep.subr.bf16.mxu0 0
        %465 = vmatpush1.bf16.msra.mxu0 0
        %466 = vmatprep.subr.bf16.mxu0 0
        %467 = vmatpush1.bf16.msra.mxu0 0
        %468 = vmatprep.subr.bf16.mxu0 0
        %469 = vmatpush1.bf16.msra.mxu0 0
        %470 = vmatprep.subr.bf16.mxu0 0
        %471 = vmatpush1.bf16.msra.mxu0 0
        %472 = vmatprep.subr.bf16.mxu0 0
        %473 = vmatpush1.bf16.msra.mxu0 0
        %474 = vmatprep.subr.bf16.mxu0 0
        %475 = vmatpush1.bf16.msra.mxu0 0
        %476 = vmatprep.subr.bf16.mxu0 0
        %477 = vmatpush1.bf16.msra.mxu0 0
        %478 = vmatprep.subr.bf16.mxu0 0
        %479 = vmatpush1.bf16.msra.mxu0 0
        %480 = vmatprep.subr.bf16.mxu0 0
        %481 = vmatpush1.bf16.msra.mxu0 0
        %482 = vmatprep.subr.bf16.mxu0 0
        %483 = vmatpush1.bf16.msra.mxu0 0
        %484 = vmatprep.subr.bf16.mxu0 0
        %485 = vmatpush1.bf16.msra.mxu0 0
        %486 = vmatprep.subr.bf16.mxu0 0
        %487 = vmatpush1.bf16.msra.mxu0 0
        %488 = vmatprep.subr.bf16.mxu0 0
        %489 = vmatpush1.bf16.msra.mxu0 0
        %490 = vmatprep.subr.bf16.mxu0 0
        %491 = vmatpush1.bf16.msra.mxu0 0
        %492 = vmatprep.mubr.bf16.mxu0 0
        %493 = vmatmul.mubr.bf16.gmra.mrb[0].mxu0 %v394
        %v494 = vpop.f32.mrb[0].mxu0
        %v495 = vadd.f32 0.0, %v494
        %v496 = vpop.f32.mrb[0].mxu0
        %v497 = vpop.f32.mrb[0].mxu0
        %v498 = vadd.f32 0.0, %v497
        %v499 = vpop.f32.mrb[0].mxu0
        %500 = vmatprep.mubr.bf16.mxu0 0
        %501 = vmatmul.mubr.bf16.gmra.mrb[0].mxu0 %v397
        %v502 = vpop.f32.mrb[0].mxu0
        %v503 = vadd.f32 0.0, %v502
        %v504 = vpop.f32.mrb[0].mxu0
        %v505 = vpop.f32.mrb[0].mxu0
        %v506 = vadd.f32 0.0, %v505
        %v507 = vpop.f32.mrb[0].mxu0
        %508 = vmatprep.mubr.bf16.mxu0 0
        %509 = vmatmul.mubr.bf16.gmra.mrb[0].mxu0 %v400
        %v510 = vpop.f32.mrb[0].mxu0
        %v511 = vadd.f32 0.0, %v510
        %v512 = vpop.f32.mrb[0].mxu0
        %v513 = vpop.f32.mrb[0].mxu0
        %v514 = vadd.f32 0.0, %v513
        %v515 = vpop.f32.mrb[0].mxu0
        %516 = vmatprep.mubr.bf16.mxu0 0
        %517 = vmatmul.mubr.bf16.gmra.mrb[0].mxu0 %v403
        %v518 = vpop.f32.mrb[0].mxu0
        %v519 = vadd.f32 0.0, %v518
        %v520 = vpop.f32.mrb[0].mxu0
        %v521 = vpop.f32.mrb[0].mxu0
        %v522 = vadd.f32 0.0, %v521
        %v523 = vpop.f32.mrb[0].mxu0
        %524 = vmatprep.mubr.bf16.mxu0 0
        %525 = vmatmul.mubr.bf16.gmra.mrb[0].mxu0 %v406
        %v526 = vpop.f32.mrb[0].mxu0
        %v527 = vadd.f32 0.0, %v526
        %v528 = vpop.f32.mrb[0].mxu0
        %v529 = vpop.f32.mrb[0].mxu0
        %v530 = vadd.f32 0.0, %v529
        %v531 = vpop.f32.mrb[0].mxu0
        %532 = vmatprep.mubr.bf16.mxu0 0
        %533 = vmatmul.mubr.bf16.gmra.mrb[0].mxu0 %v409
        %v534 = vpop.f32.mrb[0].mxu0
        %v535 = vadd.f32 0.0, %v534
        %v536 = vpop.f32.mrb[0].mxu0
        %v537 = vpop.f32.mrb[0].mxu0
        %v538 = vadd.f32 0.0, %v537
        %v539 = vpop.f32.mrb[0].mxu0
        %540 = vmatprep.mubr.bf16.mxu0 0
        %541 = vmatmul.mubr.bf16.gmra.mrb[0].mxu0 %v412
        %v542 = vpop.f32.mrb[0].mxu0
        %v543 = vadd.f32 0.0, %v542
        %v544 = vpop.f32.mrb[0].mxu0
        %v545 = vpop.f32.mrb[0].mxu0
        %v546 = vadd.f32 0.0, %v545
        %v547 = vpop.f32.mrb[0].mxu0
        %548 = vmatprep.mubr.bf16.mxu0 0
        %549 = vmatmul.mubr.bf16.gmra.mrb[0].mxu0 %v415
        %v550 = vpop.f32.mrb[0].mxu0
        %v551 = vadd.f32 0.0, %v550
        %v552 = vpop.f32.mrb[0].mxu0
        %v553 = vpop.f32.mrb[0].mxu0
        %v554 = vadd.f32 0.0, %v553
        %v555 = vpop.f32.mrb[0].mxu0
        %556 = vmatprep.mubr.bf16.mxu0 0
        %557 = vmatmul.mubr.bf16.gmra.mrb[0].mxu0 %v418
        %v558 = vpop.f32.mrb[0].mxu0
        %v559 = vadd.f32 0.0, %v558
        %v560 = vpop.f32.mrb[0].mxu0
        %v561 = vpop.f32.mrb[0].mxu0
        %v562 = vadd.f32 0.0, %v561
        %v563 = vpop.f32.mrb[0].mxu0
        %564 = vmatprep.mubr.bf16.mxu0 0
        %565 = vmatmul.mubr.bf16.gmra.mrb[0].mxu0 %v421
        %v566 = vpop.f32.mrb[0].mxu0
        %v567 = vadd.f32 0.0, %v566
        %v568 = vpop.f32.mrb[0].mxu0
        %v569 = vpop.f32.mrb[0].mxu0
        %v570 = vadd.f32 0.0, %v569
        %v571 = vpop.f32.mrb[0].mxu0
        %572 = vmatprep.mubr.bf16.mxu0 0
        %573 = vmatmul.mubr.bf16.gmra.mrb[0].mxu0 %v424
        %v574 = vpop.f32.mrb[0].mxu0
        %v575 = vadd.f32 0.0, %v574
        %v576 = vpop.f32.mrb[0].mxu0
        %v577 = vpop.f32.mrb[0].mxu0
        %v578 = vadd.f32 0.0, %v577
        %v579 = vpop.f32.mrb[0].mxu0
        %580 = vmatprep.mubr.bf16.mxu0 0
        %581 = vmatmul.mubr.bf16.gmra.mrb[0].mxu0 %v427
        %v582 = vpop.f32.mrb[0].mxu0
        %v583 = vadd.f32 0.0, %v582
        %v584 = vpop.f32.mrb[0].mxu0
        %v585 = vpop.f32.mrb[0].mxu0
        %v586 = vadd.f32 0.0, %v585
        %v587 = vpop.f32.mrb[0].mxu0
        %588 = vmatprep.mubr.bf16.mxu0 0
        %589 = vmatmul.mubr.bf16.gmra.mrb[0].mxu0 %v430
        %v590 = vpop.f32.mrb[0].mxu0
        %v591 = vadd.f32 0.0, %v590
        %v592 = vpop.f32.mrb[0].mxu0
        %v593 = vpop.f32.mrb[0].mxu0
        %v594 = vadd.f32 0.0, %v593
        %v595 = vpop.f32.mrb[0].mxu0
        %596 = vmatprep.mubr.bf16.mxu0 0
        %597 = vmatmul.mubr.bf16.gmra.mrb[0].mxu0 %v433
        %v598 = vpop.f32.mrb[0].mxu0
        %v599 = vadd.f32 0.0, %v598
        %v600 = vpop.f32.mrb[0].mxu0
        %v601 = vpop.f32.mrb[0].mxu0
        %v602 = vadd.f32 0.0, %v601
        %v603 = vpop.f32.mrb[0].mxu0
        %604 = vmatprep.mubr.bf16.mxu0 0
        %605 = vmatmul.mubr.bf16.gmra.mrb[0].mxu0 %v436
        %v606 = vpop.f32.mrb[0].mxu0
        %v607 = vadd.f32 0.0, %v606
        %v608 = vpop.f32.mrb[0].mxu0
        %v609 = vpop.f32.mrb[0].mxu0
        %v610 = vadd.f32 0.0, %v609
        %v611 = vpop.f32.mrb[0].mxu0
        %612 = vmatprep.mubr.bf16.mxu0 0
        %613 = vmatmul.mubr.bf16.gmra.mrb[0].mxu0 %v439
        %v614 = vpop.f32.mrb[0].mxu0
        %v615 = vadd.f32 0.0, %v614
        %v616 = vpop.f32.mrb[0].mxu0
        %v617 = vpop.f32.mrb[0].mxu0
        %v618 = vadd.f32 0.0, %v617
        %v619 = vpop.f32.mrb[0].mxu0
        %620 = vmatprep.mubr.bf16.mxu0 0
        %621 = vmatmul.mubr.bf16.gmra.mrb[0].mxu0 %v442
        %v622 = vpop.f32.mrb[0].mxu0
        %v623 = vadd.f32 0.0, %v622
        %v624 = vpop.f32.mrb[0].mxu0
        %v625 = vpop.f32.mrb[0].mxu0
        %v626 = vadd.f32 0.0, %v625
        %v627 = vpop.f32.mrb[0].mxu0
        %628 = vmatprep.mubr.bf16.mxu0 0
        %629 = vmatmul.mubr.bf16.gmra.mrb[0].mxu0 %v445
        %v630 = vpop.f32.mrb[0].mxu0
        %v631 = vadd.f32 0.0, %v630
        %v632 = vpop.f32.mrb[0].mxu0
        %v633 = vpop.f32.mrb[0].mxu0
        %v634 = vadd.f32 0.0, %v633
        %v635 = vpop.f32.mrb[0].mxu0
        %636 = vmatprep.mubr.bf16.mxu0 0
        %637 = vmatmul.mubr.bf16.gmra.mrb[0].mxu0 %v448
        %v638 = vpop.f32.mrb[0].mxu0
        %v639 = vadd.f32 0.0, %v638
        %v640 = vpop.f32.mrb[0].mxu0
        %v641 = vpop.f32.mrb[0].mxu0
        %v642 = vadd.f32 0.0, %v641
        %v643 = vpop.f32.mrb[0].mxu0
        %644 = vmatprep.mubr.bf16.mxu0 0
        %645 = vmatmul.mubr.bf16.gmra.mrb[0].mxu0 %v451
        %v646 = vpop.f32.mrb[0].mxu0
        %v647 = vadd.f32 0.0, %v646
        %v648 = vpop.f32.mrb[0].mxu0
        %v649 = vpop.f32.mrb[0].mxu0
        %v650 = vadd.f32 0.0, %v649
        %v651 = vpop.f32.mrb[0].mxu0
        %652 = vmatprep.mubr.bf16.mxu0 0
        %653 = vmatmul.mubr.bf16.gmra.mrb[0].mxu0 %v454
        %v654 = vpop.f32.mrb[0].mxu0
        %v655 = vadd.f32 0.0, %v654
        %v656 = vpop.f32.mrb[0].mxu0
        %v657 = vpop.f32.mrb[0].mxu0
        %v658 = vpop.f32.mrb[0].mxu0
        %659 = vdwg.mxu0
        %v661 = vsel %vm392, %v306, 0
        %v664 = vsel %vm392, %v307, 0
        %v667 = vsel %vm392, %v308, 0
        %v670 = vsel %vm392, %v309, 0
        %v673 = vsel %vm392, %v310, 0
        %v676 = vsel %vm392, %v311, 0
        %v679 = vsel %vm392, %v312, 0
        %v682 = vsel %vm392, %v313, 0
        %v685 = vsel %vm392, %v314, 0
        %v688 = vsel %vm392, %v315, 0
        %v691 = vsel %vm392, %v316, 0
        %v694 = vsel %vm392, %v317, 0
        %v697 = vsel %vm392, %v318, 0
        %v700 = vsel %vm392, %v319, 0
        %v703 = vsel %vm392, %v320, 0
        %v706 = vsel %vm392, %v321, 0
        %v709 = vsel %vm392, %v322, 0
        %v712 = vsel %vm392, %v323, 0
        %v715 = vsel %vm392, %v324, 0
        %v718 = vsel %vm392, %v325, 0
        %v721 = vsel %vm392, %v326, 0
        %v724 = vsel %vm456, %v327, 0
        %726 = vmatprep.subr.bf16.mxu0 0
        %727 = vmatpush1.bf16.msra.mxu0 %v724
        %728 = vmatprep.subr.bf16.mxu0 0
        %729 = vmatpush1.bf16.msra.mxu0 0
        %730 = vmatprep.subr.bf16.mxu0 0
        %731 = vmatpush1.bf16.msra.mxu0 0
        %732 = vmatprep.subr.bf16.mxu0 0
        %733 = vmatpush1.bf16.msra.mxu0 0
        %734 = vmatprep.subr.bf16.mxu0 0
        %735 = vmatpush1.bf16.msra.mxu0 0
        %736 = vmatprep.subr.bf16.mxu0 0
        %737 = vmatpush1.bf16.msra.mxu0 0
        %738 = vmatprep.subr.bf16.mxu0 0
        %739 = vmatpush1.bf16.msra.mxu0 0
        %740 = vmatprep.subr.bf16.mxu0 0
        %741 = vmatpush1.bf16.msra.mxu0 0
        %742 = vmatprep.subr.bf16.mxu0 0
        %743 = vmatpush1.bf16.msra.mxu0 0
        %744 = vmatprep.subr.bf16.mxu0 0
        %745 = vmatpush1.bf16.msra.mxu0 0
        %746 = vmatprep.subr.bf16.mxu0 0
        %747 = vmatpush1.bf16.msra.mxu0 0
        %748 = vmatprep.subr.bf16.mxu0 0
        %749 = vmatpush1.bf16.msra.mxu0 0
        %750 = vmatprep.subr.bf16.mxu0 0
        %751 = vmatpush1.bf16.msra.mxu0 0
        %752 = vmatprep.subr.bf16.mxu0 0
        %753 = vmatpush1.bf16.msra.mxu0 0
        %754 = vmatprep.subr.bf16.mxu0 0
        %755 = vmatpush1.bf16.msra.mxu0 0
        %756 = vmatprep.subr.bf16.mxu0 0
        %757 = vmatpush1.bf16.msra.mxu0 0
        %758 = vmatprep.mubr.bf16.mxu0 0
        %759 = vmatmul.mubr.bf16.gmra.mrb[0].mxu0 %v661
        %v760 = vpop.f32.mrb[0].mxu0
        %v761 = vadd.f32 %v495, %v760
        %v762 = vpop.f32.mrb[0].mxu0
        %v763 = vpop.f32.mrb[0].mxu0
        %v764 = vadd.f32 %v498, %v763
        %v765 = vpop.f32.mrb[0].mxu0
        %766 = vmatprep.mubr.bf16.mxu0 0
        %767 = vmatmul.mubr.bf16.gmra.mrb[0].mxu0 %v664
        %v768 = vpop.f32.mrb[0].mxu0
        %v769 = vadd.f32 %v503, %v768
        %v770 = vpop.f32.mrb[0].mxu0
        %v771 = vpop.f32.mrb[0].mxu0
        %v772 = vadd.f32 %v506, %v771
        %v773 = vpop.f32.mrb[0].mxu0
        %774 = vmatprep.mubr.bf16.mxu0 0
        %775 = vmatmul.mubr.bf16.gmra.mrb[0].mxu0 %v667
        %v776 = vpop.f32.mrb[0].mxu0
        %v777 = vadd.f32 %v511, %v776
        %v778 = vpop.f32.mrb[0].mxu0
        %v779 = vpop.f32.mrb[0].mxu0
        %v780 = vadd.f32 %v514, %v779
        %v781 = vpop.f32.mrb[0].mxu0
        %782 = vmatprep.mubr.bf16.mxu0 0
        %783 = vmatmul.mubr.bf16.gmra.mrb[0].mxu0 %v670
        %v784 = vpop.f32.mrb[0].mxu0
        %v785 = vadd.f32 %v519, %v784
        %v786 = vpop.f32.mrb[0].mxu0
        %v787 = vpop.f32.mrb[0].mxu0
        %v788 = vadd.f32 %v522, %v787
        %v789 = vpop.f32.mrb[0].mxu0
        %790 = vmatprep.mubr.bf16.mxu0 0
        %791 = vmatmul.mubr.bf16.gmra.mrb[0].mxu0 %v673
        %v792 = vpop.f32.mrb[0].mxu0
        %v793 = vadd.f32 %v527, %v792
        %v794 = vpop.f32.mrb[0].mxu0
        %v795 = vpop.f32.mrb[0].mxu0
        %v796 = vadd.f32 %v530, %v795
        %v797 = vpop.f32.mrb[0].mxu0
        %798 = vmatprep.mubr.bf16.mxu0 0
        %799 = vmatmul.mubr.bf16.gmra.mrb[0].mxu0 %v676
        %v800 = vpop.f32.mrb[0].mxu0
        %v801 = vadd.f32 %v535, %v800
        %v802 = vpop.f32.mrb[0].mxu0
        %v803 = vpop.f32.mrb[0].mxu0
        %v804 = vadd.f32 %v538, %v803
        %v805 = vpop.f32.mrb[0].mxu0
        %806 = vmatprep.mubr.bf16.mxu0 0
        %807 = vmatmul.mubr.bf16.gmra.mrb[0].mxu0 %v679
        %v808 = vpop.f32.mrb[0].mxu0
        %v809 = vadd.f32 %v543, %v808
        %v810 = vpop.f32.mrb[0].mxu0
        %v811 = vpop.f32.mrb[0].mxu0
        %v812 = vadd.f32 %v546, %v811
        %v813 = vpop.f32.mrb[0].mxu0
        %814 = vmatprep.mubr.bf16.mxu0 0
        %815 = vmatmul.mubr.bf16.gmra.mrb[0].mxu0 %v682
        %v816 = vpop.f32.mrb[0].mxu0
        %v817 = vadd.f32 %v551, %v816
        %v818 = vpop.f32.mrb[0].mxu0
        %v819 = vpop.f32.mrb[0].mxu0
        %v820 = vadd.f32 %v554, %v819
        %v821 = vpop.f32.mrb[0].mxu0
        %822 = vmatprep.mubr.bf16.mxu0 0
        %823 = vmatmul.mubr.bf16.gmra.mrb[0].mxu0 %v685
        %v824 = vpop.f32.mrb[0].mxu0
        %v825 = vadd.f32 %v559, %v824
        %v826 = vpop.f32.mrb[0].mxu0
        %v827 = vpop.f32.mrb[0].mxu0
        %v828 = vadd.f32 %v562, %v827
        %v829 = vpop.f32.mrb[0].mxu0
        %830 = vmatprep.mubr.bf16.mxu0 0
        %831 = vmatmul.mubr.bf16.gmra.mrb[0].mxu0 %v688
        %v832 = vpop.f32.mrb[0].mxu0
        %v833 = vadd.f32 %v567, %v832
        %v834 = vpop.f32.mrb[0].mxu0
        %v835 = vpop.f32.mrb[0].mxu0
        %v836 = vadd.f32 %v570, %v835
        %v837 = vpop.f32.mrb[0].mxu0
        %838 = vmatprep.mubr.bf16.mxu0 0
        %839 = vmatmul.mubr.bf16.gmra.mrb[0].mxu0 %v691
        %v840 = vpop.f32.mrb[0].mxu0
        %v841 = vadd.f32 %v575, %v840
        %v842 = vpop.f32.mrb[0].mxu0
        %v843 = vpop.f32.mrb[0].mxu0
        %v844 = vadd.f32 %v578, %v843
        %v845 = vpop.f32.mrb[0].mxu0
        %846 = vmatprep.mubr.bf16.mxu0 0
        %847 = vmatmul.mubr.bf16.gmra.mrb[0].mxu0 %v694
        %v848 = vpop.f32.mrb[0].mxu0
        %v849 = vadd.f32 %v583, %v848
        %v850 = vpop.f32.mrb[0].mxu0
        %v851 = vpop.f32.mrb[0].mxu0
        %v852 = vadd.f32 %v586, %v851
        %v853 = vpop.f32.mrb[0].mxu0
        %854 = vmatprep.mubr.bf16.mxu0 0
        %855 = vmatmul.mubr.bf16.gmra.mrb[0].mxu0 %v697
        %v856 = vpop.f32.mrb[0].mxu0
        %v857 = vadd.f32 %v591, %v856
        %v858 = vpop.f32.mrb[0].mxu0
        %v859 = vpop.f32.mrb[0].mxu0
        %v860 = vadd.f32 %v594, %v859
        %v861 = vpop.f32.mrb[0].mxu0
        %862 = vmatprep.mubr.bf16.mxu0 0
        %863 = vmatmul.mubr.bf16.gmra.mrb[0].mxu0 %v700
        %v864 = vpop.f32.mrb[0].mxu0
        %v865 = vadd.f32 %v599, %v864
        %v866 = vpop.f32.mrb[0].mxu0
        %v867 = vpop.f32.mrb[0].mxu0
        %v868 = vadd.f32 %v602, %v867
        %v869 = vpop.f32.mrb[0].mxu0
        %870 = vmatprep.mubr.bf16.mxu0 0
        %871 = vmatmul.mubr.bf16.gmra.mrb[0].mxu0 %v703
        %v872 = vpop.f32.mrb[0].mxu0
        %v873 = vadd.f32 %v607, %v872
        %v874 = vpop.f32.mrb[0].mxu0
        %v875 = vpop.f32.mrb[0].mxu0
        %v876 = vadd.f32 %v610, %v875
        %v877 = vpop.f32.mrb[0].mxu0
        %878 = vmatprep.mubr.bf16.mxu0 0
        %879 = vmatmul.mubr.bf16.gmra.mrb[0].mxu0 %v706
        %v880 = vpop.f32.mrb[0].mxu0
        %v881 = vadd.f32 %v615, %v880
        %v882 = vpop.f32.mrb[0].mxu0
        %v883 = vpop.f32.mrb[0].mxu0
        %v884 = vadd.f32 %v618, %v883
        %v885 = vpop.f32.mrb[0].mxu0
        %886 = vmatprep.mubr.bf16.mxu0 0
        %887 = vmatmul.mubr.bf16.gmra.mrb[0].mxu0 %v709
        %v888 = vpop.f32.mrb[0].mxu0
        %v889 = vadd.f32 %v623, %v888
        %v890 = vpop.f32.mrb[0].mxu0
        %v891 = vpop.f32.mrb[0].mxu0
        %v892 = vadd.f32 %v626, %v891
        %v893 = vpop.f32.mrb[0].mxu0
        %894 = vmatprep.mubr.bf16.mxu0 0
        %895 = vmatmul.mubr.bf16.gmra.mrb[0].mxu0 %v712
        %v896 = vpop.f32.mrb[0].mxu0
        %v897 = vadd.f32 %v631, %v896
        %v898 = vpop.f32.mrb[0].mxu0
        %v899 = vpop.f32.mrb[0].mxu0
        %v900 = vadd.f32 %v634, %v899
        %v901 = vpop.f32.mrb[0].mxu0
        %902 = vmatprep.mubr.bf16.mxu0 0
        %903 = vmatmul.mubr.bf16.gmra.mrb[0].mxu0 %v715
        %v904 = vpop.f32.mrb[0].mxu0
        %v905 = vadd.f32 %v639, %v904
        %v906 = vpop.f32.mrb[0].mxu0
        %v907 = vpop.f32.mrb[0].mxu0
        %v908 = vadd.f32 %v642, %v907
        %v909 = vpop.f32.mrb[0].mxu0
        %910 = vmatprep.mubr.bf16.mxu0 0
        %911 = vmatmul.mubr.bf16.gmra.mrb[0].mxu0 %v718
        %v912 = vpop.f32.mrb[0].mxu0
        %v913 = vadd.f32 %v647, %v912
        %v914 = vpop.f32.mrb[0].mxu0
        %v915 = vpop.f32.mrb[0].mxu0
        %v916 = vadd.f32 %v650, %v915
        %v917 = vpop.f32.mrb[0].mxu0
        %918 = vmatprep.mubr.bf16.mxu0 0
        %919 = vmatmul.mubr.bf16.gmra.mrb[0].mxu0 %v721
        %v920 = vpop.f32.mrb[0].mxu0
        %v921 = vadd.f32 %v655, %v920
        %v922 = vpop.f32.mrb[0].mxu0
        %v923 = vpop.f32.mrb[0].mxu0
        %v924 = vpop.f32.mrb[0].mxu0
        %925 = vdwg.mxu0
        %v926 = vld [vmem:[%s252 + $0x2] sm:$0xff]
        %v927 = vld [vmem:[%s252 + $0xa] sm:$0xff]
        %v928 = vld [vmem:[%s252 + $0x12] sm:$0xff]
        %v929 = vld [vmem:[%s252 + $0x1a] sm:$0xff]
        %v930 = vld [vmem:[%s252 + $0x22] sm:$0xff]
        %v931 = vld [vmem:[%s252 + $0x2a] sm:$0xff]
        %v932 = vld [vmem:[%s252 + $0x32] sm:$0xff]
        %v933 = vld [vmem:[%s252 + $0x3a] sm:$0xff]
        %v934 = vld [vmem:[%s252 + $0x42] sm:$0xff]
        %v935 = vld [vmem:[%s252 + $0x4a] sm:$0xff]
        %v936 = vld [vmem:[%s252 + $0x52] sm:$0xff]
        %v937 = vld [vmem:[%s252 + $0x5a] sm:$0xff]
        %v938 = vld [vmem:[%s252 + $0x62] sm:$0xff]
        %v939 = vld [vmem:[%s252 + $0x6a] sm:$0xff]
        %v940 = vld [vmem:[%s252 + $0x72] sm:$0xff]
        %v941 = vld [vmem:[%s252 + $0x7a] sm:$0xff]
        %v942 = vld [vmem:[%s252 + $0x82] sm:$0xff]
        %v943 = vld [vmem:[%s252 + $0x8a] sm:$0xff]
        %v944 = vld [vmem:[%s252 + $0x92] sm:$0xff]
        %v945 = vld [vmem:[%s252 + $0x9a] sm:$0xff]
        %v946 = vld [vmem:[%s252 + $0xa2] sm:$0xff]
        %v947 = vld [vmem:[%s252 + $0xaa] sm:$0xff]
        %v948 = vld [vmem:[%s252 + $0xb2] sm:$0xff]
        %v949 = vld [vmem:[%s252 + $0xba] sm:$0xff]
        %v950 = vld [vmem:[%s252 + $0xc2] sm:$0xff]
        %v951 = vld [vmem:[%s252 + $0xca] sm:$0xff]
        %v952 = vld [vmem:[%s252 + $0xd2] sm:$0xff]
        %v953 = vld [vmem:[%s252 + $0xda] sm:$0xff]
        %v954 = vld [vmem:[%s252 + $0xe2] sm:$0xff]
        %v955 = vld [vmem:[%s252 + $0xea] sm:$0xff]
        %v956 = vld [vmem:[%s252 + $0xf2] sm:$0xff]
        %v957 = vld [vmem:[%s252 + $0xfa] sm:$0xff]
        %v958 = vld [vmem:[%s252 + $0x102] sm:$0xff]
        %v959 = vld [vmem:[%s252 + $0x10a] sm:$0xff]
        %v960 = vld [vmem:[%s252 + $0x112] sm:$0xff]
        %v961 = vld [vmem:[%s252 + $0x11a] sm:$0xff]
        %v962 = vld [vmem:[%s252 + $0x122] sm:$0xff]
        %v963 = vld [vmem:[%s252 + $0x12a] sm:$0xff]
        %v964 = vld [vmem:[%s252 + $0x132] sm:$0xff]
        %v965 = vld [vmem:[%s252 + $0x13a] sm:$0xff]
        %v966 = vld [vmem:[%s252 + $0x142] sm:$0xf]
        %v967 = vpack.c.bf16 %v927, %v926
        %v968 = vpack.c.bf16 %v929, %v928
        %v969 = vpack.c.bf16 %v931, %v930
        %v970 = vpack.c.bf16 %v933, %v932
        %v971 = vpack.c.bf16 %v935, %v934
        %v972 = vpack.c.bf16 %v937, %v936
        %v973 = vpack.c.bf16 %v939, %v938
        %v974 = vpack.c.bf16 %v941, %v940
        %v975 = vpack.c.bf16 %v943, %v942
        %v976 = vpack.c.bf16 %v945, %v944
        %v977 = vpack.c.bf16 %v947, %v946
        %v978 = vpack.c.bf16 %v949, %v948
        %v979 = vpack.c.bf16 %v951, %v950
        %v980 = vpack.c.bf16 %v953, %v952
        %v981 = vpack.c.bf16 %v955, %v954
        %v982 = vpack.c.bf16 %v957, %v956
        %v983 = vpack.c.bf16 %v959, %v958
        %v984 = vpack.c.bf16 %v961, %v960
        %v985 = vpack.c.bf16 %v963, %v962
        %v986 = vpack.c.bf16 %v965, %v964
        %v987 = vpack.c.bf16 %v966, %v966
        %s988 = scalar_lea.vmem %s2, 4
        %v989 = vld [vmem:[%s988] sm:$0x3]
        %v991 = vsel %vm392, %v967, 0
        %v994 = vsel %vm392, %v968, 0
        %v997 = vsel %vm392, %v969, 0
        %v1000 = vsel %vm392, %v970, 0
        %v1003 = vsel %vm392, %v971, 0
        %v1006 = vsel %vm392, %v972, 0
        %v1009 = vsel %vm392, %v973, 0
        %v1012 = vsel %vm392, %v974, 0
        %v1015 = vsel %vm392, %v975, 0
        %v1018 = vsel %vm392, %v976, 0
        %v1021 = vsel %vm392, %v977, 0
        %v1024 = vsel %vm392, %v978, 0
        %v1027 = vsel %vm392, %v979, 0
        %v1030 = vsel %vm392, %v980, 0
        %v1033 = vsel %vm392, %v981, 0
        %v1036 = vsel %vm392, %v982, 0
        %v1039 = vsel %vm392, %v983, 0
        %v1042 = vsel %vm392, %v984, 0
        %v1045 = vsel %vm392, %v985, 0
        %v1048 = vsel %vm392, %v986, 0
        %v1051 = vsel %vm392, %v987, 0
        %v1054 = vsel %vm456, %v989, 0
        %1056 = vmatprep.subr.bf16.mxu0 0
        %1057 = vmatpush1.bf16.msra.mxu0 %v1054
        %1058 = vmatprep.subr.bf16.mxu0 0
        %1059 = vmatpush1.bf16.msra.mxu0 0
        %1060 = vmatprep.subr.bf16.mxu0 0
        %1061 = vmatpush1.bf16.msra.mxu0 0
        %1062 = vmatprep.subr.bf16.mxu0 0
        %1063 = vmatpush1.bf16.msra.mxu0 0
        %1064 = vmatprep.subr.bf16.mxu0 0
        %1065 = vmatpush1.bf16.msra.mxu0 0
        %1066 = vmatprep.subr.bf16.mxu0 0
        %1067 = vmatpush1.bf16.msra.mxu0 0
        %1068 = vmatprep.subr.bf16.mxu0 0
        %1069 = vmatpush1.bf16.msra.mxu0 0
        %1070 = vmatprep.subr.bf16.mxu0 0
        %1071 = vmatpush1.bf16.msra.mxu0 0
        %1072 = vmatprep.subr.bf16.mxu0 0
        %1073 = vmatpush1.bf16.msra.mxu0 0
        %1074 = vmatprep.subr.bf16.mxu0 0
        %1075 = vmatpush1.bf16.msra.mxu0 0
        %1076 = vmatprep.subr.bf16.mxu0 0
        %1077 = vmatpush1.bf16.msra.mxu0 0
        %1078 = vmatprep.subr.bf16.mxu0 0
        %1079 = vmatpush1.bf16.msra.mxu0 0
        %1080 = vmatprep.subr.bf16.mxu0 0
        %1081 = vmatpush1.bf16.msra.mxu0 0
        %1082 = vmatprep.subr.bf16.mxu0 0
        %1083 = vmatpush1.bf16.msra.mxu0 0
        %1084 = vmatprep.subr.bf16.mxu0 0
        %1085 = vmatpush1.bf16.msra.mxu0 0
        %1086 = vmatprep.subr.bf16.mxu0 0
        %1087 = vmatpush1.bf16.msra.mxu0 0
        %1088 = vmatprep.mubr.bf16.mxu0 0
        %1089 = vmatmul.mubr.bf16.gmra.mrb[0].mxu0 %v991
        %v1090 = vpop.f32.mrb[0].mxu0
        %v1091 = vadd.f32 0.0, %v1090
        %v1092 = vpop.f32.mrb[0].mxu0
        %v1093 = vpop.f32.mrb[0].mxu0
        %v1094 = vadd.f32 0.0, %v1093
        %v1095 = vpop.f32.mrb[0].mxu0
        %1096 = vmatprep.mubr.bf16.mxu0 0
        %1097 = vmatmul.mubr.bf16.gmra.mrb[0].mxu0 %v994
        %v1098 = vpop.f32.mrb[0].mxu0
        %v1099 = vadd.f32 0.0, %v1098
        %v1100 = vpop.f32.mrb[0].mxu0
        %v1101 = vpop.f32.mrb[0].mxu0
        %v1102 = vadd.f32 0.0, %v1101
        %v1103 = vpop.f32.mrb[0].mxu0
        %1104 = vmatprep.mubr.bf16.mxu0 0
        %1105 = vmatmul.mubr.bf16.gmra.mrb[0].mxu0 %v997
        %v1106 = vpop.f32.mrb[0].mxu0
        %v1107 = vadd.f32 0.0, %v1106
        %v1108 = vpop.f32.mrb[0].mxu0
        %v1109 = vpop.f32.mrb[0].mxu0
        %v1110 = vadd.f32 0.0, %v1109
        %v1111 = vpop.f32.mrb[0].mxu0
        %1112 = vmatprep.mubr.bf16.mxu0 0
        %1113 = vmatmul.mubr.bf16.gmra.mrb[0].mxu0 %v1000
        %v1114 = vpop.f32.mrb[0].mxu0
        %v1115 = vadd.f32 0.0, %v1114
        %v1116 = vpop.f32.mrb[0].mxu0
        %v1117 = vpop.f32.mrb[0].mxu0
        %v1118 = vadd.f32 0.0, %v1117
        %v1119 = vpop.f32.mrb[0].mxu0
        %1120 = vmatprep.mubr.bf16.mxu0 0
        %1121 = vmatmul.mubr.bf16.gmra.mrb[0].mxu0 %v1003
        %v1122 = vpop.f32.mrb[0].mxu0
        %v1123 = vadd.f32 0.0, %v1122
        %v1124 = vpop.f32.mrb[0].mxu0
        %v1125 = vpop.f32.mrb[0].mxu0
        %v1126 = vadd.f32 0.0, %v1125
        %v1127 = vpop.f32.mrb[0].mxu0
        %1128 = vmatprep.mubr.bf16.mxu0 0
        %1129 = vmatmul.mubr.bf16.gmra.mrb[0].mxu0 %v1006
        %v1130 = vpop.f32.mrb[0].mxu0
        %v1131 = vadd.f32 0.0, %v1130
        %v1132 = vpop.f32.mrb[0].mxu0
        %v1133 = vpop.f32.mrb[0].mxu0
        %v1134 = vadd.f32 0.0, %v1133
        %v1135 = vpop.f32.mrb[0].mxu0
        %1136 = vmatprep.mubr.bf16.mxu0 0
        %1137 = vmatmul.mubr.bf16.gmra.mrb[0].mxu0 %v1009
        %v1138 = vpop.f32.mrb[0].mxu0
        %v1139 = vadd.f32 0.0, %v1138
        %v1140 = vpop.f32.mrb[0].mxu0
        %v1141 = vpop.f32.mrb[0].mxu0
        %v1142 = vadd.f32 0.0, %v1141
        %v1143 = vpop.f32.mrb[0].mxu0
        %1144 = vmatprep.mubr.bf16.mxu0 0
        %1145 = vmatmul.mubr.bf16.gmra.mrb[0].mxu0 %v1012
        %v1146 = vpop.f32.mrb[0].mxu0
        %v1147 = vadd.f32 0.0, %v1146
        %v1148 = vpop.f32.mrb[0].mxu0
        %v1149 = vpop.f32.mrb[0].mxu0
        %v1150 = vadd.f32 0.0, %v1149
        %v1151 = vpop.f32.mrb[0].mxu0
        %1152 = vmatprep.mubr.bf16.mxu0 0
        %1153 = vmatmul.mubr.bf16.gmra.mrb[0].mxu0 %v1015
        %v1154 = vpop.f32.mrb[0].mxu0
        %v1155 = vadd.f32 0.0, %v1154
        %v1156 = vpop.f32.mrb[0].mxu0
        %v1157 = vpop.f32.mrb[0].mxu0
        %v1158 = vadd.f32 0.0, %v1157
        %v1159 = vpop.f32.mrb[0].mxu0
        %1160 = vmatprep.mubr.bf16.mxu0 0
        %1161 = vmatmul.mubr.bf16.gmra.mrb[0].mxu0 %v1018
        %v1162 = vpop.f32.mrb[0].mxu0
        %v1163 = vadd.f32 0.0, %v1162
        %v1164 = vpop.f32.mrb[0].mxu0
        %v1165 = vpop.f32.mrb[0].mxu0
        %v1166 = vadd.f32 0.0, %v1165
        %v1167 = vpop.f32.mrb[0].mxu0
        %1168 = vmatprep.mubr.bf16.mxu0 0
        %1169 = vmatmul.mubr.bf16.gmra.mrb[0].mxu0 %v1021
        %v1170 = vpop.f32.mrb[0].mxu0
        %v1171 = vadd.f32 0.0, %v1170
        %v1172 = vpop.f32.mrb[0].mxu0
        %v1173 = vpop.f32.mrb[0].mxu0
        %v1174 = vadd.f32 0.0, %v1173
        %v1175 = vpop.f32.mrb[0].mxu0
        %1176 = vmatprep.mubr.bf16.mxu0 0
        %1177 = vmatmul.mubr.bf16.gmra.mrb[0].mxu0 %v1024
        %v1178 = vpop.f32.mrb[0].mxu0
        %v1179 = vadd.f32 0.0, %v1178
        %v1180 = vpop.f32.mrb[0].mxu0
        %v1181 = vpop.f32.mrb[0].mxu0
        %v1182 = vadd.f32 0.0, %v1181
        %v1183 = vpop.f32.mrb[0].mxu0
        %1184 = vmatprep.mubr.bf16.mxu0 0
        %1185 = vmatmul.mubr.bf16.gmra.mrb[0].mxu0 %v1027
        %v1186 = vpop.f32.mrb[0].mxu0
        %v1187 = vadd.f32 0.0, %v1186
        %v1188 = vpop.f32.mrb[0].mxu0
        %v1189 = vpop.f32.mrb[0].mxu0
        %v1190 = vadd.f32 0.0, %v1189
        %v1191 = vpop.f32.mrb[0].mxu0
        %1192 = vmatprep.mubr.bf16.mxu0 0
        %1193 = vmatmul.mubr.bf16.gmra.mrb[0].mxu0 %v1030
        %v1194 = vpop.f32.mrb[0].mxu0
        %v1195 = vadd.f32 0.0, %v1194
        %v1196 = vpop.f32.mrb[0].mxu0
        %v1197 = vpop.f32.mrb[0].mxu0
        %v1198 = vadd.f32 0.0, %v1197
        %v1199 = vpop.f32.mrb[0].mxu0
        %1200 = vmatprep.mubr.bf16.mxu0 0
        %1201 = vmatmul.mubr.bf16.gmra.mrb[0].mxu0 %v1033
        %v1202 = vpop.f32.mrb[0].mxu0
        %v1203 = vadd.f32 0.0, %v1202
        %v1204 = vpop.f32.mrb[0].mxu0
        %v1205 = vpop.f32.mrb[0].mxu0
        %v1206 = vadd.f32 0.0, %v1205
        %v1207 = vpop.f32.mrb[0].mxu0
        %1208 = vmatprep.mubr.bf16.mxu0 0
        %1209 = vmatmul.mubr.bf16.gmra.mrb[0].mxu0 %v1036
        %v1210 = vpop.f32.mrb[0].mxu0
        %v1211 = vadd.f32 0.0, %v1210
        %v1212 = vpop.f32.mrb[0].mxu0
        %v1213 = vpop.f32.mrb[0].mxu0
        %v1214 = vadd.f32 0.0, %v1213
        %v1215 = vpop.f32.mrb[0].mxu0
        %1216 = vmatprep.mubr.bf16.mxu0 0
        %1217 = vmatmul.mubr.bf16.gmra.mrb[0].mxu0 %v1039
        %v1218 = vpop.f32.mrb[0].mxu0
        %v1219 = vadd.f32 0.0, %v1218
        %v1220 = vpop.f32.mrb[0].mxu0
        %v1221 = vpop.f32.mrb[0].mxu0
        %v1222 = vadd.f32 0.0, %v1221
        %v1223 = vpop.f32.mrb[0].mxu0
        %1224 = vmatprep.mubr.bf16.mxu0 0
        %1225 = vmatmul.mubr.bf16.gmra.mrb[0].mxu0 %v1042
        %v1226 = vpop.f32.mrb[0].mxu0
        %v1227 = vadd.f32 0.0, %v1226
        %v1228 = vpop.f32.mrb[0].mxu0
        %v1229 = vpop.f32.mrb[0].mxu0
        %v1230 = vadd.f32 0.0, %v1229
        %v1231 = vpop.f32.mrb[0].mxu0
        %1232 = vmatprep.mubr.bf16.mxu0 0
        %1233 = vmatmul.mubr.bf16.gmra.mrb[0].mxu0 %v1045
        %v1234 = vpop.f32.mrb[0].mxu0
        %v1235 = vadd.f32 0.0, %v1234
        %v1236 = vpop.f32.mrb[0].mxu0
        %v1237 = vpop.f32.mrb[0].mxu0
        %v1238 = vadd.f32 0.0, %v1237
        %v1239 = vpop.f32.mrb[0].mxu0
        %1240 = vmatprep.mubr.bf16.mxu0 0
        %1241 = vmatmul.mubr.bf16.gmra.mrb[0].mxu0 %v1048
        %v1242 = vpop.f32.mrb[0].mxu0
        %v1243 = vadd.f32 0.0, %v1242
        %v1244 = vpop.f32.mrb[0].mxu0
        %v1245 = vpop.f32.mrb[0].mxu0
        %v1246 = vadd.f32 0.0, %v1245
        %v1247 = vpop.f32.mrb[0].mxu0
        %1248 = vmatprep.mubr.bf16.mxu0 0
        %1249 = vmatmul.mubr.bf16.gmra.mrb[0].mxu0 %v1051
        %v1250 = vpop.f32.mrb[0].mxu0
        %v1251 = vadd.f32 0.0, %v1250
        %v1252 = vpop.f32.mrb[0].mxu0
        %v1253 = vpop.f32.mrb[0].mxu0
        %v1254 = vpop.f32.mrb[0].mxu0
        %1255 = vdwg.mxu0
        %v1256 = vadd.f32 %v761, %v1091
        %v1257 = vadd.f32 %v764, %v1094
        %v1258 = vadd.f32 %v769, %v1099
        %v1259 = vadd.f32 %v772, %v1102
        %v1260 = vadd.f32 %v777, %v1107
        %v1261 = vadd.f32 %v780, %v1110
        %v1262 = vadd.f32 %v785, %v1115
        %v1263 = vadd.f32 %v788, %v1118
        %v1264 = vadd.f32 %v793, %v1123
        %v1265 = vadd.f32 %v796, %v1126
        %v1266 = vadd.f32 %v801, %v1131
        %v1267 = vadd.f32 %v804, %v1134
        %v1268 = vadd.f32 %v809, %v1139
        %v1269 = vadd.f32 %v812, %v1142
        %v1270 = vadd.f32 %v817, %v1147
        %v1271 = vadd.f32 %v820, %v1150
        %v1272 = vadd.f32 %v825, %v1155
        %v1273 = vadd.f32 %v828, %v1158
        %v1274 = vadd.f32 %v833, %v1163
        %v1275 = vadd.f32 %v836, %v1166
        %v1276 = vadd.f32 %v841, %v1171
        %v1277 = vadd.f32 %v844, %v1174
        %v1278 = vadd.f32 %v849, %v1179
        %v1279 = vadd.f32 %v852, %v1182
        %v1280 = vadd.f32 %v857, %v1187
        %v1281 = vadd.f32 %v860, %v1190
        %v1282 = vadd.f32 %v865, %v1195
        %v1283 = vadd.f32 %v868, %v1198
        %v1284 = vadd.f32 %v873, %v1203
        %v1285 = vadd.f32 %v876, %v1206
        %v1286 = vadd.f32 %v881, %v1211
        %v1287 = vadd.f32 %v884, %v1214
        %v1288 = vadd.f32 %v889, %v1219
        %v1289 = vadd.f32 %v892, %v1222
        %v1290 = vadd.f32 %v897, %v1227
        %v1291 = vadd.f32 %v900, %v1230
        %v1292 = vadd.f32 %v905, %v1235
        %v1293 = vadd.f32 %v908, %v1238
        %v1294 = vadd.f32 %v913, %v1243
        %v1295 = vadd.f32 %v916, %v1246
        %v1296 = vadd.f32 %v921, %v1251
        %v1297 = vld [vmem:[%s252 + $0x12] sm:$0xff]
        %v1298 = vld [vmem:[%s252 + $0x1a] sm:$0xff]
        %v1299 = vld [vmem:[%s252 + $0x22] sm:$0xff]
        %v1300 = vld [vmem:[%s252 + $0x2a] sm:$0xff]
        %v1301 = vld [vmem:[%s252 + $0x32] sm:$0xff]
        %v1302 = vld [vmem:[%s252 + $0x3a] sm:$0xff]
        %v1303 = vld [vmem:[%s252 + $0x42] sm:$0xff]
        %v1304 = vld [vmem:[%s252 + $0x4a] sm:$0xff]
        %v1305 = vld [vmem:[%s252 + $0x52] sm:$0xff]
        %v1306 = vld [vmem:[%s252 + $0x5a] sm:$0xff]
        %v1307 = vld [vmem:[%s252 + $0x62] sm:$0xff]
        %v1308 = vld [vmem:[%s252 + $0x6a] sm:$0xff]
        %v1309 = vld [vmem:[%s252 + $0x72] sm:$0xff]
        %v1310 = vld [vmem:[%s252 + $0x7a] sm:$0xff]
        %v1311 = vld [vmem:[%s252 + $0x82] sm:$0xff]
        %v1312 = vld [vmem:[%s252 + $0x8a] sm:$0xff]
        %v1313 = vld [vmem:[%s252 + $0x92] sm:$0xff]
        %v1314 = vld [vmem:[%s252 + $0x9a] sm:$0xff]
        %v1315 = vld [vmem:[%s252 + $0xa2] sm:$0xff]
        %v1316 = vld [vmem:[%s252 + $0xaa] sm:$0xff]
        %v1317 = vld [vmem:[%s252 + $0xb2] sm:$0xff]
        %v1318 = vld [vmem:[%s252 + $0xba] sm:$0xff]
        %v1319 = vld [vmem:[%s252 + $0xc2] sm:$0xff]
        %v1320 = vld [vmem:[%s252 + $0xca] sm:$0xff]
        %v1321 = vld [vmem:[%s252 + $0xd2] sm:$0xff]
        %v1322 = vld [vmem:[%s252 + $0xda] sm:$0xff]
        %v1323 = vld [vmem:[%s252 + $0xe2] sm:$0xff]
        %v1324 = vld [vmem:[%s252 + $0xea] sm:$0xff]
        %v1325 = vld [vmem:[%s252 + $0xf2] sm:$0xff]
        %v1326 = vld [vmem:[%s252 + $0xfa] sm:$0xff]
        %v1327 = vld [vmem:[%s252 + $0x102] sm:$0xff]
        %v1328 = vld [vmem:[%s252 + $0x10a] sm:$0xff]
        %v1329 = vld [vmem:[%s252 + $0x112] sm:$0xff]
        %v1330 = vld [vmem:[%s252 + $0x11a] sm:$0xff]
        %v1331 = vld [vmem:[%s252 + $0x122] sm:$0xff]
        %v1332 = vld [vmem:[%s252 + $0x12a] sm:$0xff]
        %v1333 = vld [vmem:[%s252 + $0x132] sm:$0xff]
        %v1334 = vld [vmem:[%s252 + $0x13a] sm:$0xff]
        %v1335 = vld [vmem:[%s252 + $0x142] sm:$0xff]
        %v1336 = vld [vmem:[%s252 + $0x14a] sm:$0xff]
        %v1337 = vld [vmem:[%s252 + $0x152] sm:$0xf]
        %v1338 = vpack.c.bf16 %v1298, %v1297
        %v1339 = vpack.c.bf16 %v1300, %v1299
        %v1340 = vpack.c.bf16 %v1302, %v1301
        %v1341 = vpack.c.bf16 %v1304, %v1303
        %v1342 = vpack.c.bf16 %v1306, %v1305
        %v1343 = vpack.c.bf16 %v1308, %v1307
        %v1344 = vpack.c.bf16 %v1310, %v1309
        %v1345 = vpack.c.bf16 %v1312, %v1311
        %v1346 = vpack.c.bf16 %v1314, %v1313
        %v1347 = vpack.c.bf16 %v1316, %v1315
        %v1348 = vpack.c.bf16 %v1318, %v1317
        %v1349 = vpack.c.bf16 %v1320, %v1319
        %v1350 = vpack.c.bf16 %v1322, %v1321
        %v1351 = vpack.c.bf16 %v1324, %v1323
        %v1352 = vpack.c.bf16 %v1326, %v1325
        %v1353 = vpack.c.bf16 %v1328, %v1327
        %v1354 = vpack.c.bf16 %v1330, %v1329
        %v1355 = vpack.c.bf16 %v1332, %v1331
        %v1356 = vpack.c.bf16 %v1334, %v1333
        %v1357 = vpack.c.bf16 %v1336, %v1335
        %v1358 = vpack.c.bf16 %v1337, %v1337
        %s1359 = scalar_lea.vmem %s2, 6
        %v1360 = vld [vmem:[%s1359] sm:$0x3]
        %v1362 = vsel %vm392, %v1338, 0
        %v1365 = vsel %vm392, %v1339, 0
        %v1368 = vsel %vm392, %v1340, 0
        %v1371 = vsel %vm392, %v1341, 0
        %v1374 = vsel %vm392, %v1342, 0
        %v1377 = vsel %vm392, %v1343, 0
        %v1380 = vsel %vm392, %v1344, 0
        %v1383 = vsel %vm392, %v1345, 0
        %v1386 = vsel %vm392, %v1346, 0
        %v1389 = vsel %vm392, %v1347, 0
        %v1392 = vsel %vm392, %v1348, 0
        %v1395 = vsel %vm392, %v1349, 0
        %v1398 = vsel %vm392, %v1350, 0
        %v1401 = vsel %vm392, %v1351, 0
        %v1404 = vsel %vm392, %v1352, 0
        %v1407 = vsel %vm392, %v1353, 0
        %v1410 = vsel %vm392, %v1354, 0
        %v1413 = vsel %vm392, %v1355, 0
        %v1416 = vsel %vm392, %v1356, 0
        %v1419 = vsel %vm392, %v1357, 0
        %v1422 = vsel %vm392, %v1358, 0
        %v1425 = vsel %vm456, %v1360, 0
        %1427 = vmatprep.subr.bf16.mxu0 0
        %1428 = vmatpush1.bf16.msra.mxu0 %v1425
        %1429 = vmatprep.subr.bf16.mxu0 0
        %1430 = vmatpush1.bf16.msra.mxu0 0
        %1431 = vmatprep.subr.bf16.mxu0 0
        %1432 = vmatpush1.bf16.msra.mxu0 0
        %1433 = vmatprep.subr.bf16.mxu0 0
        %1434 = vmatpush1.bf16.msra.mxu0 0
        %1435 = vmatprep.subr.bf16.mxu0 0
        %1436 = vmatpush1.bf16.msra.mxu0 0
        %1437 = vmatprep.subr.bf16.mxu0 0
        %1438 = vmatpush1.bf16.msra.mxu0 0
        %1439 = vmatprep.subr.bf16.mxu0 0
        %1440 = vmatpush1.bf16.msra.mxu0 0
        %1441 = vmatprep.subr.bf16.mxu0 0
        %1442 = vmatpush1.bf16.msra.mxu0 0
        %1443 = vmatprep.subr.bf16.mxu0 0
        %1444 = vmatpush1.bf16.msra.mxu0 0
        %1445 = vmatprep.subr.bf16.mxu0 0
        %1446 = vmatpush1.bf16.msra.mxu0 0
        %1447 = vmatprep.subr.bf16.mxu0 0
        %1448 = vmatpush1.bf16.msra.mxu0 0
        %1449 = vmatprep.subr.bf16.mxu0 0
        %1450 = vmatpush1.bf16.msra.mxu0 0
        %1451 = vmatprep.subr.bf16.mxu0 0
        %1452 = vmatpush1.bf16.msra.mxu0 0
        %1453 = vmatprep.subr.bf16.mxu0 0
        %1454 = vmatpush1.bf16.msra.mxu0 0
        %1455 = vmatprep.subr.bf16.mxu0 0
        %1456 = vmatpush1.bf16.msra.mxu0 0
        %1457 = vmatprep.subr.bf16.mxu0 0
        %1458 = vmatpush1.bf16.msra.mxu0 0
        %1459 = vmatprep.mubr.bf16.mxu0 0
        %1460 = vmatmul.mubr.bf16.gmra.mrb[0].mxu0 %v1362
        %v1461 = vpop.f32.mrb[0].mxu0
        %v1462 = vadd.f32 0.0, %v1461
        %v1463 = vpop.f32.mrb[0].mxu0
        %v1464 = vpop.f32.mrb[0].mxu0
        %v1465 = vadd.f32 0.0, %v1464
        %v1466 = vpop.f32.mrb[0].mxu0
        %1467 = vmatprep.mubr.bf16.mxu0 0
        %1468 = vmatmul.mubr.bf16.gmra.mrb[0].mxu0 %v1365
        %v1469 = vpop.f32.mrb[0].mxu0
        %v1470 = vadd.f32 0.0, %v1469
        %v1471 = vpop.f32.mrb[0].mxu0
        %v1472 = vpop.f32.mrb[0].mxu0
        %v1473 = vadd.f32 0.0, %v1472
        %v1474 = vpop.f32.mrb[0].mxu0
        %1475 = vmatprep.mubr.bf16.mxu0 0
        %1476 = vmatmul.mubr.bf16.gmra.mrb[0].mxu0 %v1368
        %v1477 = vpop.f32.mrb[0].mxu0
        %v1478 = vadd.f32 0.0, %v1477
        %v1479 = vpop.f32.mrb[0].mxu0
        %v1480 = vpop.f32.mrb[0].mxu0
        %v1481 = vadd.f32 0.0, %v1480
        %v1482 = vpop.f32.mrb[0].mxu0
        %1483 = vmatprep.mubr.bf16.mxu0 0
        %1484 = vmatmul.mubr.bf16.gmra.mrb[0].mxu0 %v1371
        %v1485 = vpop.f32.mrb[0].mxu0
        %v1486 = vadd.f32 0.0, %v1485
        %v1487 = vpop.f32.mrb[0].mxu0
        %v1488 = vpop.f32.mrb[0].mxu0
        %v1489 = vadd.f32 0.0, %v1488
        %v1490 = vpop.f32.mrb[0].mxu0
        %1491 = vmatprep.mubr.bf16.mxu0 0
        %1492 = vmatmul.mubr.bf16.gmra.mrb[0].mxu0 %v1374
        %v1493 = vpop.f32.mrb[0].mxu0
        %v1494 = vadd.f32 0.0, %v1493
        %v1495 = vpop.f32.mrb[0].mxu0
        %v1496 = vpop.f32.mrb[0].mxu0
        %v1497 = vadd.f32 0.0, %v1496
        %v1498 = vpop.f32.mrb[0].mxu0
        %1499 = vmatprep.mubr.bf16.mxu0 0
        %1500 = vmatmul.mubr.bf16.gmra.mrb[0].mxu0 %v1377
        %v1501 = vpop.f32.mrb[0].mxu0
        %v1502 = vadd.f32 0.0, %v1501
        %v1503 = vpop.f32.mrb[0].mxu0
        %v1504 = vpop.f32.mrb[0].mxu0
        %v1505 = vadd.f32 0.0, %v1504
        %v1506 = vpop.f32.mrb[0].mxu0
        %1507 = vmatprep.mubr.bf16.mxu0 0
        %1508 = vmatmul.mubr.bf16.gmra.mrb[0].mxu0 %v1380
        %v1509 = vpop.f32.mrb[0].mxu0
        %v1510 = vadd.f32 0.0, %v1509
        %v1511 = vpop.f32.mrb[0].mxu0
        %v1512 = vpop.f32.mrb[0].mxu0
        %v1513 = vadd.f32 0.0, %v1512
        %v1514 = vpop.f32.mrb[0].mxu0
        %1515 = vmatprep.mubr.bf16.mxu0 0
        %1516 = vmatmul.mubr.bf16.gmra.mrb[0].mxu0 %v1383
        %v1517 = vpop.f32.mrb[0].mxu0
        %v1518 = vadd.f32 0.0, %v1517
        %v1519 = vpop.f32.mrb[0].mxu0
        %v1520 = vpop.f32.mrb[0].mxu0
        %v1521 = vadd.f32 0.0, %v1520
        %v1522 = vpop.f32.mrb[0].mxu0
        %1523 = vmatprep.mubr.bf16.mxu0 0
        %1524 = vmatmul.mubr.bf16.gmra.mrb[0].mxu0 %v1386
        %v1525 = vpop.f32.mrb[0].mxu0
        %v1526 = vadd.f32 0.0, %v1525
        %v1527 = vpop.f32.mrb[0].mxu0
        %v1528 = vpop.f32.mrb[0].mxu0
        %v1529 = vadd.f32 0.0, %v1528
        %v1530 = vpop.f32.mrb[0].mxu0
        %1531 = vmatprep.mubr.bf16.mxu0 0
        %1532 = vmatmul.mubr.bf16.gmra.mrb[0].mxu0 %v1389
        %v1533 = vpop.f32.mrb[0].mxu0
        %v1534 = vadd.f32 0.0, %v1533
        %v1535 = vpop.f32.mrb[0].mxu0
        %v1536 = vpop.f32.mrb[0].mxu0
        %v1537 = vadd.f32 0.0, %v1536
        %v1538 = vpop.f32.mrb[0].mxu0
        %1539 = vmatprep.mubr.bf16.mxu0 0
        %1540 = vmatmul.mubr.bf16.gmra.mrb[0].mxu0 %v1392
        %v1541 = vpop.f32.mrb[0].mxu0
        %v1542 = vadd.f32 0.0, %v1541
        %v1543 = vpop.f32.mrb[0].mxu0
        %v1544 = vpop.f32.mrb[0].mxu0
        %v1545 = vadd.f32 0.0, %v1544
        %v1546 = vpop.f32.mrb[0].mxu0
        %1547 = vmatprep.mubr.bf16.mxu0 0
        %1548 = vmatmul.mubr.bf16.gmra.mrb[0].mxu0 %v1395
        %v1549 = vpop.f32.mrb[0].mxu0
        %v1550 = vadd.f32 0.0, %v1549
        %v1551 = vpop.f32.mrb[0].mxu0
        %v1552 = vpop.f32.mrb[0].mxu0
        %v1553 = vadd.f32 0.0, %v1552
        %v1554 = vpop.f32.mrb[0].mxu0
        %1555 = vmatprep.mubr.bf16.mxu0 0
        %1556 = vmatmul.mubr.bf16.gmra.mrb[0].mxu0 %v1398
        %v1557 = vpop.f32.mrb[0].mxu0
        %v1558 = vadd.f32 0.0, %v1557
        %v1559 = vpop.f32.mrb[0].mxu0
        %v1560 = vpop.f32.mrb[0].mxu0
        %v1561 = vadd.f32 0.0, %v1560
        %v1562 = vpop.f32.mrb[0].mxu0
        %1563 = vmatprep.mubr.bf16.mxu0 0
        %1564 = vmatmul.mubr.bf16.gmra.mrb[0].mxu0 %v1401
        %v1565 = vpop.f32.mrb[0].mxu0
        %v1566 = vadd.f32 0.0, %v1565
        %v1567 = vpop.f32.mrb[0].mxu0
        %v1568 = vpop.f32.mrb[0].mxu0
        %v1569 = vadd.f32 0.0, %v1568
        %v1570 = vpop.f32.mrb[0].mxu0
        %1571 = vmatprep.mubr.bf16.mxu0 0
        %1572 = vmatmul.mubr.bf16.gmra.mrb[0].mxu0 %v1404
        %v1573 = vpop.f32.mrb[0].mxu0
        %v1574 = vadd.f32 0.0, %v1573
        %v1575 = vpop.f32.mrb[0].mxu0
        %v1576 = vpop.f32.mrb[0].mxu0
        %v1577 = vadd.f32 0.0, %v1576
        %v1578 = vpop.f32.mrb[0].mxu0
        %1579 = vmatprep.mubr.bf16.mxu0 0
        %1580 = vmatmul.mubr.bf16.gmra.mrb[0].mxu0 %v1407
        %v1581 = vpop.f32.mrb[0].mxu0
        %v1582 = vadd.f32 0.0, %v1581
        %v1583 = vpop.f32.mrb[0].mxu0
        %v1584 = vpop.f32.mrb[0].mxu0
        %v1585 = vadd.f32 0.0, %v1584
        %v1586 = vpop.f32.mrb[0].mxu0
        %1587 = vmatprep.mubr.bf16.mxu0 0
        %1588 = vmatmul.mubr.bf16.gmra.mrb[0].mxu0 %v1410
        %v1589 = vpop.f32.mrb[0].mxu0
        %v1590 = vadd.f32 0.0, %v1589
        %v1591 = vpop.f32.mrb[0].mxu0
        %v1592 = vpop.f32.mrb[0].mxu0
        %v1593 = vadd.f32 0.0, %v1592
        %v1594 = vpop.f32.mrb[0].mxu0
        %1595 = vmatprep.mubr.bf16.mxu0 0
        %1596 = vmatmul.mubr.bf16.gmra.mrb[0].mxu0 %v1413
        %v1597 = vpop.f32.mrb[0].mxu0
        %v1598 = vadd.f32 0.0, %v1597
        %v1599 = vpop.f32.mrb[0].mxu0
        %v1600 = vpop.f32.mrb[0].mxu0
        %v1601 = vadd.f32 0.0, %v1600
        %v1602 = vpop.f32.mrb[0].mxu0
        %1603 = vmatprep.mubr.bf16.mxu0 0
        %1604 = vmatmul.mubr.bf16.gmra.mrb[0].mxu0 %v1416
        %v1605 = vpop.f32.mrb[0].mxu0
        %v1606 = vadd.f32 0.0, %v1605
        %v1607 = vpop.f32.mrb[0].mxu0
        %v1608 = vpop.f32.mrb[0].mxu0
        %v1609 = vadd.f32 0.0, %v1608
        %v1610 = vpop.f32.mrb[0].mxu0
        %1611 = vmatprep.mubr.bf16.mxu0 0
        %1612 = vmatmul.mubr.bf16.gmra.mrb[0].mxu0 %v1419
        %v1613 = vpop.f32.mrb[0].mxu0
        %v1614 = vadd.f32 0.0, %v1613
        %v1615 = vpop.f32.mrb[0].mxu0
        %v1616 = vpop.f32.mrb[0].mxu0
        %v1617 = vadd.f32 0.0, %v1616
        %v1618 = vpop.f32.mrb[0].mxu0
        %1619 = vmatprep.mubr.bf16.mxu0 0
        %1620 = vmatmul.mubr.bf16.gmra.mrb[0].mxu0 %v1422
        %v1621 = vpop.f32.mrb[0].mxu0
        %v1622 = vadd.f32 0.0, %v1621
        %v1623 = vpop.f32.mrb[0].mxu0
        %v1624 = vpop.f32.mrb[0].mxu0
        %v1625 = vpop.f32.mrb[0].mxu0
        %1626 = vdwg.mxu0
        %v1627 = vadd.f32 %v1256, %v1462
        %v1628 = vadd.f32 %v1257, %v1465
        %v1629 = vadd.f32 %v1258, %v1470
        %v1630 = vadd.f32 %v1259, %v1473
        %v1631 = vadd.f32 %v1260, %v1478
        %v1632 = vadd.f32 %v1261, %v1481
        %v1633 = vadd.f32 %v1262, %v1486
        %v1634 = vadd.f32 %v1263, %v1489
        %v1635 = vadd.f32 %v1264, %v1494
        %v1636 = vadd.f32 %v1265, %v1497
        %v1637 = vadd.f32 %v1266, %v1502
        %v1638 = vadd.f32 %v1267, %v1505
        %v1639 = vadd.f32 %v1268, %v1510
        %v1640 = vadd.f32 %v1269, %v1513
        %v1641 = vadd.f32 %v1270, %v1518
        %v1642 = vadd.f32 %v1271, %v1521
        %v1643 = vadd.f32 %v1272, %v1526
        %v1644 = vadd.f32 %v1273, %v1529
        %v1645 = vadd.f32 %v1274, %v1534
        %v1646 = vadd.f32 %v1275, %v1537
        %v1647 = vadd.f32 %v1276, %v1542
        %v1648 = vadd.f32 %v1277, %v1545
        %v1649 = vadd.f32 %v1278, %v1550
        %v1650 = vadd.f32 %v1279, %v1553
        %v1651 = vadd.f32 %v1280, %v1558
        %v1652 = vadd.f32 %v1281, %v1561
        %v1653 = vadd.f32 %v1282, %v1566
        %v1654 = vadd.f32 %v1283, %v1569
        %v1655 = vadd.f32 %v1284, %v1574
        %v1656 = vadd.f32 %v1285, %v1577
        %v1657 = vadd.f32 %v1286, %v1582
        %v1658 = vadd.f32 %v1287, %v1585
        %v1659 = vadd.f32 %v1288, %v1590
        %v1660 = vadd.f32 %v1289, %v1593
        %v1661 = vadd.f32 %v1290, %v1598
        %v1662 = vadd.f32 %v1291, %v1601
        %v1663 = vadd.f32 %v1292, %v1606
        %v1664 = vadd.f32 %v1293, %v1609
        %v1665 = vadd.f32 %v1294, %v1614
        %v1666 = vadd.f32 %v1295, %v1617
        %v1667 = vadd.f32 %v1296, %v1622
        %v1668 = vld [vmem:[%s252 + $0x13] sm:$0xff]
        %v1669 = vld [vmem:[%s252 + $0x1b] sm:$0xff]
        %v1670 = vld [vmem:[%s252 + $0x23] sm:$0xff]
        %v1671 = vld [vmem:[%s252 + $0x2b] sm:$0xff]
        %v1672 = vld [vmem:[%s252 + $0x33] sm:$0xff]
        %v1673 = vld [vmem:[%s252 + $0x3b] sm:$0xff]
        %v1674 = vld [vmem:[%s252 + $0x43] sm:$0xff]
        %v1675 = vld [vmem:[%s252 + $0x4b] sm:$0xff]
        %v1676 = vld [vmem:[%s252 + $0x53] sm:$0xff]
        %v1677 = vld [vmem:[%s252 + $0x5b] sm:$0xff]
        %v1678 = vld [vmem:[%s252 + $0x63] sm:$0xff]
        %v1679 = vld [vmem:[%s252 + $0x6b] sm:$0xff]
        %v1680 = vld [vmem:[%s252 + $0x73] sm:$0xff]
        %v1681 = vld [vmem:[%s252 + $0x7b] sm:$0xff]
        %v1682 = vld [vmem:[%s252 + $0x83] sm:$0xff]
        %v1683 = vld [vmem:[%s252 + $0x8b] sm:$0xff]
        %v1684 = vld [vmem:[%s252 + $0x93] sm:$0xff]
        %v1685 = vld [vmem:[%s252 + $0x9b] sm:$0xff]
        %v1686 = vld [vmem:[%s252 + $0xa3] sm:$0xff]
        %v1687 = vld [vmem:[%s252 + $0xab] sm:$0xff]
        %v1688 = vld [vmem:[%s252 + $0xb3] sm:$0xff]
        %v1689 = vld [vmem:[%s252 + $0xbb] sm:$0xff]
        %v1690 = vld [vmem:[%s252 + $0xc3] sm:$0xff]
        %v1691 = vld [vmem:[%s252 + $0xcb] sm:$0xff]
        %v1692 = vld [vmem:[%s252 + $0xd3] sm:$0xff]
        %v1693 = vld [vmem:[%s252 + $0xdb] sm:$0xff]
        %v1694 = vld [vmem:[%s252 + $0xe3] sm:$0xff]
        %v1695 = vld [vmem:[%s252 + $0xeb] sm:$0xff]
        %v1696 = vld [vmem:[%s252 + $0xf3] sm:$0xff]
        %v1697 = vld [vmem:[%s252 + $0xfb] sm:$0xff]
        %v1698 = vld [vmem:[%s252 + $0x103] sm:$0xff]
        %v1699 = vld [vmem:[%s252 + $0x10b] sm:$0xff]
        %v1700 = vld [vmem:[%s252 + $0x113] sm:$0xff]
        %v1701 = vld [vmem:[%s252 + $0x11b] sm:$0xff]
        %v1702 = vld [vmem:[%s252 + $0x123] sm:$0xff]
        %v1703 = vld [vmem:[%s252 + $0x12b] sm:$0xff]
        %v1704 = vld [vmem:[%s252 + $0x133] sm:$0xff]
        %v1705 = vld [vmem:[%s252 + $0x13b] sm:$0xff]
        %v1706 = vld [vmem:[%s252 + $0x143] sm:$0xff]
        %v1707 = vld [vmem:[%s252 + $0x14b] sm:$0xff]
        %v1708 = vld [vmem:[%s252 + $0x153] sm:$0xf]
        %v1709 = vpack.c.bf16 %v1669, %v1668
        %v1710 = vpack.c.bf16 %v1671, %v1670
        %v1711 = vpack.c.bf16 %v1673, %v1672
        %v1712 = vpack.c.bf16 %v1675, %v1674
        %v1713 = vpack.c.bf16 %v1677, %v1676
        %v1714 = vpack.c.bf16 %v1679, %v1678
        %v1715 = vpack.c.bf16 %v1681, %v1680
        %v1716 = vpack.c.bf16 %v1683, %v1682
        %v1717 = vpack.c.bf16 %v1685, %v1684
        %v1718 = vpack.c.bf16 %v1687, %v1686
        %v1719 = vpack.c.bf16 %v1689, %v1688
        %v1720 = vpack.c.bf16 %v1691, %v1690
        %v1721 = vpack.c.bf16 %v1693, %v1692
        %v1722 = vpack.c.bf16 %v1695, %v1694
        %v1723 = vpack.c.bf16 %v1697, %v1696
        %v1724 = vpack.c.bf16 %v1699, %v1698
        %v1725 = vpack.c.bf16 %v1701, %v1700
        %v1726 = vpack.c.bf16 %v1703, %v1702
        %v1727 = vpack.c.bf16 %v1705, %v1704
        %v1728 = vpack.c.bf16 %v1707, %v1706
        %v1729 = vpack.c.bf16 %v1708, %v1708
        %s1730 = scalar_lea.vmem %s2, 8
        %v1731 = vld [vmem:[%s1730] sm:$0x3]
        %v1733 = vsel %vm392, %v1709, 0
        %v1736 = vsel %vm392, %v1710, 0
        %v1739 = vsel %vm392, %v1711, 0
        %v1742 = vsel %vm392, %v1712, 0
        %v1745 = vsel %vm392, %v1713, 0
        %v1748 = vsel %vm392, %v1714, 0
        %v1751 = vsel %vm392, %v1715, 0
        %v1754 = vsel %vm392, %v1716, 0
        %v1757 = vsel %vm392, %v1717, 0
        %v1760 = vsel %vm392, %v1718, 0
        %v1763 = vsel %vm392, %v1719, 0
        %v1766 = vsel %vm392, %v1720, 0
        %v1769 = vsel %vm392, %v1721, 0
        %v1772 = vsel %vm392, %v1722, 0
        %v1775 = vsel %vm392, %v1723, 0
        %v1778 = vsel %vm392, %v1724, 0
        %v1781 = vsel %vm392, %v1725, 0
        %v1784 = vsel %vm392, %v1726, 0
        %v1787 = vsel %vm392, %v1727, 0
        %v1790 = vsel %vm392, %v1728, 0
        %v1793 = vsel %vm392, %v1729, 0
        %v1796 = vsel %vm456, %v1731, 0
        %1798 = vmatprep.subr.bf16.mxu0 0
        %1799 = vmatpush1.bf16.msra.mxu0 %v1796
        %1800 = vmatprep.subr.bf16.mxu0 0
        %1801 = vmatpush1.bf16.msra.mxu0 0
        %1802 = vmatprep.subr.bf16.mxu0 0
        %1803 = vmatpush1.bf16.msra.mxu0 0
        %1804 = vmatprep.subr.bf16.mxu0 0
        %1805 = vmatpush1.bf16.msra.mxu0 0
        %1806 = vmatprep.subr.bf16.mxu0 0
        %1807 = vmatpush1.bf16.msra.mxu0 0
        %1808 = vmatprep.subr.bf16.mxu0 0
        %1809 = vmatpush1.bf16.msra.mxu0 0
        %1810 = vmatprep.subr.bf16.mxu0 0
        %1811 = vmatpush1.bf16.msra.mxu0 0
        %1812 = vmatprep.subr.bf16.mxu0 0
        %1813 = vmatpush1.bf16.msra.mxu0 0
        %1814 = vmatprep.subr.bf16.mxu0 0
        %1815 = vmatpush1.bf16.msra.mxu0 0
        %1816 = vmatprep.subr.bf16.mxu0 0
        %1817 = vmatpush1.bf16.msra.mxu0 0
        %1818 = vmatprep.subr.bf16.mxu0 0
        %1819 = vmatpush1.bf16.msra.mxu0 0
        %1820 = vmatprep.subr.bf16.mxu0 0
        %1821 = vmatpush1.bf16.msra.mxu0 0
        %1822 = vmatprep.subr.bf16.mxu0 0
        %1823 = vmatpush1.bf16.msra.mxu0 0
        %1824 = vmatprep.subr.bf16.mxu0 0
        %1825 = vmatpush1.bf16.msra.mxu0 0
        %1826 = vmatprep.subr.bf16.mxu0 0
        %1827 = vmatpush1.bf16.msra.mxu0 0
        %1828 = vmatprep.subr.bf16.mxu0 0
        %1829 = vmatpush1.bf16.msra.mxu0 0
        %1830 = vmatprep.mubr.bf16.mxu0 0
        %1831 = vmatmul.mubr.bf16.gmra.mrb[0].mxu0 %v1733
        %v1832 = vpop.f32.mrb[0].mxu0
        %v1833 = vadd.f32 0.0, %v1832
        %v1834 = vpop.f32.mrb[0].mxu0
        %v1835 = vpop.f32.mrb[0].mxu0
        %v1836 = vadd.f32 0.0, %v1835
        %v1837 = vpop.f32.mrb[0].mxu0
        %1838 = vmatprep.mubr.bf16.mxu0 0
        %1839 = vmatmul.mubr.bf16.gmra.mrb[0].mxu0 %v1736
        %v1840 = vpop.f32.mrb[0].mxu0
        %v1841 = vadd.f32 0.0, %v1840
        %v1842 = vpop.f32.mrb[0].mxu0
        %v1843 = vpop.f32.mrb[0].mxu0
        %v1844 = vadd.f32 0.0, %v1843
        %v1845 = vpop.f32.mrb[0].mxu0
        %1846 = vmatprep.mubr.bf16.mxu0 0
        %1847 = vmatmul.mubr.bf16.gmra.mrb[0].mxu0 %v1739
        %v1848 = vpop.f32.mrb[0].mxu0
        %v1849 = vadd.f32 0.0, %v1848
        %v1850 = vpop.f32.mrb[0].mxu0
        %v1851 = vpop.f32.mrb[0].mxu0
        %v1852 = vadd.f32 0.0, %v1851
        %v1853 = vpop.f32.mrb[0].mxu0
        %1854 = vmatprep.mubr.bf16.mxu0 0
        %1855 = vmatmul.mubr.bf16.gmra.mrb[0].mxu0 %v1742
        %v1856 = vpop.f32.mrb[0].mxu0
        %v1857 = vadd.f32 0.0, %v1856
        %v1858 = vpop.f32.mrb[0].mxu0
        %v1859 = vpop.f32.mrb[0].mxu0
        %v1860 = vadd.f32 0.0, %v1859
        %v1861 = vpop.f32.mrb[0].mxu0
        %1862 = vmatprep.mubr.bf16.mxu0 0
        %1863 = vmatmul.mubr.bf16.gmra.mrb[0].mxu0 %v1745
        %v1864 = vpop.f32.mrb[0].mxu0
        %v1865 = vadd.f32 0.0, %v1864
        %v1866 = vpop.f32.mrb[0].mxu0
        %v1867 = vpop.f32.mrb[0].mxu0
        %v1868 = vadd.f32 0.0, %v1867
        %v1869 = vpop.f32.mrb[0].mxu0
        %1870 = vmatprep.mubr.bf16.mxu0 0
        %1871 = vmatmul.mubr.bf16.gmra.mrb[0].mxu0 %v1748
        %v1872 = vpop.f32.mrb[0].mxu0
        %v1873 = vadd.f32 0.0, %v1872
        %v1874 = vpop.f32.mrb[0].mxu0
        %v1875 = vpop.f32.mrb[0].mxu0
        %v1876 = vadd.f32 0.0, %v1875
        %v1877 = vpop.f32.mrb[0].mxu0
        %1878 = vmatprep.mubr.bf16.mxu0 0
        %1879 = vmatmul.mubr.bf16.gmra.mrb[0].mxu0 %v1751
        %v1880 = vpop.f32.mrb[0].mxu0
        %v1881 = vadd.f32 0.0, %v1880
        %v1882 = vpop.f32.mrb[0].mxu0
        %v1883 = vpop.f32.mrb[0].mxu0
        %v1884 = vadd.f32 0.0, %v1883
        %v1885 = vpop.f32.mrb[0].mxu0
        %1886 = vmatprep.mubr.bf16.mxu0 0
        %1887 = vmatmul.mubr.bf16.gmra.mrb[0].mxu0 %v1754
        %v1888 = vpop.f32.mrb[0].mxu0
        %v1889 = vadd.f32 0.0, %v1888
        %v1890 = vpop.f32.mrb[0].mxu0
        %v1891 = vpop.f32.mrb[0].mxu0
        %v1892 = vadd.f32 0.0, %v1891
        %v1893 = vpop.f32.mrb[0].mxu0
        %1894 = vmatprep.mubr.bf16.mxu0 0
        %1895 = vmatmul.mubr.bf16.gmra.mrb[0].mxu0 %v1757
        %v1896 = vpop.f32.mrb[0].mxu0
        %v1897 = vadd.f32 0.0, %v1896
        %v1898 = vpop.f32.mrb[0].mxu0
        %v1899 = vpop.f32.mrb[0].mxu0
        %v1900 = vadd.f32 0.0, %v1899
        %v1901 = vpop.f32.mrb[0].mxu0
        %1902 = vmatprep.mubr.bf16.mxu0 0
        %1903 = vmatmul.mubr.bf16.gmra.mrb[0].mxu0 %v1760
        %v1904 = vpop.f32.mrb[0].mxu0
        %v1905 = vadd.f32 0.0, %v1904
        %v1906 = vpop.f32.mrb[0].mxu0
        %v1907 = vpop.f32.mrb[0].mxu0
        %v1908 = vadd.f32 0.0, %v1907
        %v1909 = vpop.f32.mrb[0].mxu0
        %1910 = vmatprep.mubr.bf16.mxu0 0
        %1911 = vmatmul.mubr.bf16.gmra.mrb[0].mxu0 %v1763
        %v1912 = vpop.f32.mrb[0].mxu0
        %v1913 = vadd.f32 0.0, %v1912
        %v1914 = vpop.f32.mrb[0].mxu0
        %v1915 = vpop.f32.mrb[0].mxu0
        %v1916 = vadd.f32 0.0, %v1915
        %v1917 = vpop.f32.mrb[0].mxu0
        %1918 = vmatprep.mubr.bf16.mxu0 0
        %1919 = vmatmul.mubr.bf16.gmra.mrb[0].mxu0 %v1766
        %v1920 = vpop.f32.mrb[0].mxu0
        %v1921 = vadd.f32 0.0, %v1920
        %v1922 = vpop.f32.mrb[0].mxu0
        %v1923 = vpop.f32.mrb[0].mxu0
        %v1924 = vadd.f32 0.0, %v1923
        %v1925 = vpop.f32.mrb[0].mxu0
        %1926 = vmatprep.mubr.bf16.mxu0 0
        %1927 = vmatmul.mubr.bf16.gmra.mrb[0].mxu0 %v1769
        %v1928 = vpop.f32.mrb[0].mxu0
        %v1929 = vadd.f32 0.0, %v1928
        %v1930 = vpop.f32.mrb[0].mxu0
        %v1931 = vpop.f32.mrb[0].mxu0
        %v1932 = vadd.f32 0.0, %v1931
        %v1933 = vpop.f32.mrb[0].mxu0
        %1934 = vmatprep.mubr.bf16.mxu0 0
        %1935 = vmatmul.mubr.bf16.gmra.mrb[0].mxu0 %v1772
        %v1936 = vpop.f32.mrb[0].mxu0
        %v1937 = vadd.f32 0.0, %v1936
        %v1938 = vpop.f32.mrb[0].mxu0
        %v1939 = vpop.f32.mrb[0].mxu0
        %v1940 = vadd.f32 0.0, %v1939
        %v1941 = vpop.f32.mrb[0].mxu0
        %1942 = vmatprep.mubr.bf16.mxu0 0
        %1943 = vmatmul.mubr.bf16.gmra.mrb[0].mxu0 %v1775
        %v1944 = vpop.f32.mrb[0].mxu0
        %v1945 = vadd.f32 0.0, %v1944
        %v1946 = vpop.f32.mrb[0].mxu0
        %v1947 = vpop.f32.mrb[0].mxu0
        %v1948 = vadd.f32 0.0, %v1947
        %v1949 = vpop.f32.mrb[0].mxu0
        %1950 = vmatprep.mubr.bf16.mxu0 0
        %1951 = vmatmul.mubr.bf16.gmra.mrb[0].mxu0 %v1778
        %v1952 = vpop.f32.mrb[0].mxu0
        %v1953 = vadd.f32 0.0, %v1952
        %v1954 = vpop.f32.mrb[0].mxu0
        %v1955 = vpop.f32.mrb[0].mxu0
        %v1956 = vadd.f32 0.0, %v1955
        %v1957 = vpop.f32.mrb[0].mxu0
        %1958 = vmatprep.mubr.bf16.mxu0 0
        %1959 = vmatmul.mubr.bf16.gmra.mrb[0].mxu0 %v1781
        %v1960 = vpop.f32.mrb[0].mxu0
        %v1961 = vadd.f32 0.0, %v1960
        %v1962 = vpop.f32.mrb[0].mxu0
        %v1963 = vpop.f32.mrb[0].mxu0
        %v1964 = vadd.f32 0.0, %v1963
        %v1965 = vpop.f32.mrb[0].mxu0
        %1966 = vmatprep.mubr.bf16.mxu0 0
        %1967 = vmatmul.mubr.bf16.gmra.mrb[0].mxu0 %v1784
        %v1968 = vpop.f32.mrb[0].mxu0
        %v1969 = vadd.f32 0.0, %v1968
        %v1970 = vpop.f32.mrb[0].mxu0
        %v1971 = vpop.f32.mrb[0].mxu0
        %v1972 = vadd.f32 0.0, %v1971
        %v1973 = vpop.f32.mrb[0].mxu0
        %1974 = vmatprep.mubr.bf16.mxu0 0
        %1975 = vmatmul.mubr.bf16.gmra.mrb[0].mxu0 %v1787
        %v1976 = vpop.f32.mrb[0].mxu0
        %v1977 = vadd.f32 0.0, %v1976
        %v1978 = vpop.f32.mrb[0].mxu0
        %v1979 = vpop.f32.mrb[0].mxu0
        %v1980 = vadd.f32 0.0, %v1979
        %v1981 = vpop.f32.mrb[0].mxu0
        %1982 = vmatprep.mubr.bf16.mxu0 0
        %1983 = vmatmul.mubr.bf16.gmra.mrb[0].mxu0 %v1790
        %v1984 = vpop.f32.mrb[0].mxu0
        %v1985 = vadd.f32 0.0, %v1984
        %v1986 = vpop.f32.mrb[0].mxu0
        %v1987 = vpop.f32.mrb[0].mxu0
        %v1988 = vadd.f32 0.0, %v1987
        %v1989 = vpop.f32.mrb[0].mxu0
        %1990 = vmatprep.mubr.bf16.mxu0 0
        %1991 = vmatmul.mubr.bf16.gmra.mrb[0].mxu0 %v1793
        %v1992 = vpop.f32.mrb[0].mxu0
        %v1993 = vadd.f32 0.0, %v1992
        %v1994 = vpop.f32.mrb[0].mxu0
        %v1995 = vpop.f32.mrb[0].mxu0
        %v1996 = vpop.f32.mrb[0].mxu0
        %1997 = vdwg.mxu0
        %v1998 = vadd.f32 %v1627, %v1833
        %v1999 = vadd.f32 %v1628, %v1836
        %v2000 = vadd.f32 %v1629, %v1841
        %v2001 = vadd.f32 %v1630, %v1844
        %v2002 = vadd.f32 %v1631, %v1849
        %v2003 = vadd.f32 %v1632, %v1852
        %v2004 = vadd.f32 %v1633, %v1857
        %v2005 = vadd.f32 %v1634, %v1860
        %v2006 = vadd.f32 %v1635, %v1865
        %v2007 = vadd.f32 %v1636, %v1868
        %v2008 = vadd.f32 %v1637, %v1873
        %v2009 = vadd.f32 %v1638, %v1876
        %v2010 = vadd.f32 %v1639, %v1881
        %v2011 = vadd.f32 %v1640, %v1884
        %v2012 = vadd.f32 %v1641, %v1889
        %v2013 = vadd.f32 %v1642, %v1892
        %v2014 = vadd.f32 %v1643, %v1897
        %v2015 = vadd.f32 %v1644, %v1900
        %v2016 = vadd.f32 %v1645, %v1905
        %v2017 = vadd.f32 %v1646, %v1908
        %v2018 = vadd.f32 %v1647, %v1913
        %v2019 = vadd.f32 %v1648, %v1916
        %v2020 = vadd.f32 %v1649, %v1921
        %v2021 = vadd.f32 %v1650, %v1924
        %v2022 = vadd.f32 %v1651, %v1929
        %v2023 = vadd.f32 %v1652, %v1932
        %v2024 = vadd.f32 %v1653, %v1937
        %v2025 = vadd.f32 %v1654, %v1940
        %v2026 = vadd.f32 %v1655, %v1945
        %v2027 = vadd.f32 %v1656, %v1948
        %v2028 = vadd.f32 %v1657, %v1953
        %v2029 = vadd.f32 %v1658, %v1956
        %v2030 = vadd.f32 %v1659, %v1961
        %v2031 = vadd.f32 %v1660, %v1964
        %v2032 = vadd.f32 %v1661, %v1969
        %v2033 = vadd.f32 %v1662, %v1972
        %v2034 = vadd.f32 %v1663, %v1977
        %v2035 = vadd.f32 %v1664, %v1980
        %v2036 = vadd.f32 %v1665, %v1985
        %v2037 = vadd.f32 %v1666, %v1988
        %v2038 = vadd.f32 %v1667, %v1993
        %v2039 = vld [vmem:[%s252 + $0x14] sm:$0xff]
        %v2040 = vld [vmem:[%s252 + $0x1c] sm:$0xff]
        %v2041 = vld [vmem:[%s252 + $0x24] sm:$0xff]
        %v2042 = vld [vmem:[%s252 + $0x2c] sm:$0xff]
        %v2043 = vld [vmem:[%s252 + $0x34] sm:$0xff]
        %v2044 = vld [vmem:[%s252 + $0x3c] sm:$0xff]
        %v2045 = vld [vmem:[%s252 + $0x44] sm:$0xff]
        %v2046 = vld [vmem:[%s252 + $0x4c] sm:$0xff]
        %v2047 = vld [vmem:[%s252 + $0x54] sm:$0xff]
        %v2048 = vld [vmem:[%s252 + $0x5c] sm:$0xff]
        %v2049 = vld [vmem:[%s252 + $0x64] sm:$0xff]
        %v2050 = vld [vmem:[%s252 + $0x6c] sm:$0xff]
        %v2051 = vld [vmem:[%s252 + $0x74] sm:$0xff]
        %v2052 = vld [vmem:[%s252 + $0x7c] sm:$0xff]
        %v2053 = vld [vmem:[%s252 + $0x84] sm:$0xff]
        %v2054 = vld [vmem:[%s252 + $0x8c] sm:$0xff]
        %v2055 = vld [vmem:[%s252 + $0x94] sm:$0xff]
        %v2056 = vld [vmem:[%s252 + $0x9c] sm:$0xff]
        %v2057 = vld [vmem:[%s252 + $0xa4] sm:$0xff]
        %v2058 = vld [vmem:[%s252 + $0xac] sm:$0xff]
        %v2059 = vld [vmem:[%s252 + $0xb4] sm:$0xff]
        %v2060 = vld [vmem:[%s252 + $0xbc] sm:$0xff]
        %v2061 = vld [vmem:[%s252 + $0xc4] sm:$0xff]
        %v2062 = vld [vmem:[%s252 + $0xcc] sm:$0xff]
        %v2063 = vld [vmem:[%s252 + $0xd4] sm:$0xff]
        %v2064 = vld [vmem:[%s252 + $0xdc] sm:$0xff]
        %v2065 = vld [vmem:[%s252 + $0xe4] sm:$0xff]
        %v2066 = vld [vmem:[%s252 + $0xec] sm:$0xff]
        %v2067 = vld [vmem:[%s252 + $0xf4] sm:$0xff]
        %v2068 = vld [vmem:[%s252 + $0xfc] sm:$0xff]
        %v2069 = vld [vmem:[%s252 + $0x104] sm:$0xff]
        %v2070 = vld [vmem:[%s252 + $0x10c] sm:$0xff]
        %v2071 = vld [vmem:[%s252 + $0x114] sm:$0xff]
        %v2072 = vld [vmem:[%s252 + $0x11c] sm:$0xff]
        %v2073 = vld [vmem:[%s252 + $0x124] sm:$0xff]
        %v2074 = vld [vmem:[%s252 + $0x12c] sm:$0xff]
        %v2075 = vld [vmem:[%s252 + $0x134] sm:$0xff]
        %v2076 = vld [vmem:[%s252 + $0x13c] sm:$0xff]
        %v2077 = vld [vmem:[%s252 + $0x144] sm:$0xff]
        %v2078 = vld [vmem:[%s252 + $0x14c] sm:$0xff]
        %v2079 = vld [vmem:[%s252 + $0x154] sm:$0xf]
        %v2080 = vpack.c.bf16 %v2040, %v2039
        %v2081 = vpack.c.bf16 %v2042, %v2041
        %v2082 = vpack.c.bf16 %v2044, %v2043
        %v2083 = vpack.c.bf16 %v2046, %v2045
        %v2084 = vpack.c.bf16 %v2048, %v2047
        %v2085 = vpack.c.bf16 %v2050, %v2049
        %v2086 = vpack.c.bf16 %v2052, %v2051
        %v2087 = vpack.c.bf16 %v2054, %v2053
        %v2088 = vpack.c.bf16 %v2056, %v2055
        %v2089 = vpack.c.bf16 %v2058, %v2057
        %v2090 = vpack.c.bf16 %v2060, %v2059
        %v2091 = vpack.c.bf16 %v2062, %v2061
        %v2092 = vpack.c.bf16 %v2064, %v2063
        %v2093 = vpack.c.bf16 %v2066, %v2065
        %v2094 = vpack.c.bf16 %v2068, %v2067
        %v2095 = vpack.c.bf16 %v2070, %v2069
        %v2096 = vpack.c.bf16 %v2072, %v2071
        %v2097 = vpack.c.bf16 %v2074, %v2073
        %v2098 = vpack.c.bf16 %v2076, %v2075
        %v2099 = vpack.c.bf16 %v2078, %v2077
        %v2100 = vpack.c.bf16 %v2079, %v2079
        %s2101 = scalar_lea.vmem %s2, 10
        %v2102 = vld [vmem:[%s2101] sm:$0x3]
        %v2104 = vsel %vm392, %v2080, 0
        %v2107 = vsel %vm392, %v2081, 0
        %v2110 = vsel %vm392, %v2082, 0
        %v2113 = vsel %vm392, %v2083, 0
        %v2116 = vsel %vm392, %v2084, 0
        %v2119 = vsel %vm392, %v2085, 0
        %v2122 = vsel %vm392, %v2086, 0
        %v2125 = vsel %vm392, %v2087, 0
        %v2128 = vsel %vm392, %v2088, 0
        %v2131 = vsel %vm392, %v2089, 0
        %v2134 = vsel %vm392, %v2090, 0
        %v2137 = vsel %vm392, %v2091, 0
        %v2140 = vsel %vm392, %v2092, 0
        %v2143 = vsel %vm392, %v2093, 0
        %v2146 = vsel %vm392, %v2094, 0
        %v2149 = vsel %vm392, %v2095, 0
        %v2152 = vsel %vm392, %v2096, 0
        %v2155 = vsel %vm392, %v2097, 0
        %v2158 = vsel %vm392, %v2098, 0
        %v2161 = vsel %vm392, %v2099, 0
        %v2164 = vsel %vm392, %v2100, 0
        %v2167 = vsel %vm456, %v2102, 0
        %2169 = vmatprep.subr.bf16.mxu0 0
        %2170 = vmatpush1.bf16.msra.mxu0 %v2167
        %2171 = vmatprep.subr.bf16.mxu0 0
        %2172 = vmatpush1.bf16.msra.mxu0 0
        %2173 = vmatprep.subr.bf16.mxu0 0
        %2174 = vmatpush1.bf16.msra.mxu0 0
        %2175 = vmatprep.subr.bf16.mxu0 0
        %2176 = vmatpush1.bf16.msra.mxu0 0
        %2177 = vmatprep.subr.bf16.mxu0 0
        %2178 = vmatpush1.bf16.msra.mxu0 0
        %2179 = vmatprep.subr.bf16.mxu0 0
        %2180 = vmatpush1.bf16.msra.mxu0 0
        %2181 = vmatprep.subr.bf16.mxu0 0
        %2182 = vmatpush1.bf16.msra.mxu0 0
        %2183 = vmatprep.subr.bf16.mxu0 0
        %2184 = vmatpush1.bf16.msra.mxu0 0
        %2185 = vmatprep.subr.bf16.mxu0 0
        %2186 = vmatpush1.bf16.msra.mxu0 0
        %2187 = vmatprep.subr.bf16.mxu0 0
        %2188 = vmatpush1.bf16.msra.mxu0 0
        %2189 = vmatprep.subr.bf16.mxu0 0
        %2190 = vmatpush1.bf16.msra.mxu0 0
        %2191 = vmatprep.subr.bf16.mxu0 0
        %2192 = vmatpush1.bf16.msra.mxu0 0
        %2193 = vmatprep.subr.bf16.mxu0 0
        %2194 = vmatpush1.bf16.msra.mxu0 0
        %2195 = vmatprep.subr.bf16.mxu0 0
        %2196 = vmatpush1.bf16.msra.mxu0 0
        %2197 = vmatprep.subr.bf16.mxu0 0
        %2198 = vmatpush1.bf16.msra.mxu0 0
        %2199 = vmatprep.subr.bf16.mxu0 0
        %2200 = vmatpush1.bf16.msra.mxu0 0
        %2201 = vmatprep.mubr.bf16.mxu0 0
        %2202 = vmatmul.mubr.bf16.gmra.mrb[0].mxu0 %v2104
        %v2203 = vpop.f32.mrb[0].mxu0
        %v2204 = vadd.f32 0.0, %v2203
        %v2205 = vpop.f32.mrb[0].mxu0
        %v2206 = vpop.f32.mrb[0].mxu0
        %v2207 = vadd.f32 0.0, %v2206
        %v2208 = vpop.f32.mrb[0].mxu0
        %2209 = vmatprep.mubr.bf16.mxu0 0
        %2210 = vmatmul.mubr.bf16.gmra.mrb[0].mxu0 %v2107
        %v2211 = vpop.f32.mrb[0].mxu0
        %v2212 = vadd.f32 0.0, %v2211
        %v2213 = vpop.f32.mrb[0].mxu0
        %v2214 = vpop.f32.mrb[0].mxu0
        %v2215 = vadd.f32 0.0, %v2214
        %v2216 = vpop.f32.mrb[0].mxu0
        %2217 = vmatprep.mubr.bf16.mxu0 0
        %2218 = vmatmul.mubr.bf16.gmra.mrb[0].mxu0 %v2110
        %v2219 = vpop.f32.mrb[0].mxu0
        %v2220 = vadd.f32 0.0, %v2219
        %v2221 = vpop.f32.mrb[0].mxu0
        %v2222 = vpop.f32.mrb[0].mxu0
        %v2223 = vadd.f32 0.0, %v2222
        %v2224 = vpop.f32.mrb[0].mxu0
        %2225 = vmatprep.mubr.bf16.mxu0 0
        %2226 = vmatmul.mubr.bf16.gmra.mrb[0].mxu0 %v2113
        %v2227 = vpop.f32.mrb[0].mxu0
        %v2228 = vadd.f32 0.0, %v2227
        %v2229 = vpop.f32.mrb[0].mxu0
        %v2230 = vpop.f32.mrb[0].mxu0
        %v2231 = vadd.f32 0.0, %v2230
        %v2232 = vpop.f32.mrb[0].mxu0
        %2233 = vmatprep.mubr.bf16.mxu0 0
        %2234 = vmatmul.mubr.bf16.gmra.mrb[0].mxu0 %v2116
        %v2235 = vpop.f32.mrb[0].mxu0
        %v2236 = vadd.f32 0.0, %v2235
        %v2237 = vpop.f32.mrb[0].mxu0
        %v2238 = vpop.f32.mrb[0].mxu0
        %v2239 = vadd.f32 0.0, %v2238
        %v2240 = vpop.f32.mrb[0].mxu0
        %2241 = vmatprep.mubr.bf16.mxu0 0
        %2242 = vmatmul.mubr.bf16.gmra.mrb[0].mxu0 %v2119
        %v2243 = vpop.f32.mrb[0].mxu0
        %v2244 = vadd.f32 0.0, %v2243
        %v2245 = vpop.f32.mrb[0].mxu0
        %v2246 = vpop.f32.mrb[0].mxu0
        %v2247 = vadd.f32 0.0, %v2246
        %v2248 = vpop.f32.mrb[0].mxu0
        %2249 = vmatprep.mubr.bf16.mxu0 0
        %2250 = vmatmul.mubr.bf16.gmra.mrb[0].mxu0 %v2122
        %v2251 = vpop.f32.mrb[0].mxu0
        %v2252 = vadd.f32 0.0, %v2251
        %v2253 = vpop.f32.mrb[0].mxu0
        %v2254 = vpop.f32.mrb[0].mxu0
        %v2255 = vadd.f32 0.0, %v2254
        %v2256 = vpop.f32.mrb[0].mxu0
        %2257 = vmatprep.mubr.bf16.mxu0 0
        %2258 = vmatmul.mubr.bf16.gmra.mrb[0].mxu0 %v2125
        %v2259 = vpop.f32.mrb[0].mxu0
        %v2260 = vadd.f32 0.0, %v2259
        %v2261 = vpop.f32.mrb[0].mxu0
        %v2262 = vpop.f32.mrb[0].mxu0
        %v2263 = vadd.f32 0.0, %v2262
        %v2264 = vpop.f32.mrb[0].mxu0
        %2265 = vmatprep.mubr.bf16.mxu0 0
        %2266 = vmatmul.mubr.bf16.gmra.mrb[0].mxu0 %v2128
        %v2267 = vpop.f32.mrb[0].mxu0
        %v2268 = vadd.f32 0.0, %v2267
        %v2269 = vpop.f32.mrb[0].mxu0
        %v2270 = vpop.f32.mrb[0].mxu0
        %v2271 = vadd.f32 0.0, %v2270
        %v2272 = vpop.f32.mrb[0].mxu0
        %2273 = vmatprep.mubr.bf16.mxu0 0
        %2274 = vmatmul.mubr.bf16.gmra.mrb[0].mxu0 %v2131
        %v2275 = vpop.f32.mrb[0].mxu0
        %v2276 = vadd.f32 0.0, %v2275
        %v2277 = vpop.f32.mrb[0].mxu0
        %v2278 = vpop.f32.mrb[0].mxu0
        %v2279 = vadd.f32 0.0, %v2278
        %v2280 = vpop.f32.mrb[0].mxu0
        %2281 = vmatprep.mubr.bf16.mxu0 0
        %2282 = vmatmul.mubr.bf16.gmra.mrb[0].mxu0 %v2134
        %v2283 = vpop.f32.mrb[0].mxu0
        %v2284 = vadd.f32 0.0, %v2283
        %v2285 = vpop.f32.mrb[0].mxu0
        %v2286 = vpop.f32.mrb[0].mxu0
        %v2287 = vadd.f32 0.0, %v2286
        %v2288 = vpop.f32.mrb[0].mxu0
        %2289 = vmatprep.mubr.bf16.mxu0 0
        %2290 = vmatmul.mubr.bf16.gmra.mrb[0].mxu0 %v2137
        %v2291 = vpop.f32.mrb[0].mxu0
        %v2292 = vadd.f32 0.0, %v2291
        %v2293 = vpop.f32.mrb[0].mxu0
        %v2294 = vpop.f32.mrb[0].mxu0
        %v2295 = vadd.f32 0.0, %v2294
        %v2296 = vpop.f32.mrb[0].mxu0
        %2297 = vmatprep.mubr.bf16.mxu0 0
        %2298 = vmatmul.mubr.bf16.gmra.mrb[0].mxu0 %v2140
        %v2299 = vpop.f32.mrb[0].mxu0
        %v2300 = vadd.f32 0.0, %v2299
        %v2301 = vpop.f32.mrb[0].mxu0
        %v2302 = vpop.f32.mrb[0].mxu0
        %v2303 = vadd.f32 0.0, %v2302
        %v2304 = vpop.f32.mrb[0].mxu0
        %2305 = vmatprep.mubr.bf16.mxu0 0
        %2306 = vmatmul.mubr.bf16.gmra.mrb[0].mxu0 %v2143
        %v2307 = vpop.f32.mrb[0].mxu0
        %v2308 = vadd.f32 0.0, %v2307
        %v2309 = vpop.f32.mrb[0].mxu0
        %v2310 = vpop.f32.mrb[0].mxu0
        %v2311 = vadd.f32 0.0, %v2310
        %v2312 = vpop.f32.mrb[0].mxu0
        %2313 = vmatprep.mubr.bf16.mxu0 0
        %2314 = vmatmul.mubr.bf16.gmra.mrb[0].mxu0 %v2146
        %v2315 = vpop.f32.mrb[0].mxu0
        %v2316 = vadd.f32 0.0, %v2315
        %v2317 = vpop.f32.mrb[0].mxu0
        %v2318 = vpop.f32.mrb[0].mxu0
        %v2319 = vadd.f32 0.0, %v2318
        %v2320 = vpop.f32.mrb[0].mxu0
        %2321 = vmatprep.mubr.bf16.mxu0 0
        %2322 = vmatmul.mubr.bf16.gmra.mrb[0].mxu0 %v2149
        %v2323 = vpop.f32.mrb[0].mxu0
        %v2324 = vadd.f32 0.0, %v2323
        %v2325 = vpop.f32.mrb[0].mxu0
        %v2326 = vpop.f32.mrb[0].mxu0
        %v2327 = vadd.f32 0.0, %v2326
        %v2328 = vpop.f32.mrb[0].mxu0
        %2329 = vmatprep.mubr.bf16.mxu0 0
        %2330 = vmatmul.mubr.bf16.gmra.mrb[0].mxu0 %v2152
        %v2331 = vpop.f32.mrb[0].mxu0
        %v2332 = vadd.f32 0.0, %v2331
        %v2333 = vpop.f32.mrb[0].mxu0
        %v2334 = vpop.f32.mrb[0].mxu0
        %v2335 = vadd.f32 0.0, %v2334
        %v2336 = vpop.f32.mrb[0].mxu0
        %2337 = vmatprep.mubr.bf16.mxu0 0
        %2338 = vmatmul.mubr.bf16.gmra.mrb[0].mxu0 %v2155
        %v2339 = vpop.f32.mrb[0].mxu0
        %v2340 = vadd.f32 0.0, %v2339
        %v2341 = vpop.f32.mrb[0].mxu0
        %v2342 = vpop.f32.mrb[0].mxu0
        %v2343 = vadd.f32 0.0, %v2342
        %v2344 = vpop.f32.mrb[0].mxu0
        %2345 = vmatprep.mubr.bf16.mxu0 0
        %2346 = vmatmul.mubr.bf16.gmra.mrb[0].mxu0 %v2158
        %v2347 = vpop.f32.mrb[0].mxu0
        %v2348 = vadd.f32 0.0, %v2347
        %v2349 = vpop.f32.mrb[0].mxu0
        %v2350 = vpop.f32.mrb[0].mxu0
        %v2351 = vadd.f32 0.0, %v2350
        %v2352 = vpop.f32.mrb[0].mxu0
        %2353 = vmatprep.mubr.bf16.mxu0 0
        %2354 = vmatmul.mubr.bf16.gmra.mrb[0].mxu0 %v2161
        %v2355 = vpop.f32.mrb[0].mxu0
        %v2356 = vadd.f32 0.0, %v2355
        %v2357 = vpop.f32.mrb[0].mxu0
        %v2358 = vpop.f32.mrb[0].mxu0
        %v2359 = vadd.f32 0.0, %v2358
        %v2360 = vpop.f32.mrb[0].mxu0
        %2361 = vmatprep.mubr.bf16.mxu0 0
        %2362 = vmatmul.mubr.bf16.gmra.mrb[0].mxu0 %v2164
        %v2363 = vpop.f32.mrb[0].mxu0
        %v2364 = vadd.f32 0.0, %v2363
        %v2365 = vpop.f32.mrb[0].mxu0
        %v2366 = vpop.f32.mrb[0].mxu0
        %v2367 = vpop.f32.mrb[0].mxu0
        %2368 = vdwg.mxu0
        %v2369 = vadd.f32 %v1998, %v2204
        %v2370 = vadd.f32 %v1999, %v2207
        %v2371 = vadd.f32 %v2000, %v2212
        %v2372 = vadd.f32 %v2001, %v2215
        %v2373 = vadd.f32 %v2002, %v2220
        %v2374 = vadd.f32 %v2003, %v2223
        %v2375 = vadd.f32 %v2004, %v2228
        %v2376 = vadd.f32 %v2005, %v2231
        %v2377 = vadd.f32 %v2006, %v2236
        %v2378 = vadd.f32 %v2007, %v2239
        %v2379 = vadd.f32 %v2008, %v2244
        %v2380 = vadd.f32 %v2009, %v2247
        %v2381 = vadd.f32 %v2010, %v2252
        %v2382 = vadd.f32 %v2011, %v2255
        %v2383 = vadd.f32 %v2012, %v2260
        %v2384 = vadd.f32 %v2013, %v2263
        %v2385 = vadd.f32 %v2014, %v2268
        %v2386 = vadd.f32 %v2015, %v2271
        %v2387 = vadd.f32 %v2016, %v2276
        %v2388 = vadd.f32 %v2017, %v2279
        %v2389 = vadd.f32 %v2018, %v2284
        %v2390 = vadd.f32 %v2019, %v2287
        %v2391 = vadd.f32 %v2020, %v2292
        %v2392 = vadd.f32 %v2021, %v2295
        %v2393 = vadd.f32 %v2022, %v2300
        %v2394 = vadd.f32 %v2023, %v2303
        %v2395 = vadd.f32 %v2024, %v2308
        %v2396 = vadd.f32 %v2025, %v2311
        %v2397 = vadd.f32 %v2026, %v2316
        %v2398 = vadd.f32 %v2027, %v2319
        %v2399 = vadd.f32 %v2028, %v2324
        %v2400 = vadd.f32 %v2029, %v2327
        %v2401 = vadd.f32 %v2030, %v2332
        %v2402 = vadd.f32 %v2031, %v2335
        %v2403 = vadd.f32 %v2032, %v2340
        %v2404 = vadd.f32 %v2033, %v2343
        %v2405 = vadd.f32 %v2034, %v2348
        %v2406 = vadd.f32 %v2035, %v2351
        %v2407 = vadd.f32 %v2036, %v2356
        %v2408 = vadd.f32 %v2037, %v2359
        %v2409 = vadd.f32 %v2038, %v2364
        %v2410 = vld [vmem:[%s252 + $0x24] sm:$0xff]
        %v2411 = vld [vmem:[%s252 + $0x2c] sm:$0xff]
        %v2412 = vld [vmem:[%s252 + $0x34] sm:$0xff]
        %v2413 = vld [vmem:[%s252 + $0x3c] sm:$0xff]
        %v2414 = vld [vmem:[%s252 + $0x44] sm:$0xff]
        %v2415 = vld [vmem:[%s252 + $0x4c] sm:$0xff]
        %v2416 = vld [vmem:[%s252 + $0x54] sm:$0xff]
        %v2417 = vld [vmem:[%s252 + $0x5c] sm:$0xff]
        %v2418 = vld [vmem:[%s252 + $0x64] sm:$0xff]
        %v2419 = vld [vmem:[%s252 + $0x6c] sm:$0xff]
        %v2420 = vld [vmem:[%s252 + $0x74] sm:$0xff]
        %v2421 = vld [vmem:[%s252 + $0x7c] sm:$0xff]
        %v2422 = vld [vmem:[%s252 + $0x84] sm:$0xff]
        %v2423 = vld [vmem:[%s252 + $0x8c] sm:$0xff]
        %v2424 = vld [vmem:[%s252 + $0x94] sm:$0xff]
        %v2425 = vld [vmem:[%s252 + $0x9c] sm:$0xff]
        %v2426 = vld [vmem:[%s252 + $0xa4] sm:$0xff]
        %v2427 = vld [vmem:[%s252 + $0xac] sm:$0xff]
        %v2428 = vld [vmem:[%s252 + $0xb4] sm:$0xff]
        %v2429 = vld [vmem:[%s252 + $0xbc] sm:$0xff]
        %v2430 = vld [vmem:[%s252 + $0xc4] sm:$0xff]
        %v2431 = vld [vmem:[%s252 + $0xcc] sm:$0xff]
        %v2432 = vld [vmem:[%s252 + $0xd4] sm:$0xff]
        %v2433 = vld [vmem:[%s252 + $0xdc] sm:$0xff]
        %v2434 = vld [vmem:[%s252 + $0xe4] sm:$0xff]
        %v2435 = vld [vmem:[%s252 + $0xec] sm:$0xff]
        %v2436 = vld [vmem:[%s252 + $0xf4] sm:$0xff]
        %v2437 = vld [vmem:[%s252 + $0xfc] sm:$0xff]
        %v2438 = vld [vmem:[%s252 + $0x104] sm:$0xff]
        %v2439 = vld [vmem:[%s252 + $0x10c] sm:$0xff]
        %v2440 = vld [vmem:[%s252 + $0x114] sm:$0xff]
        %v2441 = vld [vmem:[%s252 + $0x11c] sm:$0xff]
        %v2442 = vld [vmem:[%s252 + $0x124] sm:$0xff]
        %v2443 = vld [vmem:[%s252 + $0x12c] sm:$0xff]
        %v2444 = vld [vmem:[%s252 + $0x134] sm:$0xff]
        %v2445 = vld [vmem:[%s252 + $0x13c] sm:$0xff]
        %v2446 = vld [vmem:[%s252 + $0x144] sm:$0xff]
        %v2447 = vld [vmem:[%s252 + $0x14c] sm:$0xff]
        %v2448 = vld [vmem:[%s252 + $0x154] sm:$0xff]
        %v2449 = vld [vmem:[%s252 + $0x15c] sm:$0xff]
        %v2450 = vld [vmem:[%s252 + $0x164] sm:$0xf]
        %v2451 = vpack.c.bf16 %v2411, %v2410
        %v2452 = vpack.c.bf16 %v2413, %v2412
        %v2453 = vpack.c.bf16 %v2415, %v2414
        %v2454 = vpack.c.bf16 %v2417, %v2416
        %v2455 = vpack.c.bf16 %v2419, %v2418
        %v2456 = vpack.c.bf16 %v2421, %v2420
        %v2457 = vpack.c.bf16 %v2423, %v2422
        %v2458 = vpack.c.bf16 %v2425, %v2424
        %v2459 = vpack.c.bf16 %v2427, %v2426
        %v2460 = vpack.c.bf16 %v2429, %v2428
        %v2461 = vpack.c.bf16 %v2431, %v2430
        %v2462 = vpack.c.bf16 %v2433, %v2432
        %v2463 = vpack.c.bf16 %v2435, %v2434
        %v2464 = vpack.c.bf16 %v2437, %v2436
        %v2465 = vpack.c.bf16 %v2439, %v2438
        %v2466 = vpack.c.bf16 %v2441, %v2440
        %v2467 = vpack.c.bf16 %v2443, %v2442
        %v2468 = vpack.c.bf16 %v2445, %v2444
        %v2469 = vpack.c.bf16 %v2447, %v2446
        %v2470 = vpack.c.bf16 %v2449, %v2448
        %v2471 = vpack.c.bf16 %v2450, %v2450
        %s2472 = scalar_lea.vmem %s2, 12
        %v2473 = vld [vmem:[%s2472] sm:$0x3]
        %v2475 = vsel %vm392, %v2451, 0
        %v2478 = vsel %vm392, %v2452, 0
        %v2481 = vsel %vm392, %v2453, 0
        %v2484 = vsel %vm392, %v2454, 0
        %v2487 = vsel %vm392, %v2455, 0
        %v2490 = vsel %vm392, %v2456, 0
        %v2493 = vsel %vm392, %v2457, 0
        %v2496 = vsel %vm392, %v2458, 0
        %v2499 = vsel %vm392, %v2459, 0
        %v2502 = vsel %vm392, %v2460, 0
        %v2505 = vsel %vm392, %v2461, 0
        %v2508 = vsel %vm392, %v2462, 0
        %v2511 = vsel %vm392, %v2463, 0
        %v2514 = vsel %vm392, %v2464, 0
        %v2517 = vsel %vm392, %v2465, 0
        %v2520 = vsel %vm392, %v2466, 0
        %v2523 = vsel %vm392, %v2467, 0
        %v2526 = vsel %vm392, %v2468, 0
        %v2529 = vsel %vm392, %v2469, 0
        %v2532 = vsel %vm392, %v2470, 0
        %v2535 = vsel %vm392, %v2471, 0
        %v2538 = vsel %vm456, %v2473, 0
        %2540 = vmatprep.subr.bf16.mxu0 0
        %2541 = vmatpush1.bf16.msra.mxu0 %v2538
        %2542 = vmatprep.subr.bf16.mxu0 0
        %2543 = vmatpush1.bf16.msra.mxu0 0
        %2544 = vmatprep.subr.bf16.mxu0 0
        %2545 = vmatpush1.bf16.msra.mxu0 0
        %2546 = vmatprep.subr.bf16.mxu0 0
        %2547 = vmatpush1.bf16.msra.mxu0 0
        %2548 = vmatprep.subr.bf16.mxu0 0
        %2549 = vmatpush1.bf16.msra.mxu0 0
        %2550 = vmatprep.subr.bf16.mxu0 0
        %2551 = vmatpush1.bf16.msra.mxu0 0
        %2552 = vmatprep.subr.bf16.mxu0 0
        %2553 = vmatpush1.bf16.msra.mxu0 0
        %2554 = vmatprep.subr.bf16.mxu0 0
        %2555 = vmatpush1.bf16.msra.mxu0 0
        %2556 = vmatprep.subr.bf16.mxu0 0
        %2557 = vmatpush1.bf16.msra.mxu0 0
        %2558 = vmatprep.subr.bf16.mxu0 0
        %2559 = vmatpush1.bf16.msra.mxu0 0
        %2560 = vmatprep.subr.bf16.mxu0 0
        %2561 = vmatpush1.bf16.msra.mxu0 0
        %2562 = vmatprep.subr.bf16.mxu0 0
        %2563 = vmatpush1.bf16.msra.mxu0 0
        %2564 = vmatprep.subr.bf16.mxu0 0
        %2565 = vmatpush1.bf16.msra.mxu0 0
        %2566 = vmatprep.subr.bf16.mxu0 0
        %2567 = vmatpush1.bf16.msra.mxu0 0
        %2568 = vmatprep.subr.bf16.mxu0 0
        %2569 = vmatpush1.bf16.msra.mxu0 0
        %2570 = vmatprep.subr.bf16.mxu0 0
        %2571 = vmatpush1.bf16.msra.mxu0 0
        %2572 = vmatprep.mubr.bf16.mxu0 0
        %2573 = vmatmul.mubr.bf16.gmra.mrb[0].mxu0 %v2475
        %v2574 = vpop.f32.mrb[0].mxu0
        %v2575 = vadd.f32 0.0, %v2574
        %v2576 = vpop.f32.mrb[0].mxu0
        %v2577 = vpop.f32.mrb[0].mxu0
        %v2578 = vadd.f32 0.0, %v2577
        %v2579 = vpop.f32.mrb[0].mxu0
        %2580 = vmatprep.mubr.bf16.mxu0 0
        %2581 = vmatmul.mubr.bf16.gmra.mrb[0].mxu0 %v2478
        %v2582 = vpop.f32.mrb[0].mxu0
        %v2583 = vadd.f32 0.0, %v2582
        %v2584 = vpop.f32.mrb[0].mxu0
        %v2585 = vpop.f32.mrb[0].mxu0
        %v2586 = vadd.f32 0.0, %v2585
        %v2587 = vpop.f32.mrb[0].mxu0
        %2588 = vmatprep.mubr.bf16.mxu0 0
        %2589 = vmatmul.mubr.bf16.gmra.mrb[0].mxu0 %v2481
        %v2590 = vpop.f32.mrb[0].mxu0
        %v2591 = vadd.f32 0.0, %v2590
        %v2592 = vpop.f32.mrb[0].mxu0
        %v2593 = vpop.f32.mrb[0].mxu0
        %v2594 = vadd.f32 0.0, %v2593
        %v2595 = vpop.f32.mrb[0].mxu0
        %2596 = vmatprep.mubr.bf16.mxu0 0
        %2597 = vmatmul.mubr.bf16.gmra.mrb[0].mxu0 %v2484
        %v2598 = vpop.f32.mrb[0].mxu0
        %v2599 = vadd.f32 0.0, %v2598
        %v2600 = vpop.f32.mrb[0].mxu0
        %v2601 = vpop.f32.mrb[0].mxu0
        %v2602 = vadd.f32 0.0, %v2601
        %v2603 = vpop.f32.mrb[0].mxu0
        %2604 = vmatprep.mubr.bf16.mxu0 0
        %2605 = vmatmul.mubr.bf16.gmra.mrb[0].mxu0 %v2487
        %v2606 = vpop.f32.mrb[0].mxu0
        %v2607 = vadd.f32 0.0, %v2606
        %v2608 = vpop.f32.mrb[0].mxu0
        %v2609 = vpop.f32.mrb[0].mxu0
        %v2610 = vadd.f32 0.0, %v2609
        %v2611 = vpop.f32.mrb[0].mxu0
        %2612 = vmatprep.mubr.bf16.mxu0 0
        %2613 = vmatmul.mubr.bf16.gmra.mrb[0].mxu0 %v2490
        %v2614 = vpop.f32.mrb[0].mxu0
        %v2615 = vadd.f32 0.0, %v2614
        %v2616 = vpop.f32.mrb[0].mxu0
        %v2617 = vpop.f32.mrb[0].mxu0
        %v2618 = vadd.f32 0.0, %v2617
        %v2619 = vpop.f32.mrb[0].mxu0
        %2620 = vmatprep.mubr.bf16.mxu0 0
        %2621 = vmatmul.mubr.bf16.gmra.mrb[0].mxu0 %v2493
        %v2622 = vpop.f32.mrb[0].mxu0
        %v2623 = vadd.f32 0.0, %v2622
        %v2624 = vpop.f32.mrb[0].mxu0
        %v2625 = vpop.f32.mrb[0].mxu0
        %v2626 = vadd.f32 0.0, %v2625
        %v2627 = vpop.f32.mrb[0].mxu0
        %2628 = vmatprep.mubr.bf16.mxu0 0
        %2629 = vmatmul.mubr.bf16.gmra.mrb[0].mxu0 %v2496
        %v2630 = vpop.f32.mrb[0].mxu0
        %v2631 = vadd.f32 0.0, %v2630
        %v2632 = vpop.f32.mrb[0].mxu0
        %v2633 = vpop.f32.mrb[0].mxu0
        %v2634 = vadd.f32 0.0, %v2633
        %v2635 = vpop.f32.mrb[0].mxu0
        %2636 = vmatprep.mubr.bf16.mxu0 0
        %2637 = vmatmul.mubr.bf16.gmra.mrb[0].mxu0 %v2499
        %v2638 = vpop.f32.mrb[0].mxu0
        %v2639 = vadd.f32 0.0, %v2638
        %v2640 = vpop.f32.mrb[0].mxu0
        %v2641 = vpop.f32.mrb[0].mxu0
        %v2642 = vadd.f32 0.0, %v2641
        %v2643 = vpop.f32.mrb[0].mxu0
        %2644 = vmatprep.mubr.bf16.mxu0 0
        %2645 = vmatmul.mubr.bf16.gmra.mrb[0].mxu0 %v2502
        %v2646 = vpop.f32.mrb[0].mxu0
        %v2647 = vadd.f32 0.0, %v2646
        %v2648 = vpop.f32.mrb[0].mxu0
        %v2649 = vpop.f32.mrb[0].mxu0
        %v2650 = vadd.f32 0.0, %v2649
        %v2651 = vpop.f32.mrb[0].mxu0
        %2652 = vmatprep.mubr.bf16.mxu0 0
        %2653 = vmatmul.mubr.bf16.gmra.mrb[0].mxu0 %v2505
        %v2654 = vpop.f32.mrb[0].mxu0
        %v2655 = vadd.f32 0.0, %v2654
        %v2656 = vpop.f32.mrb[0].mxu0
        %v2657 = vpop.f32.mrb[0].mxu0
        %v2658 = vadd.f32 0.0, %v2657
        %v2659 = vpop.f32.mrb[0].mxu0
        %2660 = vmatprep.mubr.bf16.mxu0 0
        %2661 = vmatmul.mubr.bf16.gmra.mrb[0].mxu0 %v2508
        %v2662 = vpop.f32.mrb[0].mxu0
        %v2663 = vadd.f32 0.0, %v2662
        %v2664 = vpop.f32.mrb[0].mxu0
        %v2665 = vpop.f32.mrb[0].mxu0
        %v2666 = vadd.f32 0.0, %v2665
        %v2667 = vpop.f32.mrb[0].mxu0
        %2668 = vmatprep.mubr.bf16.mxu0 0
        %2669 = vmatmul.mubr.bf16.gmra.mrb[0].mxu0 %v2511
        %v2670 = vpop.f32.mrb[0].mxu0
        %v2671 = vadd.f32 0.0, %v2670
        %v2672 = vpop.f32.mrb[0].mxu0
        %v2673 = vpop.f32.mrb[0].mxu0
        %v2674 = vadd.f32 0.0, %v2673
        %v2675 = vpop.f32.mrb[0].mxu0
        %2676 = vmatprep.mubr.bf16.mxu0 0
        %2677 = vmatmul.mubr.bf16.gmra.mrb[0].mxu0 %v2514
        %v2678 = vpop.f32.mrb[0].mxu0
        %v2679 = vadd.f32 0.0, %v2678
        %v2680 = vpop.f32.mrb[0].mxu0
        %v2681 = vpop.f32.mrb[0].mxu0
        %v2682 = vadd.f32 0.0, %v2681
        %v2683 = vpop.f32.mrb[0].mxu0
        %2684 = vmatprep.mubr.bf16.mxu0 0
        %2685 = vmatmul.mubr.bf16.gmra.mrb[0].mxu0 %v2517
        %v2686 = vpop.f32.mrb[0].mxu0
        %v2687 = vadd.f32 0.0, %v2686
        %v2688 = vpop.f32.mrb[0].mxu0
        %v2689 = vpop.f32.mrb[0].mxu0
        %v2690 = vadd.f32 0.0, %v2689
        %v2691 = vpop.f32.mrb[0].mxu0
        %2692 = vmatprep.mubr.bf16.mxu0 0
        %2693 = vmatmul.mubr.bf16.gmra.mrb[0].mxu0 %v2520
        %v2694 = vpop.f32.mrb[0].mxu0
        %v2695 = vadd.f32 0.0, %v2694
        %v2696 = vpop.f32.mrb[0].mxu0
        %v2697 = vpop.f32.mrb[0].mxu0
        %v2698 = vadd.f32 0.0, %v2697
        %v2699 = vpop.f32.mrb[0].mxu0
        %2700 = vmatprep.mubr.bf16.mxu0 0
        %2701 = vmatmul.mubr.bf16.gmra.mrb[0].mxu0 %v2523
        %v2702 = vpop.f32.mrb[0].mxu0
        %v2703 = vadd.f32 0.0, %v2702
        %v2704 = vpop.f32.mrb[0].mxu0
        %v2705 = vpop.f32.mrb[0].mxu0
        %v2706 = vadd.f32 0.0, %v2705
        %v2707 = vpop.f32.mrb[0].mxu0
        %2708 = vmatprep.mubr.bf16.mxu0 0
        %2709 = vmatmul.mubr.bf16.gmra.mrb[0].mxu0 %v2526
        %v2710 = vpop.f32.mrb[0].mxu0
        %v2711 = vadd.f32 0.0, %v2710
        %v2712 = vpop.f32.mrb[0].mxu0
        %v2713 = vpop.f32.mrb[0].mxu0
        %v2714 = vadd.f32 0.0, %v2713
        %v2715 = vpop.f32.mrb[0].mxu0
        %2716 = vmatprep.mubr.bf16.mxu0 0
        %2717 = vmatmul.mubr.bf16.gmra.mrb[0].mxu0 %v2529
        %v2718 = vpop.f32.mrb[0].mxu0
        %v2719 = vadd.f32 0.0, %v2718
        %v2720 = vpop.f32.mrb[0].mxu0
        %v2721 = vpop.f32.mrb[0].mxu0
        %v2722 = vadd.f32 0.0, %v2721
        %v2723 = vpop.f32.mrb[0].mxu0
        %2724 = vmatprep.mubr.bf16.mxu0 0
        %2725 = vmatmul.mubr.bf16.gmra.mrb[0].mxu0 %v2532
        %v2726 = vpop.f32.mrb[0].mxu0
        %v2727 = vadd.f32 0.0, %v2726
        %v2728 = vpop.f32.mrb[0].mxu0
        %v2729 = vpop.f32.mrb[0].mxu0
        %v2730 = vadd.f32 0.0, %v2729
        %v2731 = vpop.f32.mrb[0].mxu0
        %2732 = vmatprep.mubr.bf16.mxu0 0
        %2733 = vmatmul.mubr.bf16.gmra.mrb[0].mxu0 %v2535
        %v2734 = vpop.f32.mrb[0].mxu0
        %v2735 = vadd.f32 0.0, %v2734
        %v2736 = vpop.f32.mrb[0].mxu0
        %v2737 = vpop.f32.mrb[0].mxu0
        %v2738 = vpop.f32.mrb[0].mxu0
        %2739 = vdwg.mxu0
        %v2740 = vadd.f32 %v2369, %v2575
        %v2741 = vadd.f32 %v2370, %v2578
        %v2742 = vadd.f32 %v2371, %v2583
        %v2743 = vadd.f32 %v2372, %v2586
        %v2744 = vadd.f32 %v2373, %v2591
        %v2745 = vadd.f32 %v2374, %v2594
        %v2746 = vadd.f32 %v2375, %v2599
        %v2747 = vadd.f32 %v2376, %v2602
        %v2748 = vadd.f32 %v2377, %v2607
        %v2749 = vadd.f32 %v2378, %v2610
        %v2750 = vadd.f32 %v2379, %v2615
        %v2751 = vadd.f32 %v2380, %v2618
        %v2752 = vadd.f32 %v2381, %v2623
        %v2753 = vadd.f32 %v2382, %v2626
        %v2754 = vadd.f32 %v2383, %v2631
        %v2755 = vadd.f32 %v2384, %v2634
        %v2756 = vadd.f32 %v2385, %v2639
        %v2757 = vadd.f32 %v2386, %v2642
        %v2758 = vadd.f32 %v2387, %v2647
        %v2759 = vadd.f32 %v2388, %v2650
        %v2760 = vadd.f32 %v2389, %v2655
        %v2761 = vadd.f32 %v2390, %v2658
        %v2762 = vadd.f32 %v2391, %v2663
        %v2763 = vadd.f32 %v2392, %v2666
        %v2764 = vadd.f32 %v2393, %v2671
        %v2765 = vadd.f32 %v2394, %v2674
        %v2766 = vadd.f32 %v2395, %v2679
        %v2767 = vadd.f32 %v2396, %v2682
        %v2768 = vadd.f32 %v2397, %v2687
        %v2769 = vadd.f32 %v2398, %v2690
        %v2770 = vadd.f32 %v2399, %v2695
        %v2771 = vadd.f32 %v2400, %v2698
        %v2772 = vadd.f32 %v2401, %v2703
        %v2773 = vadd.f32 %v2402, %v2706
        %v2774 = vadd.f32 %v2403, %v2711
        %v2775 = vadd.f32 %v2404, %v2714
        %v2776 = vadd.f32 %v2405, %v2719
        %v2777 = vadd.f32 %v2406, %v2722
        %v2778 = vadd.f32 %v2407, %v2727
        %v2779 = vadd.f32 %v2408, %v2730
        %v2780 = vadd.f32 %v2409, %v2735
        %v2781 = vld [vmem:[%s252 + $0x25] sm:$0xff]
        %v2782 = vld [vmem:[%s252 + $0x2d] sm:$0xff]
        %v2783 = vld [vmem:[%s252 + $0x35] sm:$0xff]
        %v2784 = vld [vmem:[%s252 + $0x3d] sm:$0xff]
        %v2785 = vld [vmem:[%s252 + $0x45] sm:$0xff]
        %v2786 = vld [vmem:[%s252 + $0x4d] sm:$0xff]
        %v2787 = vld [vmem:[%s252 + $0x55] sm:$0xff]
        %v2788 = vld [vmem:[%s252 + $0x5d] sm:$0xff]
        %v2789 = vld [vmem:[%s252 + $0x65] sm:$0xff]
        %v2790 = vld [vmem:[%s252 + $0x6d] sm:$0xff]
        %v2791 = vld [vmem:[%s252 + $0x75] sm:$0xff]
        %v2792 = vld [vmem:[%s252 + $0x7d] sm:$0xff]
        %v2793 = vld [vmem:[%s252 + $0x85] sm:$0xff]
        %v2794 = vld [vmem:[%s252 + $0x8d] sm:$0xff]
        %v2795 = vld [vmem:[%s252 + $0x95] sm:$0xff]
        %v2796 = vld [vmem:[%s252 + $0x9d] sm:$0xff]
        %v2797 = vld [vmem:[%s252 + $0xa5] sm:$0xff]
        %v2798 = vld [vmem:[%s252 + $0xad] sm:$0xff]
        %v2799 = vld [vmem:[%s252 + $0xb5] sm:$0xff]
        %v2800 = vld [vmem:[%s252 + $0xbd] sm:$0xff]
        %v2801 = vld [vmem:[%s252 + $0xc5] sm:$0xff]
        %v2802 = vld [vmem:[%s252 + $0xcd] sm:$0xff]
        %v2803 = vld [vmem:[%s252 + $0xd5] sm:$0xff]
        %v2804 = vld [vmem:[%s252 + $0xdd] sm:$0xff]
        %v2805 = vld [vmem:[%s252 + $0xe5] sm:$0xff]
        %v2806 = vld [vmem:[%s252 + $0xed] sm:$0xff]
        %v2807 = vld [vmem:[%s252 + $0xf5] sm:$0xff]
        %v2808 = vld [vmem:[%s252 + $0xfd] sm:$0xff]
        %v2809 = vld [vmem:[%s252 + $0x105] sm:$0xff]
        %v2810 = vld [vmem:[%s252 + $0x10d] sm:$0xff]
        %v2811 = vld [vmem:[%s252 + $0x115] sm:$0xff]
        %v2812 = vld [vmem:[%s252 + $0x11d] sm:$0xff]
        %v2813 = vld [vmem:[%s252 + $0x125] sm:$0xff]
        %v2814 = vld [vmem:[%s252 + $0x12d] sm:$0xff]
        %v2815 = vld [vmem:[%s252 + $0x135] sm:$0xff]
        %v2816 = vld [vmem:[%s252 + $0x13d] sm:$0xff]
        %v2817 = vld [vmem:[%s252 + $0x145] sm:$0xff]
        %v2818 = vld [vmem:[%s252 + $0x14d] sm:$0xff]
        %v2819 = vld [vmem:[%s252 + $0x155] sm:$0xff]
        %v2820 = vld [vmem:[%s252 + $0x15d] sm:$0xff]
        %v2821 = vld [vmem:[%s252 + $0x165] sm:$0xf]
        %v2822 = vpack.c.bf16 %v2782, %v2781
        %v2823 = vpack.c.bf16 %v2784, %v2783
        %v2824 = vpack.c.bf16 %v2786, %v2785
        %v2825 = vpack.c.bf16 %v2788, %v2787
        %v2826 = vpack.c.bf16 %v2790, %v2789
        %v2827 = vpack.c.bf16 %v2792, %v2791
        %v2828 = vpack.c.bf16 %v2794, %v2793
        %v2829 = vpack.c.bf16 %v2796, %v2795
        %v2830 = vpack.c.bf16 %v2798, %v2797
        %v2831 = vpack.c.bf16 %v2800, %v2799
        %v2832 = vpack.c.bf16 %v2802, %v2801
        %v2833 = vpack.c.bf16 %v2804, %v2803
        %v2834 = vpack.c.bf16 %v2806, %v2805
        %v2835 = vpack.c.bf16 %v2808, %v2807
        %v2836 = vpack.c.bf16 %v2810, %v2809
        %v2837 = vpack.c.bf16 %v2812, %v2811
        %v2838 = vpack.c.bf16 %v2814, %v2813
        %v2839 = vpack.c.bf16 %v2816, %v2815
        %v2840 = vpack.c.bf16 %v2818, %v2817
        %v2841 = vpack.c.bf16 %v2820, %v2819
        %v2842 = vpack.c.bf16 %v2821, %v2821
        %s2843 = scalar_lea.vmem %s2, 14
        %v2844 = vld [vmem:[%s2843] sm:$0x3]
        %v2846 = vsel %vm392, %v2822, 0
        %v2849 = vsel %vm392, %v2823, 0
        %v2852 = vsel %vm392, %v2824, 0
        %v2855 = vsel %vm392, %v2825, 0
        %v2858 = vsel %vm392, %v2826, 0
        %v2861 = vsel %vm392, %v2827, 0
        %v2864 = vsel %vm392, %v2828, 0
        %v2867 = vsel %vm392, %v2829, 0
        %v2870 = vsel %vm392, %v2830, 0
        %v2873 = vsel %vm392, %v2831, 0
        %v2876 = vsel %vm392, %v2832, 0
        %v2879 = vsel %vm392, %v2833, 0
        %v2882 = vsel %vm392, %v2834, 0
        %v2885 = vsel %vm392, %v2835, 0
        %v2888 = vsel %vm392, %v2836, 0
        %v2891 = vsel %vm392, %v2837, 0
        %v2894 = vsel %vm392, %v2838, 0
        %v2897 = vsel %vm392, %v2839, 0
        %v2900 = vsel %vm392, %v2840, 0
        %v2903 = vsel %vm392, %v2841, 0
        %v2906 = vsel %vm392, %v2842, 0
        %v2909 = vsel %vm456, %v2844, 0
        %2911 = vmatprep.subr.bf16.mxu0 0
        %2912 = vmatpush1.bf16.msra.mxu0 %v2909
        %2913 = vmatprep.subr.bf16.mxu0 0
        %2914 = vmatpush1.bf16.msra.mxu0 0
        %2915 = vmatprep.subr.bf16.mxu0 0
        %2916 = vmatpush1.bf16.msra.mxu0 0
        %2917 = vmatprep.subr.bf16.mxu0 0
        %2918 = vmatpush1.bf16.msra.mxu0 0
        %2919 = vmatprep.subr.bf16.mxu0 0
        %2920 = vmatpush1.bf16.msra.mxu0 0
        %2921 = vmatprep.subr.bf16.mxu0 0
        %2922 = vmatpush1.bf16.msra.mxu0 0
        %2923 = vmatprep.subr.bf16.mxu0 0
        %2924 = vmatpush1.bf16.msra.mxu0 0
        %2925 = vmatprep.subr.bf16.mxu0 0
        %2926 = vmatpush1.bf16.msra.mxu0 0
        %2927 = vmatprep.subr.bf16.mxu0 0
        %2928 = vmatpush1.bf16.msra.mxu0 0
        %2929 = vmatprep.subr.bf16.mxu0 0
        %2930 = vmatpush1.bf16.msra.mxu0 0
        %2931 = vmatprep.subr.bf16.mxu0 0
        %2932 = vmatpush1.bf16.msra.mxu0 0
        %2933 = vmatprep.subr.bf16.mxu0 0
        %2934 = vmatpush1.bf16.msra.mxu0 0
        %2935 = vmatprep.subr.bf16.mxu0 0
        %2936 = vmatpush1.bf16.msra.mxu0 0
        %2937 = vmatprep.subr.bf16.mxu0 0
        %2938 = vmatpush1.bf16.msra.mxu0 0
        %2939 = vmatprep.subr.bf16.mxu0 0
        %2940 = vmatpush1.bf16.msra.mxu0 0
        %2941 = vmatprep.subr.bf16.mxu0 0
        %2942 = vmatpush1.bf16.msra.mxu0 0
        %2943 = vmatprep.mubr.bf16.mxu0 0
        %2944 = vmatmul.mubr.bf16.gmra.mrb[0].mxu0 %v2846
        %v2945 = vpop.f32.mrb[0].mxu0
        %v2946 = vadd.f32 0.0, %v2945
        %v2947 = vpop.f32.mrb[0].mxu0
        %v2948 = vpop.f32.mrb[0].mxu0
        %v2949 = vadd.f32 0.0, %v2948
        %v2950 = vpop.f32.mrb[0].mxu0
        %2951 = vmatprep.mubr.bf16.mxu0 0
        %2952 = vmatmul.mubr.bf16.gmra.mrb[0].mxu0 %v2849
        %v2953 = vpop.f32.mrb[0].mxu0
        %v2954 = vadd.f32 0.0, %v2953
        %v2955 = vpop.f32.mrb[0].mxu0
        %v2956 = vpop.f32.mrb[0].mxu0
        %v2957 = vadd.f32 0.0, %v2956
        %v2958 = vpop.f32.mrb[0].mxu0
        %2959 = vmatprep.mubr.bf16.mxu0 0
        %2960 = vmatmul.mubr.bf16.gmra.mrb[0].mxu0 %v2852
        %v2961 = vpop.f32.mrb[0].mxu0
        %v2962 = vadd.f32 0.0, %v2961
        %v2963 = vpop.f32.mrb[0].mxu0
        %v2964 = vpop.f32.mrb[0].mxu0
        %v2965 = vadd.f32 0.0, %v2964
        %v2966 = vpop.f32.mrb[0].mxu0
        %2967 = vmatprep.mubr.bf16.mxu0 0
        %2968 = vmatmul.mubr.bf16.gmra.mrb[0].mxu0 %v2855
        %v2969 = vpop.f32.mrb[0].mxu0
        %v2970 = vadd.f32 0.0, %v2969
        %v2971 = vpop.f32.mrb[0].mxu0
        %v2972 = vpop.f32.mrb[0].mxu0
        %v2973 = vadd.f32 0.0, %v2972
        %v2974 = vpop.f32.mrb[0].mxu0
        %2975 = vmatprep.mubr.bf16.mxu0 0
        %2976 = vmatmul.mubr.bf16.gmra.mrb[0].mxu0 %v2858
        %v2977 = vpop.f32.mrb[0].mxu0
        %v2978 = vadd.f32 0.0, %v2977
        %v2979 = vpop.f32.mrb[0].mxu0
        %v2980 = vpop.f32.mrb[0].mxu0
        %v2981 = vadd.f32 0.0, %v2980
        %v2982 = vpop.f32.mrb[0].mxu0
        %2983 = vmatprep.mubr.bf16.mxu0 0
        %2984 = vmatmul.mubr.bf16.gmra.mrb[0].mxu0 %v2861
        %v2985 = vpop.f32.mrb[0].mxu0
        %v2986 = vadd.f32 0.0, %v2985
        %v2987 = vpop.f32.mrb[0].mxu0
        %v2988 = vpop.f32.mrb[0].mxu0
        %v2989 = vadd.f32 0.0, %v2988
        %v2990 = vpop.f32.mrb[0].mxu0
        %2991 = vmatprep.mubr.bf16.mxu0 0
        %2992 = vmatmul.mubr.bf16.gmra.mrb[0].mxu0 %v2864
        %v2993 = vpop.f32.mrb[0].mxu0
        %v2994 = vadd.f32 0.0, %v2993
        %v2995 = vpop.f32.mrb[0].mxu0
        %v2996 = vpop.f32.mrb[0].mxu0
        %v2997 = vadd.f32 0.0, %v2996
        %v2998 = vpop.f32.mrb[0].mxu0
        %2999 = vmatprep.mubr.bf16.mxu0 0
        %3000 = vmatmul.mubr.bf16.gmra.mrb[0].mxu0 %v2867
        %v3001 = vpop.f32.mrb[0].mxu0
        %v3002 = vadd.f32 0.0, %v3001
        %v3003 = vpop.f32.mrb[0].mxu0
        %v3004 = vpop.f32.mrb[0].mxu0
        %v3005 = vadd.f32 0.0, %v3004
        %v3006 = vpop.f32.mrb[0].mxu0
        %3007 = vmatprep.mubr.bf16.mxu0 0
        %3008 = vmatmul.mubr.bf16.gmra.mrb[0].mxu0 %v2870
        %v3009 = vpop.f32.mrb[0].mxu0
        %v3010 = vadd.f32 0.0, %v3009
        %v3011 = vpop.f32.mrb[0].mxu0
        %v3012 = vpop.f32.mrb[0].mxu0
        %v3013 = vadd.f32 0.0, %v3012
        %v3014 = vpop.f32.mrb[0].mxu0
        %3015 = vmatprep.mubr.bf16.mxu0 0
        %3016 = vmatmul.mubr.bf16.gmra.mrb[0].mxu0 %v2873
        %v3017 = vpop.f32.mrb[0].mxu0
        %v3018 = vadd.f32 0.0, %v3017
        %v3019 = vpop.f32.mrb[0].mxu0
        %v3020 = vpop.f32.mrb[0].mxu0
        %v3021 = vadd.f32 0.0, %v3020
        %v3022 = vpop.f32.mrb[0].mxu0
        %3023 = vmatprep.mubr.bf16.mxu0 0
        %3024 = vmatmul.mubr.bf16.gmra.mrb[0].mxu0 %v2876
        %v3025 = vpop.f32.mrb[0].mxu0
        %v3026 = vadd.f32 0.0, %v3025
        %v3027 = vpop.f32.mrb[0].mxu0
        %v3028 = vpop.f32.mrb[0].mxu0
        %v3029 = vadd.f32 0.0, %v3028
        %v3030 = vpop.f32.mrb[0].mxu0
        %3031 = vmatprep.mubr.bf16.mxu0 0
        %3032 = vmatmul.mubr.bf16.gmra.mrb[0].mxu0 %v2879
        %v3033 = vpop.f32.mrb[0].mxu0
        %v3034 = vadd.f32 0.0, %v3033
        %v3035 = vpop.f32.mrb[0].mxu0
        %v3036 = vpop.f32.mrb[0].mxu0
        %v3037 = vadd.f32 0.0, %v3036
        %v3038 = vpop.f32.mrb[0].mxu0
        %3039 = vmatprep.mubr.bf16.mxu0 0
        %3040 = vmatmul.mubr.bf16.gmra.mrb[0].mxu0 %v2882
        %v3041 = vpop.f32.mrb[0].mxu0
        %v3042 = vadd.f32 0.0, %v3041
        %v3043 = vpop.f32.mrb[0].mxu0
        %v3044 = vpop.f32.mrb[0].mxu0
        %v3045 = vadd.f32 0.0, %v3044
        %v3046 = vpop.f32.mrb[0].mxu0
        %3047 = vmatprep.mubr.bf16.mxu0 0
        %3048 = vmatmul.mubr.bf16.gmra.mrb[0].mxu0 %v2885
        %v3049 = vpop.f32.mrb[0].mxu0
        %v3050 = vadd.f32 0.0, %v3049
        %v3051 = vpop.f32.mrb[0].mxu0
        %v3052 = vpop.f32.mrb[0].mxu0
        %v3053 = vadd.f32 0.0, %v3052
        %v3054 = vpop.f32.mrb[0].mxu0
        %3055 = vmatprep.mubr.bf16.mxu0 0
        %3056 = vmatmul.mubr.bf16.gmra.mrb[0].mxu0 %v2888
        %v3057 = vpop.f32.mrb[0].mxu0
        %v3058 = vadd.f32 0.0, %v3057
        %v3059 = vpop.f32.mrb[0].mxu0
        %v3060 = vpop.f32.mrb[0].mxu0
        %v3061 = vadd.f32 0.0, %v3060
        %v3062 = vpop.f32.mrb[0].mxu0
        %3063 = vmatprep.mubr.bf16.mxu0 0
        %3064 = vmatmul.mubr.bf16.gmra.mrb[0].mxu0 %v2891
        %v3065 = vpop.f32.mrb[0].mxu0
        %v3066 = vadd.f32 0.0, %v3065
        %v3067 = vpop.f32.mrb[0].mxu0
        %v3068 = vpop.f32.mrb[0].mxu0
        %v3069 = vadd.f32 0.0, %v3068
        %v3070 = vpop.f32.mrb[0].mxu0
        %3071 = vmatprep.mubr.bf16.mxu0 0
        %3072 = vmatmul.mubr.bf16.gmra.mrb[0].mxu0 %v2894
        %v3073 = vpop.f32.mrb[0].mxu0
        %v3074 = vadd.f32 0.0, %v3073
        %v3075 = vpop.f32.mrb[0].mxu0
        %v3076 = vpop.f32.mrb[0].mxu0
        %v3077 = vadd.f32 0.0, %v3076
        %v3078 = vpop.f32.mrb[0].mxu0
        %3079 = vmatprep.mubr.bf16.mxu0 0
        %3080 = vmatmul.mubr.bf16.gmra.mrb[0].mxu0 %v2897
        %v3081 = vpop.f32.mrb[0].mxu0
        %v3082 = vadd.f32 0.0, %v3081
        %v3083 = vpop.f32.mrb[0].mxu0
        %v3084 = vpop.f32.mrb[0].mxu0
        %v3085 = vadd.f32 0.0, %v3084
        %v3086 = vpop.f32.mrb[0].mxu0
        %3087 = vmatprep.mubr.bf16.mxu0 0
        %3088 = vmatmul.mubr.bf16.gmra.mrb[0].mxu0 %v2900
        %v3089 = vpop.f32.mrb[0].mxu0
        %v3090 = vadd.f32 0.0, %v3089
        %v3091 = vpop.f32.mrb[0].mxu0
        %v3092 = vpop.f32.mrb[0].mxu0
        %v3093 = vadd.f32 0.0, %v3092
        %v3094 = vpop.f32.mrb[0].mxu0
        %3095 = vmatprep.mubr.bf16.mxu0 0
        %3096 = vmatmul.mubr.bf16.gmra.mrb[0].mxu0 %v2903
        %v3097 = vpop.f32.mrb[0].mxu0
        %v3098 = vadd.f32 0.0, %v3097
        %v3099 = vpop.f32.mrb[0].mxu0
        %v3100 = vpop.f32.mrb[0].mxu0
        %v3101 = vadd.f32 0.0, %v3100
        %v3102 = vpop.f32.mrb[0].mxu0
        %3103 = vmatprep.mubr.bf16.mxu0 0
        %3104 = vmatmul.mubr.bf16.gmra.mrb[0].mxu0 %v2906
        %v3105 = vpop.f32.mrb[0].mxu0
        %v3106 = vadd.f32 0.0, %v3105
        %v3107 = vpop.f32.mrb[0].mxu0
        %v3108 = vpop.f32.mrb[0].mxu0
        %v3109 = vpop.f32.mrb[0].mxu0
        %3110 = vdwg.mxu0
        %v3111 = vadd.f32 %v2740, %v2946
        %v3112 = vadd.f32 %v2741, %v2949
        %v3113 = vadd.f32 %v2742, %v2954
        %v3114 = vadd.f32 %v2743, %v2957
        %v3115 = vadd.f32 %v2744, %v2962
        %v3116 = vadd.f32 %v2745, %v2965
        %v3117 = vadd.f32 %v2746, %v2970
        %v3118 = vadd.f32 %v2747, %v2973
        %v3119 = vadd.f32 %v2748, %v2978
        %v3120 = vadd.f32 %v2749, %v2981
        %v3121 = vadd.f32 %v2750, %v2986
        %v3122 = vadd.f32 %v2751, %v2989
        %v3123 = vadd.f32 %v2752, %v2994
        %v3124 = vadd.f32 %v2753, %v2997
        %v3125 = vadd.f32 %v2754, %v3002
        %v3126 = vadd.f32 %v2755, %v3005
        %v3127 = vadd.f32 %v2756, %v3010
        %v3128 = vadd.f32 %v2757, %v3013
        %v3129 = vadd.f32 %v2758, %v3018
        %v3130 = vadd.f32 %v2759, %v3021
        %v3131 = vadd.f32 %v2760, %v3026
        %v3132 = vadd.f32 %v2761, %v3029
        %v3133 = vadd.f32 %v2762, %v3034
        %v3134 = vadd.f32 %v2763, %v3037
        %v3135 = vadd.f32 %v2764, %v3042
        %v3136 = vadd.f32 %v2765, %v3045
        %v3137 = vadd.f32 %v2766, %v3050
        %v3138 = vadd.f32 %v2767, %v3053
        %v3139 = vadd.f32 %v2768, %v3058
        %v3140 = vadd.f32 %v2769, %v3061
        %v3141 = vadd.f32 %v2770, %v3066
        %v3142 = vadd.f32 %v2771, %v3069
        %v3143 = vadd.f32 %v2772, %v3074
        %v3144 = vadd.f32 %v2773, %v3077
        %v3145 = vadd.f32 %v2774, %v3082
        %v3146 = vadd.f32 %v2775, %v3085
        %v3147 = vadd.f32 %v2776, %v3090
        %v3148 = vadd.f32 %v2777, %v3093
        %v3149 = vadd.f32 %v2778, %v3098
        %v3150 = vadd.f32 %v2779, %v3101
        %v3151 = vadd.f32 %v2780, %v3106
        %v3152 = vld [vmem:[%s252 + $0x26] sm:$0xff]
        %v3153 = vld [vmem:[%s252 + $0x2e] sm:$0xff]
        %v3154 = vld [vmem:[%s252 + $0x36] sm:$0xff]
        %v3155 = vld [vmem:[%s252 + $0x3e] sm:$0xff]
        %v3156 = vld [vmem:[%s252 + $0x46] sm:$0xff]
        %v3157 = vld [vmem:[%s252 + $0x4e] sm:$0xff]
        %v3158 = vld [vmem:[%s252 + $0x56] sm:$0xff]
        %v3159 = vld [vmem:[%s252 + $0x5e] sm:$0xff]
        %v3160 = vld [vmem:[%s252 + $0x66] sm:$0xff]
        %v3161 = vld [vmem:[%s252 + $0x6e] sm:$0xff]
        %v3162 = vld [vmem:[%s252 + $0x76] sm:$0xff]
        %v3163 = vld [vmem:[%s252 + $0x7e] sm:$0xff]
        %v3164 = vld [vmem:[%s252 + $0x86] sm:$0xff]
        %v3165 = vld [vmem:[%s252 + $0x8e] sm:$0xff]
        %v3166 = vld [vmem:[%s252 + $0x96] sm:$0xff]
        %v3167 = vld [vmem:[%s252 + $0x9e] sm:$0xff]
        %v3168 = vld [vmem:[%s252 + $0xa6] sm:$0xff]
        %v3169 = vld [vmem:[%s252 + $0xae] sm:$0xff]
        %v3170 = vld [vmem:[%s252 + $0xb6] sm:$0xff]
        %v3171 = vld [vmem:[%s252 + $0xbe] sm:$0xff]
        %v3172 = vld [vmem:[%s252 + $0xc6] sm:$0xff]
        %v3173 = vld [vmem:[%s252 + $0xce] sm:$0xff]
        %v3174 = vld [vmem:[%s252 + $0xd6] sm:$0xff]
        %v3175 = vld [vmem:[%s252 + $0xde] sm:$0xff]
        %v3176 = vld [vmem:[%s252 + $0xe6] sm:$0xff]
        %v3177 = vld [vmem:[%s252 + $0xee] sm:$0xff]
        %v3178 = vld [vmem:[%s252 + $0xf6] sm:$0xff]
        %v3179 = vld [vmem:[%s252 + $0xfe] sm:$0xff]
        %v3180 = vld [vmem:[%s252 + $0x106] sm:$0xff]
        %v3181 = vld [vmem:[%s252 + $0x10e] sm:$0xff]
        %v3182 = vld [vmem:[%s252 + $0x116] sm:$0xff]
        %v3183 = vld [vmem:[%s252 + $0x11e] sm:$0xff]
        %v3184 = vld [vmem:[%s252 + $0x126] sm:$0xff]
        %v3185 = vld [vmem:[%s252 + $0x12e] sm:$0xff]
        %v3186 = vld [vmem:[%s252 + $0x136] sm:$0xff]
        %v3187 = vld [vmem:[%s252 + $0x13e] sm:$0xff]
        %v3188 = vld [vmem:[%s252 + $0x146] sm:$0xff]
        %v3189 = vld [vmem:[%s252 + $0x14e] sm:$0xff]
        %v3190 = vld [vmem:[%s252 + $0x156] sm:$0xff]
        %v3191 = vld [vmem:[%s252 + $0x15e] sm:$0xff]
        %v3192 = vld [vmem:[%s252 + $0x166] sm:$0xf]
        %v3193 = vpack.c.bf16 %v3153, %v3152
        %v3194 = vpack.c.bf16 %v3155, %v3154
        %v3195 = vpack.c.bf16 %v3157, %v3156
        %v3196 = vpack.c.bf16 %v3159, %v3158
        %v3197 = vpack.c.bf16 %v3161, %v3160
        %v3198 = vpack.c.bf16 %v3163, %v3162
        %v3199 = vpack.c.bf16 %v3165, %v3164
        %v3200 = vpack.c.bf16 %v3167, %v3166
        %v3201 = vpack.c.bf16 %v3169, %v3168
        %v3202 = vpack.c.bf16 %v3171, %v3170
        %v3203 = vpack.c.bf16 %v3173, %v3172
        %v3204 = vpack.c.bf16 %v3175, %v3174
        %v3205 = vpack.c.bf16 %v3177, %v3176
        %v3206 = vpack.c.bf16 %v3179, %v3178
        %v3207 = vpack.c.bf16 %v3181, %v3180
        %v3208 = vpack.c.bf16 %v3183, %v3182
        %v3209 = vpack.c.bf16 %v3185, %v3184
        %v3210 = vpack.c.bf16 %v3187, %v3186
        %v3211 = vpack.c.bf16 %v3189, %v3188
        %v3212 = vpack.c.bf16 %v3191, %v3190
        %v3213 = vpack.c.bf16 %v3192, %v3192
        %s3214 = scalar_lea.vmem %s2, 16
        %v3215 = vld [vmem:[%s3214] sm:$0x3]
        %v3217 = vsel %vm392, %v3193, 0
        %v3220 = vsel %vm392, %v3194, 0
        %v3223 = vsel %vm392, %v3195, 0
        %v3226 = vsel %vm392, %v3196, 0
        %v3229 = vsel %vm392, %v3197, 0
        %v3232 = vsel %vm392, %v3198, 0
        %v3235 = vsel %vm392, %v3199, 0
        %v3238 = vsel %vm392, %v3200, 0
        %v3241 = vsel %vm392, %v3201, 0
        %v3244 = vsel %vm392, %v3202, 0
        %v3247 = vsel %vm392, %v3203, 0
        %v3250 = vsel %vm392, %v3204, 0
        %v3253 = vsel %vm392, %v3205, 0
        %v3256 = vsel %vm392, %v3206, 0
        %v3259 = vsel %vm392, %v3207, 0
        %v3262 = vsel %vm392, %v3208, 0
        %v3265 = vsel %vm392, %v3209, 0
        %v3268 = vsel %vm392, %v3210, 0
        %v3271 = vsel %vm392, %v3211, 0
        %v3274 = vsel %vm392, %v3212, 0
        %v3277 = vsel %vm392, %v3213, 0
        %v3280 = vsel %vm456, %v3215, 0
        %3282 = vmatprep.subr.bf16.mxu0 0
        %3283 = vmatpush1.bf16.msra.mxu0 %v3280
        %3284 = vmatprep.subr.bf16.mxu0 0
        %3285 = vmatpush1.bf16.msra.mxu0 0
        %3286 = vmatprep.subr.bf16.mxu0 0
        %3287 = vmatpush1.bf16.msra.mxu0 0
        %3288 = vmatprep.subr.bf16.mxu0 0
        %3289 = vmatpush1.bf16.msra.mxu0 0
        %3290 = vmatprep.subr.bf16.mxu0 0
        %3291 = vmatpush1.bf16.msra.mxu0 0
        %3292 = vmatprep.subr.bf16.mxu0 0
        %3293 = vmatpush1.bf16.msra.mxu0 0
        %3294 = vmatprep.subr.bf16.mxu0 0
        %3295 = vmatpush1.bf16.msra.mxu0 0
        %3296 = vmatprep.subr.bf16.mxu0 0
        %3297 = vmatpush1.bf16.msra.mxu0 0
        %3298 = vmatprep.subr.bf16.mxu0 0
        %3299 = vmatpush1.bf16.msra.mxu0 0
        %3300 = vmatprep.subr.bf16.mxu0 0
        %3301 = vmatpush1.bf16.msra.mxu0 0
        %3302 = vmatprep.subr.bf16.mxu0 0
        %3303 = vmatpush1.bf16.msra.mxu0 0
        %3304 = vmatprep.subr.bf16.mxu0 0
        %3305 = vmatpush1.bf16.msra.mxu0 0
        %3306 = vmatprep.subr.bf16.mxu0 0
        %3307 = vmatpush1.bf16.msra.mxu0 0
        %3308 = vmatprep.subr.bf16.mxu0 0
        %3309 = vmatpush1.bf16.msra.mxu0 0
        %3310 = vmatprep.subr.bf16.mxu0 0
        %3311 = vmatpush1.bf16.msra.mxu0 0
        %3312 = vmatprep.subr.bf16.mxu0 0
        %3313 = vmatpush1.bf16.msra.mxu0 0
        %3314 = vmatprep.mubr.bf16.mxu0 0
        %3315 = vmatmul.mubr.bf16.gmra.mrb[0].mxu0 %v3217
        %v3316 = vpop.f32.mrb[0].mxu0
        %v3317 = vadd.f32 0.0, %v3316
        %v3318 = vpop.f32.mrb[0].mxu0
        %v3319 = vpop.f32.mrb[0].mxu0
        %v3320 = vadd.f32 0.0, %v3319
        %v3321 = vpop.f32.mrb[0].mxu0
        %3322 = vmatprep.mubr.bf16.mxu0 0
        %3323 = vmatmul.mubr.bf16.gmra.mrb[0].mxu0 %v3220
        %v3324 = vpop.f32.mrb[0].mxu0
        %v3325 = vadd.f32 0.0, %v3324
        %v3326 = vpop.f32.mrb[0].mxu0
        %v3327 = vpop.f32.mrb[0].mxu0
        %v3328 = vadd.f32 0.0, %v3327
        %v3329 = vpop.f32.mrb[0].mxu0
        %3330 = vmatprep.mubr.bf16.mxu0 0
        %3331 = vmatmul.mubr.bf16.gmra.mrb[0].mxu0 %v3223
        %v3332 = vpop.f32.mrb[0].mxu0
        %v3333 = vadd.f32 0.0, %v3332
        %v3334 = vpop.f32.mrb[0].mxu0
        %v3335 = vpop.f32.mrb[0].mxu0
        %v3336 = vadd.f32 0.0, %v3335
        %v3337 = vpop.f32.mrb[0].mxu0
        %3338 = vmatprep.mubr.bf16.mxu0 0
        %3339 = vmatmul.mubr.bf16.gmra.mrb[0].mxu0 %v3226
        %v3340 = vpop.f32.mrb[0].mxu0
        %v3341 = vadd.f32 0.0, %v3340
        %v3342 = vpop.f32.mrb[0].mxu0
        %v3343 = vpop.f32.mrb[0].mxu0
        %v3344 = vadd.f32 0.0, %v3343
        %v3345 = vpop.f32.mrb[0].mxu0
        %3346 = vmatprep.mubr.bf16.mxu0 0
        %3347 = vmatmul.mubr.bf16.gmra.mrb[0].mxu0 %v3229
        %v3348 = vpop.f32.mrb[0].mxu0
        %v3349 = vadd.f32 0.0, %v3348
        %v3350 = vpop.f32.mrb[0].mxu0
        %v3351 = vpop.f32.mrb[0].mxu0
        %v3352 = vadd.f32 0.0, %v3351
        %v3353 = vpop.f32.mrb[0].mxu0
        %3354 = vmatprep.mubr.bf16.mxu0 0
        %3355 = vmatmul.mubr.bf16.gmra.mrb[0].mxu0 %v3232
        %v3356 = vpop.f32.mrb[0].mxu0
        %v3357 = vadd.f32 0.0, %v3356
        %v3358 = vpop.f32.mrb[0].mxu0
        %v3359 = vpop.f32.mrb[0].mxu0
        %v3360 = vadd.f32 0.0, %v3359
        %v3361 = vpop.f32.mrb[0].mxu0
        %3362 = vmatprep.mubr.bf16.mxu0 0
        %3363 = vmatmul.mubr.bf16.gmra.mrb[0].mxu0 %v3235
        %v3364 = vpop.f32.mrb[0].mxu0
        %v3365 = vadd.f32 0.0, %v3364
        %v3366 = vpop.f32.mrb[0].mxu0
        %v3367 = vpop.f32.mrb[0].mxu0
        %v3368 = vadd.f32 0.0, %v3367
        %v3369 = vpop.f32.mrb[0].mxu0
        %3370 = vmatprep.mubr.bf16.mxu0 0
        %3371 = vmatmul.mubr.bf16.gmra.mrb[0].mxu0 %v3238
        %v3372 = vpop.f32.mrb[0].mxu0
        %v3373 = vadd.f32 0.0, %v3372
        %v3374 = vpop.f32.mrb[0].mxu0
        %v3375 = vpop.f32.mrb[0].mxu0
        %v3376 = vadd.f32 0.0, %v3375
        %v3377 = vpop.f32.mrb[0].mxu0
        %3378 = vmatprep.mubr.bf16.mxu0 0
        %3379 = vmatmul.mubr.bf16.gmra.mrb[0].mxu0 %v3241
        %v3380 = vpop.f32.mrb[0].mxu0
        %v3381 = vadd.f32 0.0, %v3380
        %v3382 = vpop.f32.mrb[0].mxu0
        %v3383 = vpop.f32.mrb[0].mxu0
        %v3384 = vadd.f32 0.0, %v3383
        %v3385 = vpop.f32.mrb[0].mxu0
        %3386 = vmatprep.mubr.bf16.mxu0 0
        %3387 = vmatmul.mubr.bf16.gmra.mrb[0].mxu0 %v3244
        %v3388 = vpop.f32.mrb[0].mxu0
        %v3389 = vadd.f32 0.0, %v3388
        %v3390 = vpop.f32.mrb[0].mxu0
        %v3391 = vpop.f32.mrb[0].mxu0
        %v3392 = vadd.f32 0.0, %v3391
        %v3393 = vpop.f32.mrb[0].mxu0
        %3394 = vmatprep.mubr.bf16.mxu0 0
        %3395 = vmatmul.mubr.bf16.gmra.mrb[0].mxu0 %v3247
        %v3396 = vpop.f32.mrb[0].mxu0
        %v3397 = vadd.f32 0.0, %v3396
        %v3398 = vpop.f32.mrb[0].mxu0
        %v3399 = vpop.f32.mrb[0].mxu0
        %v3400 = vadd.f32 0.0, %v3399
        %v3401 = vpop.f32.mrb[0].mxu0
        %3402 = vmatprep.mubr.bf16.mxu0 0
        %3403 = vmatmul.mubr.bf16.gmra.mrb[0].mxu0 %v3250
        %v3404 = vpop.f32.mrb[0].mxu0
        %v3405 = vadd.f32 0.0, %v3404
        %v3406 = vpop.f32.mrb[0].mxu0
        %v3407 = vpop.f32.mrb[0].mxu0
        %v3408 = vadd.f32 0.0, %v3407
        %v3409 = vpop.f32.mrb[0].mxu0
        %3410 = vmatprep.mubr.bf16.mxu0 0
        %3411 = vmatmul.mubr.bf16.gmra.mrb[0].mxu0 %v3253
        %v3412 = vpop.f32.mrb[0].mxu0
        %v3413 = vadd.f32 0.0, %v3412
        %v3414 = vpop.f32.mrb[0].mxu0
        %v3415 = vpop.f32.mrb[0].mxu0
        %v3416 = vadd.f32 0.0, %v3415
        %v3417 = vpop.f32.mrb[0].mxu0
        %3418 = vmatprep.mubr.bf16.mxu0 0
        %3419 = vmatmul.mubr.bf16.gmra.mrb[0].mxu0 %v3256
        %v3420 = vpop.f32.mrb[0].mxu0
        %v3421 = vadd.f32 0.0, %v3420
        %v3422 = vpop.f32.mrb[0].mxu0
        %v3423 = vpop.f32.mrb[0].mxu0
        %v3424 = vadd.f32 0.0, %v3423
        %v3425 = vpop.f32.mrb[0].mxu0
        %3426 = vmatprep.mubr.bf16.mxu0 0
        %3427 = vmatmul.mubr.bf16.gmra.mrb[0].mxu0 %v3259
        %v3428 = vpop.f32.mrb[0].mxu0
        %v3429 = vadd.f32 0.0, %v3428
        %v3430 = vpop.f32.mrb[0].mxu0
        %v3431 = vpop.f32.mrb[0].mxu0
        %v3432 = vadd.f32 0.0, %v3431
        %v3433 = vpop.f32.mrb[0].mxu0
        %3434 = vmatprep.mubr.bf16.mxu0 0
        %3435 = vmatmul.mubr.bf16.gmra.mrb[0].mxu0 %v3262
        %v3436 = vpop.f32.mrb[0].mxu0
        %v3437 = vadd.f32 0.0, %v3436
        %v3438 = vpop.f32.mrb[0].mxu0
        %v3439 = vpop.f32.mrb[0].mxu0
        %v3440 = vadd.f32 0.0, %v3439
        %v3441 = vpop.f32.mrb[0].mxu0
        %3442 = vmatprep.mubr.bf16.mxu0 0
        %3443 = vmatmul.mubr.bf16.gmra.mrb[0].mxu0 %v3265
        %v3444 = vpop.f32.mrb[0].mxu0
        %v3445 = vadd.f32 0.0, %v3444
        %v3446 = vpop.f32.mrb[0].mxu0
        %v3447 = vpop.f32.mrb[0].mxu0
        %v3448 = vadd.f32 0.0, %v3447
        %v3449 = vpop.f32.mrb[0].mxu0
        %3450 = vmatprep.mubr.bf16.mxu0 0
        %3451 = vmatmul.mubr.bf16.gmra.mrb[0].mxu0 %v3268
        %v3452 = vpop.f32.mrb[0].mxu0
        %v3453 = vadd.f32 0.0, %v3452
        %v3454 = vpop.f32.mrb[0].mxu0
        %v3455 = vpop.f32.mrb[0].mxu0
        %v3456 = vadd.f32 0.0, %v3455
        %v3457 = vpop.f32.mrb[0].mxu0
        %3458 = vmatprep.mubr.bf16.mxu0 0
        %3459 = vmatmul.mubr.bf16.gmra.mrb[0].mxu0 %v3271
        %v3460 = vpop.f32.mrb[0].mxu0
        %v3461 = vadd.f32 0.0, %v3460
        %v3462 = vpop.f32.mrb[0].mxu0
        %v3463 = vpop.f32.mrb[0].mxu0
        %v3464 = vadd.f32 0.0, %v3463
        %v3465 = vpop.f32.mrb[0].mxu0
        %3466 = vmatprep.mubr.bf16.mxu0 0
        %3467 = vmatmul.mubr.bf16.gmra.mrb[0].mxu0 %v3274
        %v3468 = vpop.f32.mrb[0].mxu0
        %v3469 = vadd.f32 0.0, %v3468
        %v3470 = vpop.f32.mrb[0].mxu0
        %v3471 = vpop.f32.mrb[0].mxu0
        %v3472 = vadd.f32 0.0, %v3471
        %v3473 = vpop.f32.mrb[0].mxu0
        %3474 = vmatprep.mubr.bf16.mxu0 0
        %3475 = vmatmul.mubr.bf16.gmra.mrb[0].mxu0 %v3277
        %v3476 = vpop.f32.mrb[0].mxu0
        %v3477 = vadd.f32 0.0, %v3476
        %v3478 = vpop.f32.mrb[0].mxu0
        %v3479 = vpop.f32.mrb[0].mxu0
        %v3480 = vpop.f32.mrb[0].mxu0
        %3481 = vdwg.mxu0
        %v3482 = vadd.f32 %v3111, %v3317
        %v3483 = vadd.f32 %v3112, %v3320
        %v3484 = vadd.f32 %v3113, %v3325
        %v3485 = vadd.f32 %v3114, %v3328
        %v3486 = vadd.f32 %v3115, %v3333
        %v3487 = vadd.f32 %v3116, %v3336
        %v3488 = vadd.f32 %v3117, %v3341
        %v3489 = vadd.f32 %v3118, %v3344
        %v3490 = vadd.f32 %v3119, %v3349
        %v3491 = vadd.f32 %v3120, %v3352
        %v3492 = vadd.f32 %v3121, %v3357
        %v3493 = vadd.f32 %v3122, %v3360
        %v3494 = vadd.f32 %v3123, %v3365
        %v3495 = vadd.f32 %v3124, %v3368
        %v3496 = vadd.f32 %v3125, %v3373
        %v3497 = vadd.f32 %v3126, %v3376
        %v3498 = vadd.f32 %v3127, %v3381
        %v3499 = vadd.f32 %v3128, %v3384
        %v3500 = vadd.f32 %v3129, %v3389
        %v3501 = vadd.f32 %v3130, %v3392
        %v3502 = vadd.f32 %v3131, %v3397
        %v3503 = vadd.f32 %v3132, %v3400
        %v3504 = vadd.f32 %v3133, %v3405
        %v3505 = vadd.f32 %v3134, %v3408
        %v3506 = vadd.f32 %v3135, %v3413
        %v3507 = vadd.f32 %v3136, %v3416
        %v3508 = vadd.f32 %v3137, %v3421
        %v3509 = vadd.f32 %v3138, %v3424
        %v3510 = vadd.f32 %v3139, %v3429
        %v3511 = vadd.f32 %v3140, %v3432
        %v3512 = vadd.f32 %v3141, %v3437
        %v3513 = vadd.f32 %v3142, %v3440
        %v3514 = vadd.f32 %v3143, %v3445
        %v3515 = vadd.f32 %v3144, %v3448
        %v3516 = vadd.f32 %v3145, %v3453
        %v3517 = vadd.f32 %v3146, %v3456
        %v3518 = vadd.f32 %v3147, %v3461
        %v3519 = vadd.f32 %v3148, %v3464
        %v3520 = vadd.f32 %v3149, %v3469
        %v3521 = vadd.f32 %v3150, %v3472
        %v3522 = vadd.f32 %v3151, %v3477
        %v3523 = vld [vmem:[%s3] sm:$0x1]
        %v3525 = vlaneseq
        %v3526 = vshrl.u32 %v3525, 7
        %v3527 = vsub.s32 0, %v3526
        %v3528 = vrot.slane %v3523, %v3527
        %v3530 = vadd.f32 %v3482, %v3528
        %v3531 = vadd.f32 %v3483, %v3528
        %v3532 = vadd.f32 %v3484, %v3528
        %v3533 = vadd.f32 %v3485, %v3528
        %v3534 = vadd.f32 %v3486, %v3528
        %v3535 = vadd.f32 %v3487, %v3528
        %v3536 = vadd.f32 %v3488, %v3528
        %v3537 = vadd.f32 %v3489, %v3528
        %v3538 = vadd.f32 %v3490, %v3528
        %v3539 = vadd.f32 %v3491, %v3528
        %v3540 = vadd.f32 %v3492, %v3528
        %v3541 = vadd.f32 %v3493, %v3528
        %v3542 = vadd.f32 %v3494, %v3528
        %v3543 = vadd.f32 %v3495, %v3528
        %v3544 = vadd.f32 %v3496, %v3528
        %v3545 = vadd.f32 %v3497, %v3528
        %v3546 = vadd.f32 %v3498, %v3528
        %v3547 = vadd.f32 %v3499, %v3528
        %v3548 = vadd.f32 %v3500, %v3528
        %v3549 = vadd.f32 %v3501, %v3528
        %v3550 = vadd.f32 %v3502, %v3528
        %v3551 = vadd.f32 %v3503, %v3528
        %v3552 = vadd.f32 %v3504, %v3528
        %v3553 = vadd.f32 %v3505, %v3528
        %v3554 = vadd.f32 %v3506, %v3528
        %v3555 = vadd.f32 %v3507, %v3528
        %v3556 = vadd.f32 %v3508, %v3528
        %v3557 = vadd.f32 %v3509, %v3528
        %v3558 = vadd.f32 %v3510, %v3528
        %v3559 = vadd.f32 %v3511, %v3528
        %v3560 = vadd.f32 %v3512, %v3528
        %v3561 = vadd.f32 %v3513, %v3528
        %v3562 = vadd.f32 %v3514, %v3528
        %v3563 = vadd.f32 %v3515, %v3528
        %v3564 = vadd.f32 %v3516, %v3528
        %v3565 = vadd.f32 %v3517, %v3528
        %v3566 = vadd.f32 %v3518, %v3528
        %v3567 = vadd.f32 %v3519, %v3528
        %v3568 = vadd.f32 %v3520, %v3528
        %v3569 = vadd.f32 %v3521, %v3528
        %v3570 = vadd.f32 %v3522, %v3528
        %v3571 = vmax.f32 %v3530, 0.0
        %v3572 = vmax.f32 %v3531, 0.0
        %v3573 = vmax.f32 %v3532, 0.0
        %v3574 = vmax.f32 %v3533, 0.0
        %v3575 = vmax.f32 %v3534, 0.0
        %v3576 = vmax.f32 %v3535, 0.0
        %v3577 = vmax.f32 %v3536, 0.0
        %v3578 = vmax.f32 %v3537, 0.0
        %v3579 = vmax.f32 %v3538, 0.0
        %v3580 = vmax.f32 %v3539, 0.0
        %v3581 = vmax.f32 %v3540, 0.0
        %v3582 = vmax.f32 %v3541, 0.0
        %v3583 = vmax.f32 %v3542, 0.0
        %v3584 = vmax.f32 %v3543, 0.0
        %v3585 = vmax.f32 %v3544, 0.0
        %v3586 = vmax.f32 %v3545, 0.0
        %v3587 = vmax.f32 %v3546, 0.0
        %v3588 = vmax.f32 %v3547, 0.0
        %v3589 = vmax.f32 %v3548, 0.0
        %v3590 = vmax.f32 %v3549, 0.0
        %v3591 = vmax.f32 %v3550, 0.0
        %v3592 = vmax.f32 %v3551, 0.0
        %v3593 = vmax.f32 %v3552, 0.0
        %v3594 = vmax.f32 %v3553, 0.0
        %v3595 = vmax.f32 %v3554, 0.0
        %v3596 = vmax.f32 %v3555, 0.0
        %v3597 = vmax.f32 %v3556, 0.0
        %v3598 = vmax.f32 %v3557, 0.0
        %v3599 = vmax.f32 %v3558, 0.0
        %v3600 = vmax.f32 %v3559, 0.0
        %v3601 = vmax.f32 %v3560, 0.0
        %v3602 = vmax.f32 %v3561, 0.0
        %v3603 = vmax.f32 %v3562, 0.0
        %v3604 = vmax.f32 %v3563, 0.0
        %v3605 = vmax.f32 %v3564, 0.0
        %v3606 = vmax.f32 %v3565, 0.0
        %v3607 = vmax.f32 %v3566, 0.0
        %v3608 = vmax.f32 %v3567, 0.0
        %v3609 = vmax.f32 %v3568, 0.0
        %v3610 = vmax.f32 %v3569, 0.0
        %v3611 = vmax.f32 %v3570, 0.0
        %v3612 = vpack.c.bf16 %v3572, %v3571
        %v3613 = vpack.c.bf16 %v3574, %v3573
        %v3614 = vpack.c.bf16 %v3576, %v3575
        %v3615 = vpack.c.bf16 %v3578, %v3577
        %v3616 = vpack.c.bf16 %v3580, %v3579
        %v3617 = vpack.c.bf16 %v3582, %v3581
        %v3618 = vpack.c.bf16 %v3584, %v3583
        %v3619 = vpack.c.bf16 %v3586, %v3585
        %v3620 = vpack.c.bf16 %v3588, %v3587
        %v3621 = vpack.c.bf16 %v3590, %v3589
        %v3622 = vpack.c.bf16 %v3592, %v3591
        %v3623 = vpack.c.bf16 %v3594, %v3593
        %v3624 = vpack.c.bf16 %v3596, %v3595
        %v3625 = vpack.c.bf16 %v3598, %v3597
        %v3626 = vpack.c.bf16 %v3600, %v3599
        %v3627 = vpack.c.bf16 %v3602, %v3601
        %v3628 = vpack.c.bf16 %v3604, %v3603
        %v3629 = vpack.c.bf16 %v3606, %v3605
        %v3630 = vpack.c.bf16 %v3608, %v3607
        %v3631 = vpack.c.bf16 %v3610, %v3609
        %v3632 = vpack.c.bf16 %v3611, %v3611
        %v3633 = vld [vmem:[%s4] sm:$0xf]
        %v3634 = vld [vmem:[%s4 + $0x4] sm:$0xf]
        %v3635 = vld [vmem:[%s4 + $0x8] sm:$0xf]
        %v3636 = vld [vmem:[%s4 + $0xc] sm:$0xf]
        %v3637 = vld [vmem:[%s5] sm:$0x1]
        %v3639 = vlaneseq
        %v3640 = vshrl.u32 %v3639, 7
        %v3641 = vsub.s32 0, %v3640
        %v3642 = vrot.slane %v3637, %v3641
        %v3648 = vunpack.c.l.b16 %v3633
        %v3649 = vunpack.c.l.b16 %v3634
        %v3650 = vunpack.c.l.b16 %v3635
        %v3651 = vunpack.c.l.b16 %v3636
        %v3652 = vpack.c.b16 %v3649, %v3648
        %v3653 = vpack.c.b16 %v3651, %v3650
        %vm3656 = vcmask 261120
        %v3658 = vsel %vm3656, %v3612, 0
        %v3661 = vsel %vm3656, %v3613, 0
        %v3664 = vsel %vm3656, %v3614, 0
        %v3667 = vsel %vm3656, %v3615, 0
        %v3670 = vsel %vm3656, %v3616, 0
        %v3673 = vsel %vm3656, %v3617, 0
        %v3676 = vsel %vm3656, %v3618, 0
        %v3679 = vsel %vm3656, %v3619, 0
        %v3682 = vsel %vm3656, %v3620, 0
        %v3685 = vsel %vm3656, %v3621, 0
        %v3688 = vsel %vm3656, %v3622, 0
        %v3691 = vsel %vm3656, %v3623, 0
        %v3694 = vsel %vm3656, %v3624, 0
        %v3697 = vsel %vm3656, %v3625, 0
        %v3700 = vsel %vm3656, %v3626, 0
        %v3703 = vsel %vm3656, %v3627, 0
        %v3706 = vsel %vm3656, %v3628, 0
        %v3709 = vsel %vm3656, %v3629, 0
        %v3712 = vsel %vm3656, %v3630, 0
        %v3715 = vsel %vm3656, %v3631, 0
        %v3718 = vsel %vm3656, %v3632, 0
        %3720 = vmatprep.subr.bf16.mxu0 0
        %3721 = vmatpush1.bf16.msra.mxu0 %v3652
        %3722 = vmatprep.subr.bf16.mxu0 0
        %3723 = vmatpush1.bf16.msra.mxu0 %v3653
        %3724 = vmatprep.subr.bf16.mxu0 0
        %3725 = vmatpush1.bf16.msra.mxu0 0
        %3726 = vmatprep.subr.bf16.mxu0 0
        %3727 = vmatpush1.bf16.msra.mxu0 0
        %3728 = vmatprep.subr.bf16.mxu0 0
        %3729 = vmatpush1.bf16.msra.mxu0 0
        %3730 = vmatprep.subr.bf16.mxu0 0
        %3731 = vmatpush1.bf16.msra.mxu0 0
        %3732 = vmatprep.subr.bf16.mxu0 0
        %3733 = vmatpush1.bf16.msra.mxu0 0
        %3734 = vmatprep.subr.bf16.mxu0 0
        %3735 = vmatpush1.bf16.msra.mxu0 0
        %3736 = vmatprep.subr.bf16.mxu0 0
        %3737 = vmatpush1.bf16.msra.mxu0 0
        %3738 = vmatprep.subr.bf16.mxu0 0
        %3739 = vmatpush1.bf16.msra.mxu0 0
        %3740 = vmatprep.subr.bf16.mxu0 0
        %3741 = vmatpush1.bf16.msra.mxu0 0
        %3742 = vmatprep.subr.bf16.mxu0 0
        %3743 = vmatpush1.bf16.msra.mxu0 0
        %3744 = vmatprep.subr.bf16.mxu0 0
        %3745 = vmatpush1.bf16.msra.mxu0 0
        %3746 = vmatprep.subr.bf16.mxu0 0
        %3747 = vmatpush1.bf16.msra.mxu0 0
        %3748 = vmatprep.subr.bf16.mxu0 0
        %3749 = vmatpush1.bf16.msra.mxu0 0
        %3750 = vmatprep.subr.bf16.mxu0 0
        %3751 = vmatpush1.bf16.msra.mxu0 0
        %3752 = vmatprep.mubr.bf16.mxu0 0
        %3753 = vmatmul.mubr.bf16.gmra.mrb[0].mxu0 %v3658
        %v3754 = vpop.f32.mrb[0].mxu0
        %v3755 = vadd.f32 %v3642, %v3754
        %v3756 = vpop.f32.mrb[0].mxu0
        %v3757 = vpop.f32.mrb[0].mxu0
        %v3758 = vadd.f32 %v3642, %v3757
        %v3759 = vpop.f32.mrb[0].mxu0
        %3760 = vmatprep.mubr.bf16.mxu0 0
        %3761 = vmatmul.mubr.bf16.gmra.mrb[0].mxu0 %v3661
        %v3762 = vpop.f32.mrb[0].mxu0
        %v3763 = vadd.f32 %v3642, %v3762
        %v3764 = vpop.f32.mrb[0].mxu0
        %v3765 = vpop.f32.mrb[0].mxu0
        %v3766 = vadd.f32 %v3642, %v3765
        %v3767 = vpop.f32.mrb[0].mxu0
        %3768 = vmatprep.mubr.bf16.mxu0 0
        %3769 = vmatmul.mubr.bf16.gmra.mrb[0].mxu0 %v3664
        %v3770 = vpop.f32.mrb[0].mxu0
        %v3771 = vadd.f32 %v3642, %v3770
        %v3772 = vpop.f32.mrb[0].mxu0
        %v3773 = vpop.f32.mrb[0].mxu0
        %v3774 = vadd.f32 %v3642, %v3773
        %v3775 = vpop.f32.mrb[0].mxu0
        %3776 = vmatprep.mubr.bf16.mxu0 0
        %3777 = vmatmul.mubr.bf16.gmra.mrb[0].mxu0 %v3667
        %v3778 = vpop.f32.mrb[0].mxu0
        %v3779 = vadd.f32 %v3642, %v3778
        %v3780 = vpop.f32.mrb[0].mxu0
        %v3781 = vpop.f32.mrb[0].mxu0
        %v3782 = vadd.f32 %v3642, %v3781
        %v3783 = vpop.f32.mrb[0].mxu0
        %3784 = vmatprep.mubr.bf16.mxu0 0
        %3785 = vmatmul.mubr.bf16.gmra.mrb[0].mxu0 %v3670
        %v3786 = vpop.f32.mrb[0].mxu0
        %v3787 = vadd.f32 %v3642, %v3786
        %v3788 = vpop.f32.mrb[0].mxu0
        %v3789 = vpop.f32.mrb[0].mxu0
        %v3790 = vadd.f32 %v3642, %v3789
        %v3791 = vpop.f32.mrb[0].mxu0
        %3792 = vmatprep.mubr.bf16.mxu0 0
        %3793 = vmatmul.mubr.bf16.gmra.mrb[0].mxu0 %v3673
        %v3794 = vpop.f32.mrb[0].mxu0
        %v3795 = vadd.f32 %v3642, %v3794
        %v3796 = vpop.f32.mrb[0].mxu0
        %v3797 = vpop.f32.mrb[0].mxu0
        %v3798 = vadd.f32 %v3642, %v3797
        %v3799 = vpop.f32.mrb[0].mxu0
        %3800 = vmatprep.mubr.bf16.mxu0 0
        %3801 = vmatmul.mubr.bf16.gmra.mrb[0].mxu0 %v3676
        %v3802 = vpop.f32.mrb[0].mxu0
        %v3803 = vadd.f32 %v3642, %v3802
        %v3804 = vpop.f32.mrb[0].mxu0
        %v3805 = vpop.f32.mrb[0].mxu0
        %v3806 = vadd.f32 %v3642, %v3805
        %v3807 = vpop.f32.mrb[0].mxu0
        %3808 = vmatprep.mubr.bf16.mxu0 0
        %3809 = vmatmul.mubr.bf16.gmra.mrb[0].mxu0 %v3679
        %v3810 = vpop.f32.mrb[0].mxu0
        %v3811 = vadd.f32 %v3642, %v3810
        %v3812 = vpop.f32.mrb[0].mxu0
        %v3813 = vpop.f32.mrb[0].mxu0
        %v3814 = vadd.f32 %v3642, %v3813
        %v3815 = vpop.f32.mrb[0].mxu0
        %3816 = vmatprep.mubr.bf16.mxu0 0
        %3817 = vmatmul.mubr.bf16.gmra.mrb[0].mxu0 %v3682
        %v3818 = vpop.f32.mrb[0].mxu0
        %v3819 = vadd.f32 %v3642, %v3818
        %v3820 = vpop.f32.mrb[0].mxu0
        %v3821 = vpop.f32.mrb[0].mxu0
        %v3822 = vadd.f32 %v3642, %v3821
        %v3823 = vpop.f32.mrb[0].mxu0
        %3824 = vmatprep.mubr.bf16.mxu0 0
        %3825 = vmatmul.mubr.bf16.gmra.mrb[0].mxu0 %v3685
        %v3826 = vpop.f32.mrb[0].mxu0
        %v3827 = vadd.f32 %v3642, %v3826
        %v3828 = vpop.f32.mrb[0].mxu0
        %v3829 = vpop.f32.mrb[0].mxu0
        %v3830 = vadd.f32 %v3642, %v3829
        %v3831 = vpop.f32.mrb[0].mxu0
        %3832 = vmatprep.mubr.bf16.mxu0 0
        %3833 = vmatmul.mubr.bf16.gmra.mrb[0].mxu0 %v3688
        %v3834 = vpop.f32.mrb[0].mxu0
        %v3835 = vadd.f32 %v3642, %v3834
        %v3836 = vpop.f32.mrb[0].mxu0
        %v3837 = vpop.f32.mrb[0].mxu0
        %v3838 = vadd.f32 %v3642, %v3837
        %v3839 = vpop.f32.mrb[0].mxu0
        %3840 = vmatprep.mubr.bf16.mxu0 0
        %3841 = vmatmul.mubr.bf16.gmra.mrb[0].mxu0 %v3691
        %v3842 = vpop.f32.mrb[0].mxu0
        %v3843 = vadd.f32 %v3642, %v3842
        %v3844 = vpop.f32.mrb[0].mxu0
        %v3845 = vpop.f32.mrb[0].mxu0
        %v3846 = vadd.f32 %v3642, %v3845
        %v3847 = vpop.f32.mrb[0].mxu0
        %3848 = vmatprep.mubr.bf16.mxu0 0
        %3849 = vmatmul.mubr.bf16.gmra.mrb[0].mxu0 %v3694
        %v3850 = vpop.f32.mrb[0].mxu0
        %v3851 = vadd.f32 %v3642, %v3850
        %v3852 = vpop.f32.mrb[0].mxu0
        %v3853 = vpop.f32.mrb[0].mxu0
        %v3854 = vadd.f32 %v3642, %v3853
        %v3855 = vpop.f32.mrb[0].mxu0
        %3856 = vmatprep.mubr.bf16.mxu0 0
        %3857 = vmatmul.mubr.bf16.gmra.mrb[0].mxu0 %v3697
        %v3858 = vpop.f32.mrb[0].mxu0
        %v3859 = vadd.f32 %v3642, %v3858
        %v3860 = vpop.f32.mrb[0].mxu0
        %v3861 = vpop.f32.mrb[0].mxu0
        %v3862 = vadd.f32 %v3642, %v3861
        %v3863 = vpop.f32.mrb[0].mxu0
        %3864 = vmatprep.mubr.bf16.mxu0 0
        %3865 = vmatmul.mubr.bf16.gmra.mrb[0].mxu0 %v3700
        %v3866 = vpop.f32.mrb[0].mxu0
        %v3867 = vadd.f32 %v3642, %v3866
        %v3868 = vpop.f32.mrb[0].mxu0
        %v3869 = vpop.f32.mrb[0].mxu0
        %v3870 = vadd.f32 %v3642, %v3869
        %v3871 = vpop.f32.mrb[0].mxu0
        %3872 = vmatprep.mubr.bf16.mxu0 0
        %3873 = vmatmul.mubr.bf16.gmra.mrb[0].mxu0 %v3703
        %v3874 = vpop.f32.mrb[0].mxu0
        %v3875 = vadd.f32 %v3642, %v3874
        %v3876 = vpop.f32.mrb[0].mxu0
        %v3877 = vpop.f32.mrb[0].mxu0
        %v3878 = vadd.f32 %v3642, %v3877
        %v3879 = vpop.f32.mrb[0].mxu0
        %3880 = vmatprep.mubr.bf16.mxu0 0
        %3881 = vmatmul.mubr.bf16.gmra.mrb[0].mxu0 %v3706
        %v3882 = vpop.f32.mrb[0].mxu0
        %v3883 = vadd.f32 %v3642, %v3882
        %v3884 = vpop.f32.mrb[0].mxu0
        %v3885 = vpop.f32.mrb[0].mxu0
        %v3886 = vadd.f32 %v3642, %v3885
        %v3887 = vpop.f32.mrb[0].mxu0
        %3888 = vmatprep.mubr.bf16.mxu0 0
        %3889 = vmatmul.mubr.bf16.gmra.mrb[0].mxu0 %v3709
        %v3890 = vpop.f32.mrb[0].mxu0
        %v3891 = vadd.f32 %v3642, %v3890
        %v3892 = vpop.f32.mrb[0].mxu0
        %v3893 = vpop.f32.mrb[0].mxu0
        %v3894 = vadd.f32 %v3642, %v3893
        %v3895 = vpop.f32.mrb[0].mxu0
        %3896 = vmatprep.mubr.bf16.mxu0 0
        %3897 = vmatmul.mubr.bf16.gmra.mrb[0].mxu0 %v3712
        %v3898 = vpop.f32.mrb[0].mxu0
        %v3899 = vadd.f32 %v3642, %v3898
        %v3900 = vpop.f32.mrb[0].mxu0
        %v3901 = vpop.f32.mrb[0].mxu0
        %v3902 = vadd.f32 %v3642, %v3901
        %v3903 = vpop.f32.mrb[0].mxu0
        %3904 = vmatprep.mubr.bf16.mxu0 0
        %3905 = vmatmul.mubr.bf16.gmra.mrb[0].mxu0 %v3715
        %v3906 = vpop.f32.mrb[0].mxu0
        %v3907 = vadd.f32 %v3642, %v3906
        %v3908 = vpop.f32.mrb[0].mxu0
        %v3909 = vpop.f32.mrb[0].mxu0
        %v3910 = vadd.f32 %v3642, %v3909
        %v3911 = vpop.f32.mrb[0].mxu0
        %3912 = vmatprep.mubr.bf16.mxu0 0
        %3913 = vmatmul.mubr.bf16.gmra.mrb[0].mxu0 %v3718
        %v3914 = vpop.f32.mrb[0].mxu0
        %v3915 = vadd.f32 %v3642, %v3914
        %v3916 = vpop.f32.mrb[0].mxu0
        %v3917 = vpop.f32.mrb[0].mxu0
        %v3918 = vpop.f32.mrb[0].mxu0
        %3919 = vdwg.mxu0
        %v3920 = vld [vmem:[%s257] sm:$0xff]
        %v3921 = vld [vmem:[%s257 + $0x8] sm:$0xff]
        %v3922 = vld [vmem:[%s257 + $0x10] sm:$0xff]
        %v3923 = vld [vmem:[%s257 + $0x18] sm:$0xff]
        %v3924 = vld [vmem:[%s257 + $0x20] sm:$0xff]
        %v3925 = vld [vmem:[%s257 + $0x28] sm:$0xff]
        %v3926 = vld [vmem:[%s257 + $0x30] sm:$0xff]
        %v3927 = vld [vmem:[%s257 + $0x38] sm:$0xff]
        %v3928 = vld [vmem:[%s257 + $0x40] sm:$0xff]
        %v3929 = vld [vmem:[%s257 + $0x48] sm:$0xff]
        %v3930 = vld [vmem:[%s257 + $0x50] sm:$0xff]
        %v3931 = vld [vmem:[%s257 + $0x58] sm:$0xff]
        %v3932 = vld [vmem:[%s257 + $0x60] sm:$0xff]
        %v3933 = vld [vmem:[%s257 + $0x68] sm:$0xff]
        %v3934 = vld [vmem:[%s257 + $0x70] sm:$0xff]
        %v3935 = vld [vmem:[%s257 + $0x78] sm:$0xff]
        %v3936 = vld [vmem:[%s257 + $0x80] sm:$0xff]
        %v3937 = vld [vmem:[%s257 + $0x88] sm:$0xff]
        %v3938 = vld [vmem:[%s257 + $0x90] sm:$0xff]
        %v3939 = vld [vmem:[%s257 + $0x98] sm:$0xff]
        %v3940 = vld [vmem:[%s257 + $0xa0] sm:$0xff]
        %v3941 = vld [vmem:[%s257 + $0xa8] sm:$0xff]
        %v3942 = vld [vmem:[%s257 + $0xb0] sm:$0xff]
        %v3943 = vld [vmem:[%s257 + $0xb8] sm:$0xff]
        %v3944 = vld [vmem:[%s257 + $0xc0] sm:$0xff]
        %v3945 = vld [vmem:[%s257 + $0xc8] sm:$0xff]
        %v3946 = vld [vmem:[%s257 + $0xd0] sm:$0xff]
        %v3947 = vld [vmem:[%s257 + $0xd8] sm:$0xff]
        %v3948 = vld [vmem:[%s257 + $0xe0] sm:$0xff]
        %v3949 = vld [vmem:[%s257 + $0xe8] sm:$0xff]
        %v3950 = vld [vmem:[%s257 + $0xf0] sm:$0xff]
        %v3951 = vld [vmem:[%s257 + $0xf8] sm:$0xff]
        %v3952 = vld [vmem:[%s257 + $0x100] sm:$0xff]
        %v3953 = vld [vmem:[%s257 + $0x108] sm:$0xff]
        %v3954 = vld [vmem:[%s257 + $0x110] sm:$0xff]
        %v3955 = vld [vmem:[%s257 + $0x118] sm:$0xff]
        %v3956 = vld [vmem:[%s257 + $0x120] sm:$0xff]
        %v3957 = vld [vmem:[%s257 + $0x128] sm:$0xff]
        %v3958 = vld [vmem:[%s257 + $0x130] sm:$0xff]
        %v3959 = vld [vmem:[%s257 + $0x138] sm:$0xff]
        %v3960 = vld [vmem:[%s257 + $0x140] sm:$0xf]
        %v3961 = vsel %vm392, %v3755, -inf
        %3962 = vmax.xlane.f32.xlu0 %v3961
        %v3963 = vpop.xlane.xlu0 %3962
        %v3964 = vsel %vm392, %v3758, -inf
        %3965 = vmax.xlane.f32.xlu0 %v3964
        %v3966 = vpop.xlane.xlu0 %3965
        %v3967 = vsel %vm392, %v3763, -inf
        %3968 = vmax.xlane.f32.xlu0 %v3967
        %v3969 = vpop.xlane.xlu0 %3968
        %v3970 = vsel %vm392, %v3766, -inf
        %3971 = vmax.xlane.f32.xlu0 %v3970
        %v3972 = vpop.xlane.xlu0 %3971
        %v3973 = vsel %vm392, %v3771, -inf
        %3974 = vmax.xlane.f32.xlu0 %v3973
        %v3975 = vpop.xlane.xlu0 %3974
        %v3976 = vsel %vm392, %v3774, -inf
        %3977 = vmax.xlane.f32.xlu0 %v3976
        %v3978 = vpop.xlane.xlu0 %3977
        %v3979 = vsel %vm392, %v3779, -inf
        %3980 = vmax.xlane.f32.xlu0 %v3979
        %v3981 = vpop.xlane.xlu0 %3980
        %v3982 = vsel %vm392, %v3782, -inf
        %3983 = vmax.xlane.f32.xlu0 %v3982
        %v3984 = vpop.xlane.xlu0 %3983
        %v3985 = vsel %vm392, %v3787, -inf
        %3986 = vmax.xlane.f32.xlu0 %v3985
        %v3987 = vpop.xlane.xlu0 %3986
        %v3988 = vsel %vm392, %v3790, -inf
        %3989 = vmax.xlane.f32.xlu0 %v3988
        %v3990 = vpop.xlane.xlu0 %3989
        %v3991 = vsel %vm392, %v3795, -inf
        %3992 = vmax.xlane.f32.xlu0 %v3991
        %v3993 = vpop.xlane.xlu0 %3992
        %v3994 = vsel %vm392, %v3798, -inf
        %3995 = vmax.xlane.f32.xlu0 %v3994
        %v3996 = vpop.xlane.xlu0 %3995
        %v3997 = vsel %vm392, %v3803, -inf
        %3998 = vmax.xlane.f32.xlu0 %v3997
        %v3999 = vpop.xlane.xlu0 %3998
        %v4000 = vsel %vm392, %v3806, -inf
        %4001 = vmax.xlane.f32.xlu0 %v4000
        %v4002 = vpop.xlane.xlu0 %4001
        %v4003 = vsel %vm392, %v3811, -inf
        %4004 = vmax.xlane.f32.xlu0 %v4003
        %v4005 = vpop.xlane.xlu0 %4004
        %v4006 = vsel %vm392, %v3814, -inf
        %4007 = vmax.xlane.f32.xlu0 %v4006
        %v4008 = vpop.xlane.xlu0 %4007
        %v4009 = vsel %vm392, %v3819, -inf
        %4010 = vmax.xlane.f32.xlu0 %v4009
        %v4011 = vpop.xlane.xlu0 %4010
        %v4012 = vsel %vm392, %v3822, -inf
        %4013 = vmax.xlane.f32.xlu0 %v4012
        %v4014 = vpop.xlane.xlu0 %4013
        %v4015 = vsel %vm392, %v3827, -inf
        %4016 = vmax.xlane.f32.xlu0 %v4015
        %v4017 = vpop.xlane.xlu0 %4016
        %v4018 = vsel %vm392, %v3830, -inf
        %4019 = vmax.xlane.f32.xlu0 %v4018
        %v4020 = vpop.xlane.xlu0 %4019
        %v4021 = vsel %vm392, %v3835, -inf
        %4022 = vmax.xlane.f32.xlu0 %v4021
        %v4023 = vpop.xlane.xlu0 %4022
        %v4024 = vsel %vm392, %v3838, -inf
        %4025 = vmax.xlane.f32.xlu0 %v4024
        %v4026 = vpop.xlane.xlu0 %4025
        %v4027 = vsel %vm392, %v3843, -inf
        %4028 = vmax.xlane.f32.xlu0 %v4027
        %v4029 = vpop.xlane.xlu0 %4028
        %v4030 = vsel %vm392, %v3846, -inf
        %4031 = vmax.xlane.f32.xlu0 %v4030
        %v4032 = vpop.xlane.xlu0 %4031
        %v4033 = vsel %vm392, %v3851, -inf
        %4034 = vmax.xlane.f32.xlu0 %v4033
        %v4035 = vpop.xlane.xlu0 %4034
        %v4036 = vsel %vm392, %v3854, -inf
        %4037 = vmax.xlane.f32.xlu0 %v4036
        %v4038 = vpop.xlane.xlu0 %4037
        %v4039 = vsel %vm392, %v3859, -inf
        %4040 = vmax.xlane.f32.xlu0 %v4039
        %v4041 = vpop.xlane.xlu0 %4040
        %v4042 = vsel %vm392, %v3862, -inf
        %4043 = vmax.xlane.f32.xlu0 %v4042
        %v4044 = vpop.xlane.xlu0 %4043
        %v4045 = vsel %vm392, %v3867, -inf
        %4046 = vmax.xlane.f32.xlu0 %v4045
        %v4047 = vpop.xlane.xlu0 %4046
        %v4048 = vsel %vm392, %v3870, -inf
        %4049 = vmax.xlane.f32.xlu0 %v4048
        %v4050 = vpop.xlane.xlu0 %4049
        %v4051 = vsel %vm392, %v3875, -inf
        %4052 = vmax.xlane.f32.xlu0 %v4051
        %v4053 = vpop.xlane.xlu0 %4052
        %v4054 = vsel %vm392, %v3878, -inf
        %4055 = vmax.xlane.f32.xlu0 %v4054
        %v4056 = vpop.xlane.xlu0 %4055
        %v4057 = vsel %vm392, %v3883, -inf
        %4058 = vmax.xlane.f32.xlu0 %v4057
        %v4059 = vpop.xlane.xlu0 %4058
        %v4060 = vsel %vm392, %v3886, -inf
        %4061 = vmax.xlane.f32.xlu0 %v4060
        %v4062 = vpop.xlane.xlu0 %4061
        %v4063 = vsel %vm392, %v3891, -inf
        %4064 = vmax.xlane.f32.xlu0 %v4063
        %v4065 = vpop.xlane.xlu0 %4064
        %v4066 = vsel %vm392, %v3894, -inf
        %4067 = vmax.xlane.f32.xlu0 %v4066
        %v4068 = vpop.xlane.xlu0 %4067
        %v4069 = vsel %vm392, %v3899, -inf
        %4070 = vmax.xlane.f32.xlu0 %v4069
        %v4071 = vpop.xlane.xlu0 %4070
        %v4072 = vsel %vm392, %v3902, -inf
        %4073 = vmax.xlane.f32.xlu0 %v4072
        %v4074 = vpop.xlane.xlu0 %4073
        %v4075 = vsel %vm392, %v3907, -inf
        %4076 = vmax.xlane.f32.xlu0 %v4075
        %v4077 = vpop.xlane.xlu0 %4076
        %v4078 = vsel %vm392, %v3910, -inf
        %4079 = vmax.xlane.f32.xlu0 %v4078
        %v4080 = vpop.xlane.xlu0 %4079
        %vm4081 = vcmask 27648
        %v4082 = vsel %vm4081, %v3915, -inf
        %4083 = vmax.xlane.f32.xlu0 %v4082
        %v4084 = vpop.xlane.xlu0 %4083
        %v4085 = vsub.f32 %v3755, %v3963
        %v4086 = vsub.f32 %v3758, %v3966
        %v4087 = vsub.f32 %v3763, %v3969
        %v4088 = vsub.f32 %v3766, %v3972
        %v4089 = vsub.f32 %v3771, %v3975
        %v4090 = vsub.f32 %v3774, %v3978
        %v4091 = vsub.f32 %v3779, %v3981
        %v4092 = vsub.f32 %v3782, %v3984
        %v4093 = vsub.f32 %v3787, %v3987
        %v4094 = vsub.f32 %v3790, %v3990
        %v4095 = vsub.f32 %v3795, %v3993
        %v4096 = vsub.f32 %v3798, %v3996
        %v4097 = vsub.f32 %v3803, %v3999
        %v4098 = vsub.f32 %v3806, %v4002
        %v4099 = vsub.f32 %v3811, %v4005
        %v4100 = vsub.f32 %v3814, %v4008
        %v4101 = vsub.f32 %v3819, %v4011
        %v4102 = vsub.f32 %v3822, %v4014
        %v4103 = vsub.f32 %v3827, %v4017
        %v4104 = vsub.f32 %v3830, %v4020
        %v4105 = vsub.f32 %v3835, %v4023
        %v4106 = vsub.f32 %v3838, %v4026
        %v4107 = vsub.f32 %v3843, %v4029
        %v4108 = vsub.f32 %v3846, %v4032
        %v4109 = vsub.f32 %v3851, %v4035
        %v4110 = vsub.f32 %v3854, %v4038
        %v4111 = vsub.f32 %v3859, %v4041
        %v4112 = vsub.f32 %v3862, %v4044
        %v4113 = vsub.f32 %v3867, %v4047
        %v4114 = vsub.f32 %v3870, %v4050
        %v4115 = vsub.f32 %v3875, %v4053
        %v4116 = vsub.f32 %v3878, %v4056
        %v4117 = vsub.f32 %v3883, %v4059
        %v4118 = vsub.f32 %v3886, %v4062
        %v4119 = vsub.f32 %v3891, %v4065
        %v4120 = vsub.f32 %v3894, %v4068
        %v4121 = vsub.f32 %v3899, %v4071
        %v4122 = vsub.f32 %v3902, %v4074
        %v4123 = vsub.f32 %v3907, %v4077
        %v4124 = vsub.f32 %v3910, %v4080
        %v4125 = vsub.f32 %v3915, %v4084
        %v4126 = vmul.f32 %v4085, 1.442695
        %v4127 = vpow.pop %v4126
        %v4128 = vmul.f32 %v4086, 1.442695
        %v4129 = vpow.pop %v4128
        %v4130 = vmul.f32 %v4087, 1.442695
        %v4131 = vpow.pop %v4130
        %v4132 = vmul.f32 %v4088, 1.442695
        %v4133 = vpow.pop %v4132
        %v4134 = vmul.f32 %v4089, 1.442695
        %v4135 = vpow.pop %v4134
        %v4136 = vmul.f32 %v4090, 1.442695
        %v4137 = vpow.pop %v4136
        %v4138 = vmul.f32 %v4091, 1.442695
        %v4139 = vpow.pop %v4138
        %v4140 = vmul.f32 %v4092, 1.442695
        %v4141 = vpow.pop %v4140
        %v4142 = vmul.f32 %v4093, 1.442695
        %v4143 = vpow.pop %v4142
        %v4144 = vmul.f32 %v4094, 1.442695
        %v4145 = vpow.pop %v4144
        %v4146 = vmul.f32 %v4095, 1.442695
        %v4147 = vpow.pop %v4146
        %v4148 = vmul.f32 %v4096, 1.442695
        %v4149 = vpow.pop %v4148
        %v4150 = vmul.f32 %v4097, 1.442695
        %v4151 = vpow.pop %v4150
        %v4152 = vmul.f32 %v4098, 1.442695
        %v4153 = vpow.pop %v4152
        %v4154 = vmul.f32 %v4099, 1.442695
        %v4155 = vpow.pop %v4154
        %v4156 = vmul.f32 %v4100, 1.442695
        %v4157 = vpow.pop %v4156
        %v4158 = vmul.f32 %v4101, 1.442695
        %v4159 = vpow.pop %v4158
        %v4160 = vmul.f32 %v4102, 1.442695
        %v4161 = vpow.pop %v4160
        %v4162 = vmul.f32 %v4103, 1.442695
        %v4163 = vpow.pop %v4162
        %v4164 = vmul.f32 %v4104, 1.442695
        %v4165 = vpow.pop %v4164
        %v4166 = vmul.f32 %v4105, 1.442695
        %v4167 = vpow.pop %v4166
        %v4168 = vmul.f32 %v4106, 1.442695
        %v4169 = vpow.pop %v4168
        %v4170 = vmul.f32 %v4107, 1.442695
        %v4171 = vpow.pop %v4170
        %v4172 = vmul.f32 %v4108, 1.442695
        %v4173 = vpow.pop %v4172
        %v4174 = vmul.f32 %v4109, 1.442695
        %v4175 = vpow.pop %v4174
        %v4176 = vmul.f32 %v4110, 1.442695
        %v4177 = vpow.pop %v4176
        %v4178 = vmul.f32 %v4111, 1.442695
        %v4179 = vpow.pop %v4178
        %v4180 = vmul.f32 %v4112, 1.442695
        %v4181 = vpow.pop %v4180
        %v4182 = vmul.f32 %v4113, 1.442695
        %v4183 = vpow.pop %v4182
        %v4184 = vmul.f32 %v4114, 1.442695
        %v4185 = vpow.pop %v4184
        %v4186 = vmul.f32 %v4115, 1.442695
        %v4187 = vpow.pop %v4186
        %v4188 = vmul.f32 %v4116, 1.442695
        %v4189 = vpow.pop %v4188
        %v4190 = vmul.f32 %v4117, 1.442695
        %v4191 = vpow.pop %v4190
        %v4192 = vmul.f32 %v4118, 1.442695
        %v4193 = vpow.pop %v4192
        %v4194 = vmul.f32 %v4119, 1.442695
        %v4195 = vpow.pop %v4194
        %v4196 = vmul.f32 %v4120, 1.442695
        %v4197 = vpow.pop %v4196
        %v4198 = vmul.f32 %v4121, 1.442695
        %v4199 = vpow.pop %v4198
        %v4200 = vmul.f32 %v4122, 1.442695
        %v4201 = vpow.pop %v4200
        %v4202 = vmul.f32 %v4123, 1.442695
        %v4203 = vpow.pop %v4202
        %v4204 = vmul.f32 %v4124, 1.442695
        %v4205 = vpow.pop %v4204
        %v4206 = vmul.f32 %v4125, 1.442695
        %v4207 = vpow.pop %v4206
        %v4208 = vsel %vm392, %v4127, 0.0
        %4209 = vadd.xlane.f32.xlu0 %v4208
        %v4210 = vpop.xlane.xlu0 %4209
        %v4211 = vsel %vm392, %v4129, 0.0
        %4212 = vadd.xlane.f32.xlu0 %v4211
        %v4213 = vpop.xlane.xlu0 %4212
        %v4214 = vsel %vm392, %v4131, 0.0
        %4215 = vadd.xlane.f32.xlu0 %v4214
        %v4216 = vpop.xlane.xlu0 %4215
        %v4217 = vsel %vm392, %v4133, 0.0
        %4218 = vadd.xlane.f32.xlu0 %v4217
        %v4219 = vpop.xlane.xlu0 %4218
        %v4220 = vsel %vm392, %v4135, 0.0
        %4221 = vadd.xlane.f32.xlu0 %v4220
        %v4222 = vpop.xlane.xlu0 %4221
        %v4223 = vsel %vm392, %v4137, 0.0
        %4224 = vadd.xlane.f32.xlu0 %v4223
        %v4225 = vpop.xlane.xlu0 %4224
        %v4226 = vsel %vm392, %v4139, 0.0
        %4227 = vadd.xlane.f32.xlu0 %v4226
        %v4228 = vpop.xlane.xlu0 %4227
        %v4229 = vsel %vm392, %v4141, 0.0
        %4230 = vadd.xlane.f32.xlu0 %v4229
        %v4231 = vpop.xlane.xlu0 %4230
        %v4232 = vsel %vm392, %v4143, 0.0
        %4233 = vadd.xlane.f32.xlu0 %v4232
        %v4234 = vpop.xlane.xlu0 %4233
        %v4235 = vsel %vm392, %v4145, 0.0
        %4236 = vadd.xlane.f32.xlu0 %v4235
        %v4237 = vpop.xlane.xlu0 %4236
        %v4238 = vsel %vm392, %v4147, 0.0
        %4239 = vadd.xlane.f32.xlu0 %v4238
        %v4240 = vpop.xlane.xlu0 %4239
        %v4241 = vsel %vm392, %v4149, 0.0
        %4242 = vadd.xlane.f32.xlu0 %v4241
        %v4243 = vpop.xlane.xlu0 %4242
        %v4244 = vsel %vm392, %v4151, 0.0
        %4245 = vadd.xlane.f32.xlu0 %v4244
        %v4246 = vpop.xlane.xlu0 %4245
        %v4247 = vsel %vm392, %v4153, 0.0
        %4248 = vadd.xlane.f32.xlu0 %v4247
        %v4249 = vpop.xlane.xlu0 %4248
        %v4250 = vsel %vm392, %v4155, 0.0
        %4251 = vadd.xlane.f32.xlu0 %v4250
        %v4252 = vpop.xlane.xlu0 %4251
        %v4253 = vsel %vm392, %v4157, 0.0
        %4254 = vadd.xlane.f32.xlu0 %v4253
        %v4255 = vpop.xlane.xlu0 %4254
        %v4256 = vsel %vm392, %v4159, 0.0
        %4257 = vadd.xlane.f32.xlu0 %v4256
        %v4258 = vpop.xlane.xlu0 %4257
        %v4259 = vsel %vm392, %v4161, 0.0
        %4260 = vadd.xlane.f32.xlu0 %v4259
        %v4261 = vpop.xlane.xlu0 %4260
        %v4262 = vsel %vm392, %v4163, 0.0
        %4263 = vadd.xlane.f32.xlu0 %v4262
        %v4264 = vpop.xlane.xlu0 %4263
        %v4265 = vsel %vm392, %v4165, 0.0
        %4266 = vadd.xlane.f32.xlu0 %v4265
        %v4267 = vpop.xlane.xlu0 %4266
        %v4268 = vsel %vm392, %v4167, 0.0
        %4269 = vadd.xlane.f32.xlu0 %v4268
        %v4270 = vpop.xlane.xlu0 %4269
        %v4271 = vsel %vm392, %v4169, 0.0
        %4272 = vadd.xlane.f32.xlu0 %v4271
        %v4273 = vpop.xlane.xlu0 %4272
        %v4274 = vsel %vm392, %v4171, 0.0
        %4275 = vadd.xlane.f32.xlu0 %v4274
        %v4276 = vpop.xlane.xlu0 %4275
        %v4277 = vsel %vm392, %v4173, 0.0
        %4278 = vadd.xlane.f32.xlu0 %v4277
        %v4279 = vpop.xlane.xlu0 %4278
        %v4280 = vsel %vm392, %v4175, 0.0
        %4281 = vadd.xlane.f32.xlu0 %v4280
        %v4282 = vpop.xlane.xlu0 %4281
        %v4283 = vsel %vm392, %v4177, 0.0
        %4284 = vadd.xlane.f32.xlu0 %v4283
        %v4285 = vpop.xlane.xlu0 %4284
        %v4286 = vsel %vm392, %v4179, 0.0
        %4287 = vadd.xlane.f32.xlu0 %v4286
        %v4288 = vpop.xlane.xlu0 %4287
        %v4289 = vsel %vm392, %v4181, 0.0
        %4290 = vadd.xlane.f32.xlu0 %v4289
        %v4291 = vpop.xlane.xlu0 %4290
        %v4292 = vsel %vm392, %v4183, 0.0
        %4293 = vadd.xlane.f32.xlu0 %v4292
        %v4294 = vpop.xlane.xlu0 %4293
        %v4295 = vsel %vm392, %v4185, 0.0
        %4296 = vadd.xlane.f32.xlu0 %v4295
        %v4297 = vpop.xlane.xlu0 %4296
        %v4298 = vsel %vm392, %v4187, 0.0
        %4299 = vadd.xlane.f32.xlu0 %v4298
        %v4300 = vpop.xlane.xlu0 %4299
        %v4301 = vsel %vm392, %v4189, 0.0
        %4302 = vadd.xlane.f32.xlu0 %v4301
        %v4303 = vpop.xlane.xlu0 %4302
        %v4304 = vsel %vm392, %v4191, 0.0
        %4305 = vadd.xlane.f32.xlu0 %v4304
        %v4306 = vpop.xlane.xlu0 %4305
        %v4307 = vsel %vm392, %v4193, 0.0
        %4308 = vadd.xlane.f32.xlu0 %v4307
        %v4309 = vpop.xlane.xlu0 %4308
        %v4310 = vsel %vm392, %v4195, 0.0
        %4311 = vadd.xlane.f32.xlu0 %v4310
        %v4312 = vpop.xlane.xlu0 %4311
        %v4313 = vsel %vm392, %v4197, 0.0
        %4314 = vadd.xlane.f32.xlu0 %v4313
        %v4315 = vpop.xlane.xlu0 %4314
        %v4316 = vsel %vm392, %v4199, 0.0
        %4317 = vadd.xlane.f32.xlu0 %v4316
        %v4318 = vpop.xlane.xlu0 %4317
        %v4319 = vsel %vm392, %v4201, 0.0
        %4320 = vadd.xlane.f32.xlu0 %v4319
        %v4321 = vpop.xlane.xlu0 %4320
        %v4322 = vsel %vm392, %v4203, 0.0
        %4323 = vadd.xlane.f32.xlu0 %v4322
        %v4324 = vpop.xlane.xlu0 %4323
        %v4325 = vsel %vm392, %v4205, 0.0
        %4326 = vadd.xlane.f32.xlu0 %v4325
        %v4327 = vpop.xlane.xlu0 %4326
        %v4328 = vsel %vm4081, %v4207, 0.0
        %4329 = vadd.xlane.f32.xlu0 %v4328
        %v4330 = vpop.xlane.xlu0 %4329
        %v4331 = vlog2.pop %v4210
        %v4332 = vmul.f32 %v4331, 0.6931472
        %v4333 = vlog2.pop %v4213
        %v4334 = vmul.f32 %v4333, 0.6931472
        %v4335 = vlog2.pop %v4216
        %v4336 = vmul.f32 %v4335, 0.6931472
        %v4337 = vlog2.pop %v4219
        %v4338 = vmul.f32 %v4337, 0.6931472
        %v4339 = vlog2.pop %v4222
        %v4340 = vmul.f32 %v4339, 0.6931472
        %v4341 = vlog2.pop %v4225
        %v4342 = vmul.f32 %v4341, 0.6931472
        %v4343 = vlog2.pop %v4228
        %v4344 = vmul.f32 %v4343, 0.6931472
        %v4345 = vlog2.pop %v4231
        %v4346 = vmul.f32 %v4345, 0.6931472
        %v4347 = vlog2.pop %v4234
        %v4348 = vmul.f32 %v4347, 0.6931472
        %v4349 = vlog2.pop %v4237
        %v4350 = vmul.f32 %v4349, 0.6931472
        %v4351 = vlog2.pop %v4240
        %v4352 = vmul.f32 %v4351, 0.6931472
        %v4353 = vlog2.pop %v4243
        %v4354 = vmul.f32 %v4353, 0.6931472
        %v4355 = vlog2.pop %v4246
        %v4356 = vmul.f32 %v4355, 0.6931472
        %v4357 = vlog2.pop %v4249
        %v4358 = vmul.f32 %v4357, 0.6931472
        %v4359 = vlog2.pop %v4252
        %v4360 = vmul.f32 %v4359, 0.6931472
        %v4361 = vlog2.pop %v4255
        %v4362 = vmul.f32 %v4361, 0.6931472
        %v4363 = vlog2.pop %v4258
        %v4364 = vmul.f32 %v4363, 0.6931472
        %v4365 = vlog2.pop %v4261
        %v4366 = vmul.f32 %v4365, 0.6931472
        %v4367 = vlog2.pop %v4264
        %v4368 = vmul.f32 %v4367, 0.6931472
        %v4369 = vlog2.pop %v4267
        %v4370 = vmul.f32 %v4369, 0.6931472
        %v4371 = vlog2.pop %v4270
        %v4372 = vmul.f32 %v4371, 0.6931472
        %v4373 = vlog2.pop %v4273
        %v4374 = vmul.f32 %v4373, 0.6931472
        %v4375 = vlog2.pop %v4276
        %v4376 = vmul.f32 %v4375, 0.6931472
        %v4377 = vlog2.pop %v4279
        %v4378 = vmul.f32 %v4377, 0.6931472
        %v4379 = vlog2.pop %v4282
        %v4380 = vmul.f32 %v4379, 0.6931472
        %v4381 = vlog2.pop %v4285
        %v4382 = vmul.f32 %v4381, 0.6931472
        %v4383 = vlog2.pop %v4288
        %v4384 = vmul.f32 %v4383, 0.6931472
        %v4385 = vlog2.pop %v4291
        %v4386 = vmul.f32 %v4385, 0.6931472
        %v4387 = vlog2.pop %v4294
        %v4388 = vmul.f32 %v4387, 0.6931472
        %v4389 = vlog2.pop %v4297
        %v4390 = vmul.f32 %v4389, 0.6931472
        %v4391 = vlog2.pop %v4300
        %v4392 = vmul.f32 %v4391, 0.6931472
        %v4393 = vlog2.pop %v4303
        %v4394 = vmul.f32 %v4393, 0.6931472
        %v4395 = vlog2.pop %v4306
        %v4396 = vmul.f32 %v4395, 0.6931472
        %v4397 = vlog2.pop %v4309
        %v4398 = vmul.f32 %v4397, 0.6931472
        %v4399 = vlog2.pop %v4312
        %v4400 = vmul.f32 %v4399, 0.6931472
        %v4401 = vlog2.pop %v4315
        %v4402 = vmul.f32 %v4401, 0.6931472
        %v4403 = vlog2.pop %v4318
        %v4404 = vmul.f32 %v4403, 0.6931472
        %v4405 = vlog2.pop %v4321
        %v4406 = vmul.f32 %v4405, 0.6931472
        %v4407 = vlog2.pop %v4324
        %v4408 = vmul.f32 %v4407, 0.6931472
        %v4409 = vlog2.pop %v4327
        %v4410 = vmul.f32 %v4409, 0.6931472
        %v4411 = vlog2.pop %v4330
        %v4412 = vmul.f32 %v4411, 0.6931472
        %v4413 = vsub.f32 %v4085, %v4332
        %v4414 = vsub.f32 %v4086, %v4334
        %v4415 = vsub.f32 %v4087, %v4336
        %v4416 = vsub.f32 %v4088, %v4338
        %v4417 = vsub.f32 %v4089, %v4340
        %v4418 = vsub.f32 %v4090, %v4342
        %v4419 = vsub.f32 %v4091, %v4344
        %v4420 = vsub.f32 %v4092, %v4346
        %v4421 = vsub.f32 %v4093, %v4348
        %v4422 = vsub.f32 %v4094, %v4350
        %v4423 = vsub.f32 %v4095, %v4352
        %v4424 = vsub.f32 %v4096, %v4354
        %v4425 = vsub.f32 %v4097, %v4356
        %v4426 = vsub.f32 %v4098, %v4358
        %v4427 = vsub.f32 %v4099, %v4360
        %v4428 = vsub.f32 %v4100, %v4362
        %v4429 = vsub.f32 %v4101, %v4364
        %v4430 = vsub.f32 %v4102, %v4366
        %v4431 = vsub.f32 %v4103, %v4368
        %v4432 = vsub.f32 %v4104, %v4370
        %v4433 = vsub.f32 %v4105, %v4372
        %v4434 = vsub.f32 %v4106, %v4374
        %v4435 = vsub.f32 %v4107, %v4376
        %v4436 = vsub.f32 %v4108, %v4378
        %v4437 = vsub.f32 %v4109, %v4380
        %v4438 = vsub.f32 %v4110, %v4382
        %v4439 = vsub.f32 %v4111, %v4384
        %v4440 = vsub.f32 %v4112, %v4386
        %v4441 = vsub.f32 %v4113, %v4388
        %v4442 = vsub.f32 %v4114, %v4390
        %v4443 = vsub.f32 %v4115, %v4392
        %v4444 = vsub.f32 %v4116, %v4394
        %v4445 = vsub.f32 %v4117, %v4396
        %v4446 = vsub.f32 %v4118, %v4398
        %v4447 = vsub.f32 %v4119, %v4400
        %v4448 = vsub.f32 %v4120, %v4402
        %v4449 = vsub.f32 %v4121, %v4404
        %v4450 = vsub.f32 %v4122, %v4406
        %v4451 = vsub.f32 %v4123, %v4408
        %v4452 = vsub.f32 %v4124, %v4410
        %v4453 = vsub.f32 %v4125, %v4412
        %v4454 = vmul.f32 %v3920, %v4413
        %v4455 = vmul.f32 %v3921, %v4414
        %v4456 = vmul.f32 %v3922, %v4415
        %v4457 = vmul.f32 %v3923, %v4416
        %v4458 = vmul.f32 %v3924, %v4417
        %v4459 = vmul.f32 %v3925, %v4418
        %v4460 = vmul.f32 %v3926, %v4419
        %v4461 = vmul.f32 %v3927, %v4420
        %v4462 = vmul.f32 %v3928, %v4421
        %v4463 = vmul.f32 %v3929, %v4422
        %v4464 = vmul.f32 %v3930, %v4423
        %v4465 = vmul.f32 %v3931, %v4424
        %v4466 = vmul.f32 %v3932, %v4425
        %v4467 = vmul.f32 %v3933, %v4426
        %v4468 = vmul.f32 %v3934, %v4427
        %v4469 = vmul.f32 %v3935, %v4428
        %v4470 = vmul.f32 %v3936, %v4429
        %v4471 = vmul.f32 %v3937, %v4430
        %v4472 = vmul.f32 %v3938, %v4431
        %v4473 = vmul.f32 %v3939, %v4432
        %v4474 = vmul.f32 %v3940, %v4433
        %v4475 = vmul.f32 %v3941, %v4434
        %v4476 = vmul.f32 %v3942, %v4435
        %v4477 = vmul.f32 %v3943, %v4436
        %v4478 = vmul.f32 %v3944, %v4437
        %v4479 = vmul.f32 %v3945, %v4438
        %v4480 = vmul.f32 %v3946, %v4439
        %v4481 = vmul.f32 %v3947, %v4440
        %v4482 = vmul.f32 %v3948, %v4441
        %v4483 = vmul.f32 %v3949, %v4442
        %v4484 = vmul.f32 %v3950, %v4443
        %v4485 = vmul.f32 %v3951, %v4444
        %v4486 = vmul.f32 %v3952, %v4445
        %v4487 = vmul.f32 %v3953, %v4446
        %v4488 = vmul.f32 %v3954, %v4447
        %v4489 = vmul.f32 %v3955, %v4448
        %v4490 = vmul.f32 %v3956, %v4449
        %v4491 = vmul.f32 %v3957, %v4450
        %v4492 = vmul.f32 %v3958, %v4451
        %v4493 = vmul.f32 %v3959, %v4452
        %v4494 = vmul.f32 %v3960, %v4453
        %v4495 = vsub.f32 0.0, %v4454
        %v4496 = vsub.f32 0.0, %v4455
        %v4497 = vsub.f32 0.0, %v4456
        %v4498 = vsub.f32 0.0, %v4457
        %v4499 = vsub.f32 0.0, %v4458
        %v4500 = vsub.f32 0.0, %v4459
        %v4501 = vsub.f32 0.0, %v4460
        %v4502 = vsub.f32 0.0, %v4461
        %v4503 = vsub.f32 0.0, %v4462
        %v4504 = vsub.f32 0.0, %v4463
        %v4505 = vsub.f32 0.0, %v4464
        %v4506 = vsub.f32 0.0, %v4465
        %v4507 = vsub.f32 0.0, %v4466
        %v4508 = vsub.f32 0.0, %v4467
        %v4509 = vsub.f32 0.0, %v4468
        %v4510 = vsub.f32 0.0, %v4469
        %v4511 = vsub.f32 0.0, %v4470
        %v4512 = vsub.f32 0.0, %v4471
        %v4513 = vsub.f32 0.0, %v4472
        %v4514 = vsub.f32 0.0, %v4473
        %v4515 = vsub.f32 0.0, %v4474
        %v4516 = vsub.f32 0.0, %v4475
        %v4517 = vsub.f32 0.0, %v4476
        %v4518 = vsub.f32 0.0, %v4477
        %v4519 = vsub.f32 0.0, %v4478
        %v4520 = vsub.f32 0.0, %v4479
        %v4521 = vsub.f32 0.0, %v4480
        %v4522 = vsub.f32 0.0, %v4481
        %v4523 = vsub.f32 0.0, %v4482
        %v4524 = vsub.f32 0.0, %v4483
        %v4525 = vsub.f32 0.0, %v4484
        %v4526 = vsub.f32 0.0, %v4485
        %v4527 = vsub.f32 0.0, %v4486
        %v4528 = vsub.f32 0.0, %v4487
        %v4529 = vsub.f32 0.0, %v4488
        %v4530 = vsub.f32 0.0, %v4489
        %v4531 = vsub.f32 0.0, %v4490
        %v4532 = vsub.f32 0.0, %v4491
        %v4533 = vsub.f32 0.0, %v4492
        %v4534 = vsub.f32 0.0, %v4493
        %v4535 = vsub.f32 0.0, %v4494
        %v4536 = vsel %vm392, %v4495, 0.0
        %4537 = vadd.xlane.f32.xlu0 %v4536
        %v4538 = vpop.xlane.xlu0 %4537
        %v4539 = vsel %vm392, %v4496, 0.0
        %4540 = vadd.xlane.f32.xlu0 %v4539
        %v4541 = vpop.xlane.xlu0 %4540
        %v4542 = vsel %vm392, %v4497, 0.0
        %4543 = vadd.xlane.f32.xlu0 %v4542
        %v4544 = vpop.xlane.xlu0 %4543
        %v4545 = vsel %vm392, %v4498, 0.0
        %4546 = vadd.xlane.f32.xlu0 %v4545
        %v4547 = vpop.xlane.xlu0 %4546
        %v4548 = vsel %vm392, %v4499, 0.0
        %4549 = vadd.xlane.f32.xlu0 %v4548
        %v4550 = vpop.xlane.xlu0 %4549
        %v4551 = vsel %vm392, %v4500, 0.0
        %4552 = vadd.xlane.f32.xlu0 %v4551
        %v4553 = vpop.xlane.xlu0 %4552
        %v4554 = vsel %vm392, %v4501, 0.0
        %4555 = vadd.xlane.f32.xlu0 %v4554
        %v4556 = vpop.xlane.xlu0 %4555
        %v4557 = vsel %vm392, %v4502, 0.0
        %4558 = vadd.xlane.f32.xlu0 %v4557
        %v4559 = vpop.xlane.xlu0 %4558
        %v4560 = vsel %vm392, %v4503, 0.0
        %4561 = vadd.xlane.f32.xlu0 %v4560
        %v4562 = vpop.xlane.xlu0 %4561
        %v4563 = vsel %vm392, %v4504, 0.0
        %4564 = vadd.xlane.f32.xlu0 %v4563
        %v4565 = vpop.xlane.xlu0 %4564
        %v4566 = vsel %vm392, %v4505, 0.0
        %4567 = vadd.xlane.f32.xlu0 %v4566
        %v4568 = vpop.xlane.xlu0 %4567
        %v4569 = vsel %vm392, %v4506, 0.0
        %4570 = vadd.xlane.f32.xlu0 %v4569
        %v4571 = vpop.xlane.xlu0 %4570
        %v4572 = vsel %vm392, %v4507, 0.0
        %4573 = vadd.xlane.f32.xlu0 %v4572
        %v4574 = vpop.xlane.xlu0 %4573
        %v4575 = vsel %vm392, %v4508, 0.0
        %4576 = vadd.xlane.f32.xlu0 %v4575
        %v4577 = vpop.xlane.xlu0 %4576
        %v4578 = vsel %vm392, %v4509, 0.0
        %4579 = vadd.xlane.f32.xlu0 %v4578
        %v4580 = vpop.xlane.xlu0 %4579
        %v4581 = vsel %vm392, %v4510, 0.0
        %4582 = vadd.xlane.f32.xlu0 %v4581
        %v4583 = vpop.xlane.xlu0 %4582
        %v4584 = vsel %vm392, %v4511, 0.0
        %4585 = vadd.xlane.f32.xlu0 %v4584
        %v4586 = vpop.xlane.xlu0 %4585
        %v4587 = vsel %vm392, %v4512, 0.0
        %4588 = vadd.xlane.f32.xlu0 %v4587
        %v4589 = vpop.xlane.xlu0 %4588
        %v4590 = vsel %vm392, %v4513, 0.0
        %4591 = vadd.xlane.f32.xlu0 %v4590
        %v4592 = vpop.xlane.xlu0 %4591
        %v4593 = vsel %vm392, %v4514, 0.0
        %4594 = vadd.xlane.f32.xlu0 %v4593
        %v4595 = vpop.xlane.xlu0 %4594
        %v4596 = vsel %vm392, %v4515, 0.0
        %4597 = vadd.xlane.f32.xlu0 %v4596
        %v4598 = vpop.xlane.xlu0 %4597
        %v4599 = vsel %vm392, %v4516, 0.0
        %4600 = vadd.xlane.f32.xlu0 %v4599
        %v4601 = vpop.xlane.xlu0 %4600
        %v4602 = vsel %vm392, %v4517, 0.0
        %4603 = vadd.xlane.f32.xlu0 %v4602
        %v4604 = vpop.xlane.xlu0 %4603
        %v4605 = vsel %vm392, %v4518, 0.0
        %4606 = vadd.xlane.f32.xlu0 %v4605
        %v4607 = vpop.xlane.xlu0 %4606
        %v4608 = vsel %vm392, %v4519, 0.0
        %4609 = vadd.xlane.f32.xlu0 %v4608
        %v4610 = vpop.xlane.xlu0 %4609
        %v4611 = vsel %vm392, %v4520, 0.0
        %4612 = vadd.xlane.f32.xlu0 %v4611
        %v4613 = vpop.xlane.xlu0 %4612
        %v4614 = vsel %vm392, %v4521, 0.0
        %4615 = vadd.xlane.f32.xlu0 %v4614
        %v4616 = vpop.xlane.xlu0 %4615
        %v4617 = vsel %vm392, %v4522, 0.0
        %4618 = vadd.xlane.f32.xlu0 %v4617
        %v4619 = vpop.xlane.xlu0 %4618
        %v4620 = vsel %vm392, %v4523, 0.0
        %4621 = vadd.xlane.f32.xlu0 %v4620
        %v4622 = vpop.xlane.xlu0 %4621
        %v4623 = vsel %vm392, %v4524, 0.0
        %4624 = vadd.xlane.f32.xlu0 %v4623
        %v4625 = vpop.xlane.xlu0 %4624
        %v4626 = vsel %vm392, %v4525, 0.0
        %4627 = vadd.xlane.f32.xlu0 %v4626
        %v4628 = vpop.xlane.xlu0 %4627
        %v4629 = vsel %vm392, %v4526, 0.0
        %4630 = vadd.xlane.f32.xlu0 %v4629
        %v4631 = vpop.xlane.xlu0 %4630
        %v4632 = vsel %vm392, %v4527, 0.0
        %4633 = vadd.xlane.f32.xlu0 %v4632
        %v4634 = vpop.xlane.xlu0 %4633
        %v4635 = vsel %vm392, %v4528, 0.0
        %4636 = vadd.xlane.f32.xlu0 %v4635
        %v4637 = vpop.xlane.xlu0 %4636
        %v4638 = vsel %vm392, %v4529, 0.0
        %4639 = vadd.xlane.f32.xlu0 %v4638
        %v4640 = vpop.xlane.xlu0 %4639
        %v4641 = vsel %vm392, %v4530, 0.0
        %4642 = vadd.xlane.f32.xlu0 %v4641
        %v4643 = vpop.xlane.xlu0 %4642
        %v4644 = vsel %vm392, %v4531, 0.0
        %4645 = vadd.xlane.f32.xlu0 %v4644
        %v4646 = vpop.xlane.xlu0 %4645
        %v4647 = vsel %vm392, %v4532, 0.0
        %4648 = vadd.xlane.f32.xlu0 %v4647
        %v4649 = vpop.xlane.xlu0 %4648
        %v4650 = vsel %vm392, %v4533, 0.0
        %4651 = vadd.xlane.f32.xlu0 %v4650
        %v4652 = vpop.xlane.xlu0 %4651
        %v4653 = vsel %vm392, %v4534, 0.0
        %4654 = vadd.xlane.f32.xlu0 %v4653
        %v4655 = vpop.xlane.xlu0 %4654
        %v4656 = vsel %vm4081, %v4535, 0.0
        %4657 = vadd.xlane.f32.xlu0 %v4656
        %v4658 = vpop.xlane.xlu0 %4657
        %v4659 = vadd.f32 %v4538, %v4541
        %v4660 = vadd.f32 %v4659, %v4544
        %v4661 = vadd.f32 %v4660, %v4547
        %v4662 = vadd.f32 %v4661, %v4550
        %v4663 = vadd.f32 %v4662, %v4553
        %v4664 = vadd.f32 %v4663, %v4556
        %v4665 = vadd.f32 %v4664, %v4559
        %v4666 = vadd.f32 %v4665, %v4562
        %v4667 = vadd.f32 %v4666, %v4565
        %v4668 = vadd.f32 %v4667, %v4568
        %v4669 = vadd.f32 %v4668, %v4571
        %v4670 = vadd.f32 %v4669, %v4574
        %v4671 = vadd.f32 %v4670, %v4577
        %v4672 = vadd.f32 %v4671, %v4580
        %v4673 = vadd.f32 %v4672, %v4583
        %v4674 = vadd.f32 %v4673, %v4586
        %v4675 = vadd.f32 %v4674, %v4589
        %v4676 = vadd.f32 %v4675, %v4592
        %v4677 = vadd.f32 %v4676, %v4595
        %v4678 = vadd.f32 %v4677, %v4598
        %v4679 = vadd.f32 %v4678, %v4601
        %v4680 = vadd.f32 %v4679, %v4604
        %v4681 = vadd.f32 %v4680, %v4607
        %v4682 = vadd.f32 %v4681, %v4610
        %v4683 = vadd.f32 %v4682, %v4613
        %v4684 = vadd.f32 %v4683, %v4616
        %v4685 = vadd.f32 %v4684, %v4619
        %v4686 = vadd.f32 %v4685, %v4622
        %v4687 = vadd.f32 %v4686, %v4625
        %v4688 = vadd.f32 %v4687, %v4628
        %v4689 = vadd.f32 %v4688, %v4631
        %v4690 = vadd.f32 %v4689, %v4634
        %v4691 = vadd.f32 %v4690, %v4637
        %v4692 = vadd.f32 %v4691, %v4640
        %v4693 = vadd.f32 %v4692, %v4643
        %v4694 = vadd.f32 %v4693, %v4646
        %v4695 = vadd.f32 %v4694, %v4649
        %v4696 = vadd.f32 %v4695, %v4652
        %v4697 = vadd.f32 %v4696, %v4655
        %vm4698 = vcmask 1043456
        %v4699 = vsel %vm4698, %v4658, 0.0
        %v4700 = vadd.f32 %v4697, %v4699
        %v4701 = vrot.slane %v4700, 4
        %v4702 = vadd.f32 %v4700, %v4701
        %v4703 = vrot.slane %v4702, 2
        %v4704 = vadd.f32 %v4702, %v4703
        %v4705 = vrot.slane %v4704, 1
        %v4706 = vadd.f32 %v4704, %v4705
        %v4707 = vld [vmem:[#allocation2] sm:$0x1]
        %v4708 = vadd.f32 %v4707, %v4706
        %vm4709 = vcmask 0
        %4710 = vst.msk [vmem:[#allocation2] sm:$0x1] %vm4709, %v4708
        %p4711 = scmp.eq.s32.totalorder %s18, 1
        // Predicated region
        $region49: #{losser_forward.1} parent=43 // pred_check
          %p4712 = pneg %p4711
        $region50: #{losser_forward.1} parent=43 // pred_check_branch
          %4714 = sbr.rel (%p4712) target = $region52
        $region51: #{losser_forward.1} parent=43 // pred_region
          %v4715 = vld [vmem:[#allocation2] sm:$0x1]
          %v4716 = vmul.f32 %v4715, 0.001953125
          %4717 = vst.msk [vmem:[#allocation3] sm:$0x1] %vm4709, %v4716
        $region52: #{losser_forward.1} parent=43 // pred_fallthru
          _
        // Predicated region
        $region53: #{losser_forward.1} parent=43 // pred_check
          %p4718 = pneg %p167
        $region54: #{losser_forward.1} parent=43 // pred_check_branch
          %4720 = sbr.rel (%p4718) target = $region56
        $region55: #{losser_forward.1} parent=43 // pred_region
          %s4722 = ssub.s32 16, 16
          %4723 = vsyncadd [#allocation4], %s4722
          %s4725 = sshll.u32 [#allocation3], 4
          %s4726 = int_to_ptr.vmem [resolvable:$true] %s4725
          %4728 = dma.vmem_to_hbm [thread:$0]  %s4726, 16, %s6, [#allocation4]
        $region56: #{losser_forward.1} parent=43 // pred_fallthru
          _
        // Predicated region
        $region57: #{losser_forward.1} parent=43 // pred_check
          %p4729 = pneg %p167
        $region58: #{losser_forward.1} parent=43 // pred_check_branch
          %4731 = sbr.rel (%p4729) target = $region60
        $region59: #{losser_forward.1} parent=43 // pred_region
          %4732 = dma.done [#allocation4], 16
        $region60: #{losser_forward.1} parent=43 // pred_fallthru
          _
      $region44: #{losser_forward.1} parent=5 // pred_fallthru
        _
      %p4733 = scmp.le.s32.totalorder 2, %s13
      // Predicated region
      $region61: #{losser_forward.1} parent=5 // pred_check
        %p4734 = pneg %p4733
      $region62: #{losser_forward.1} parent=5 // pred_check_branch
        %4736 = sbr.rel (%p4734) target = $region64
      $region63: #{losser_forward.1} parent=5 // pred_region
        %s4737 = ssub.s32 %s13, 2
      $region64: #{losser_forward.1} parent=5 // pred_fallthru
        _
    $region6: #{losser_forward.1} parent=1 // loop_footer
      %s17 = sadd.s32 1, %s13
    $region7: #{losser_forward.1} parent=1 // loop_footer_branch
      %12 = sbr.rel target = $region3
    $region8: #{losser_forward.1} parent=1 // loop_exit
      _
    %4738 = vsyncpa [#allocation4], 1
    %s4739 = scalar_lea.sflag [#allocation4], 1
    %4740 = vsyncpa %s4739, 1

</llo_original>
